<compile_context>
chip_gen: v5e
topology: v5e:2x2
jax: 0.10.0
libtpu: 0.0.40
codegen_flags: <defaults>
</compile_context>

<pallas_src>
import jax
import jax.numpy as jnp
import numpy as np
from jax.experimental import pallas as pl
from jax.experimental.pallas import tpu as pltpu


# ----------------------------------- kernel -----------------------------------

def _conv3x3_im2col(pad_ref, h, w_ref, b_ref):
    """3x3, stride 1, pad 1 conv as a single im2col matmul on the MXU.

    pad_ref : (H+2, W+2, Cin) f32 VMEM scratch whose halo is already zero
    h       : (H, W, Cin) f32 value (conv input)
    w_ref   : (9*Cin, Cout) bf16 ref, BN scale pre-folded, rows ordered (ky, kx, cin)
    b_ref   : (1, Cout) f32 ref (folded BN bias)
    returns : (H*W, Cout) f32
    """
    H, W, cin = h.shape
    M = H * W
    pad_ref[1:H + 1, 1:W + 1, :] = h                 # interior fully overwritten
    cols = [pad_ref[ky:ky + H, kx:kx + W, :].reshape(M, cin)
            for ky in range(3) for kx in range(3)]
    col = jnp.concatenate(cols, axis=-1).astype(jnp.bfloat16)     # (M, 9*Cin)
    return jnp.dot(col, w_ref[...],
                   preferred_element_type=jnp.float32) + b_ref[...]


def net_head2_kernel(x_ref, w0_ref, b0_ref, w1_ref, b1_ref, w2_ref, b2_ref,
                     x_out_ref, ll_out_ref, pad_in_ref, pad_ref):
    H, W, _ = x_ref.shape
    C = w0_ref.shape[1]

    # Zero the padded scratch buffers once per grid step; the halo stays zero for
    # every conv, the interior is rewritten in full before each use.
    pad_in_ref[...] = jnp.zeros_like(pad_in_ref)
    pad_ref[...] = jnp.zeros_like(pad_ref)

    # conv1 (+ folded bn1) -> relu  => last_layer_x
    ll2d = jnp.maximum(_conv3x3_im2col(pad_in_ref, x_ref[...], w0_ref, b0_ref), 0.0)
    ll = ll2d.reshape(H, W, C)
    ll_out_ref[...] = ll

    # layer1[0].conv1 (+ folded bn1) -> relu
    h2d = jnp.maximum(_conv3x3_im2col(pad_ref, ll, w1_ref, b1_ref), 0.0)
    # layer1[0].conv2 (+ folded bn2)   (no relu on this output)
    h2d = _conv3x3_im2col(pad_ref, h2d.reshape(H, W, C), w2_ref, b2_ref)
    x_out_ref[...] = h2d.reshape(H, W, C)


# ----------------------------------- wrapper -----------------------------------

def net_head2(x_nchw, kparams):
    """x_nchw: (B, 3, H, W) f32 (PyTorch layout). Returns (x, last_layer_x) in NCHW."""
    x = jnp.transpose(x_nchw, (0, 2, 3, 1))            # NHWC for the kernel
    B, H, W, Cin = x.shape
    C = kparams["w0"].shape[1]

    def wspec(p):
        # full-array block, constant index_map -> stays resident across grid steps
        return pl.BlockSpec(p.shape, lambda b: (0, 0))

    x_out, ll_out = pl.pallas_call(
        net_head2_kernel,
        grid=(B,),
        in_specs=[
            pl.BlockSpec((None, H, W, Cin), lambda b: (b, 0, 0, 0)),
            wspec(kparams["w0"]), wspec(kparams["b0"]),
            wspec(kparams["w1"]), wspec(kparams["b1"]),
            wspec(kparams["w2"]), wspec(kparams["b2"]),
        ],
        out_specs=[
            pl.BlockSpec((None, H, W, C), lambda b: (b, 0, 0, 0)),
            pl.BlockSpec((None, H, W, C), lambda b: (b, 0, 0, 0)),
        ],
        out_shape=[
            jax.ShapeDtypeStruct((B, H, W, C), jnp.float32),   # x (after layer1[0].bn2)
            jax.ShapeDtypeStruct((B, H, W, C), jnp.float32),   # last_layer_x
        ],
        scratch_shapes=[
            pltpu.VMEM((H + 2, W + 2, Cin), jnp.float32),      # padded conv1 input
            pltpu.VMEM((H + 2, W + 2, C), jnp.float32),        # padded C-wide activations
        ],
        compiler_params=pltpu.CompilerParams(
            dimension_semantics=("parallel",)),
    )(x, kparams["w0"], kparams["b0"], kparams["w1"], kparams["b1"],
      kparams["w2"], kparams["b2"])

    # back to PyTorch NCHW
    return (jnp.transpose(x_out, (0, 3, 1, 2)),
            jnp.transpose(ll_out, (0, 3, 1, 2)))


# ----------------------------- parameter setup (glue) -----------------------------

def _fold_bn_into_conv(w_oihw, bn, eps=1e-5):
    """Fold eval-mode BN into the preceding conv; reshape weight for im2col."""
    # TODO(synk): BN is folded in eval (running-stats) mode; PyTorch default train-mode
    # batch statistics are not reproduced.
    gamma, beta, mean, var = bn
    s = gamma / jnp.sqrt(var + eps)
    w_hwio = jnp.transpose(w_oihw, (2, 3, 1, 0))                 # (kh, kw, cin, cout)
    w = (w_hwio * s[None, None, None, :]).astype(jnp.bfloat16)
    kh, kw, ci, co = w_hwio.shape
    w = w.reshape(kh * kw * ci, co)                              # rows ordered (ky, kx, cin)
    bias = (beta - mean * s).reshape(1, co).astype(jnp.float32)
    return w, bias


def prepare_kernel_params(raw):
    w0, b0 = _fold_bn_into_conv(raw["conv1_w"], raw["bn1"])
    w1, b1 = _fold_bn_into_conv(raw["l1_conv1_w"], raw["l1_bn1"])
    w2, b2 = _fold_bn_into_conv(raw["l1_conv2_w"], raw["l1_bn2"])
    return {"w0": w0, "b0": b0, "w1": w1, "b1": b1, "w2": w2, "b2": b2}


def init_raw_params(key, cin, c):
    ks = jax.random.split(key, 6)

    def conv_w(k, ci, co):
        # PyTorch nn.Conv2d weight layout: (out_channels, in_channels, kh, kw)
        return jax.random.normal(k, (co, ci, 3, 3), jnp.float32) / np.sqrt(9.0 * ci)

    def bn(k):
        k1, k2, k3, k4 = jax.random.split(k, 4)
        gamma = 1.0 + 0.1 * jax.random.normal(k1, (c,), jnp.float32)
        beta = 0.1 * jax.random.normal(k2, (c,), jnp.float32)
        mean = 0.1 * jax.random.normal(k3, (c,), jnp.float32)
        var = 1.0 + 0.1 * jax.random.uniform(k4, (c,), jnp.float32)
        return (gamma, beta, mean, var)

    return {
        "conv1_w": conv_w(ks[0], cin, c), "bn1": bn(ks[1]),        # net.conv1 / bn1
        "l1_conv1_w": conv_w(ks[2], c, c), "l1_bn1": bn(ks[3]),    # layer1[0].conv1 / bn1
        "l1_conv2_w": conv_w(ks[4], c, c), "l1_bn2": bn(ks[5]),    # layer1[0].conv2 / bn2
    }


def reference(x_nchw, raw, eps=1e-5):
    """Plain-JAX f32 reference of the same forward (NCHW in / NCHW out)."""
    x = jnp.transpose(x_nchw, (0, 2, 3, 1))

    def conv(h, w_oihw):
        w = jnp.transpose(w_oihw, (2, 3, 1, 0))        # HWIO
        return jax.lax.conv_general_dilated(
            h, w, window_strides=(1, 1), padding="SAME",
            dimension_numbers=("NHWC", "HWIO", "NHWC"),
            precision=jax.lax.Precision.HIGHEST)

    def bn(h, p):
        gamma, beta, mean, var = p
        return (h - mean) * (gamma / jnp.sqrt(var + eps)) + beta

    ll = jnp.maximum(bn(conv(x, raw["conv1_w"]), raw["bn1"]), 0.0)
    h = jnp.maximum(bn(conv(ll, raw["l1_conv1_w"]), raw["l1_bn1"]), 0.0)
    h = bn(conv(h, raw["l1_conv2_w"]), raw["l1_bn2"])
    return (jnp.transpose(h, (0, 3, 1, 2)), jnp.transpose(ll, (0, 3, 1, 2)))


if __name__ == "__main__":
    B, CIN, H, W = 2, 3, 16, 16     # small CIFAR-style RGB input
    C = 64                          # ResNet-34 conv1 / layer1 width

    key = jax.random.PRNGKey(0)
    k_x, k_p = jax.random.split(key)
    x = jax.random.normal(k_x, (B, CIN, H, W), jnp.float32)    # NCHW, like PyTorch

    raw = init_raw_params(k_p, CIN, C)
    kparams = prepare_kernel_params(raw)

    out_x, out_ll = jax.block_until_ready(net_head2(x, kparams))

    ref_x, ref_ll = reference(x, raw)
    np.testing.assert_allclose(np.asarray(out_ll), np.asarray(ref_ll), rtol=2e-2, atol=2e-2)
    np.testing.assert_allclose(np.asarray(out_x), np.asarray(ref_x), rtol=2e-2, atol=5e-2)

    print("KERNEL_OK")
</pallas_src>

<mosaic_0001>
module attributes {stable_mosaic.version = 11 : i64} {
  func.func @net_head2_kernel(%arg0: i32, %arg1: memref<1x16x16x3xf32, #tpu.memory_space<vmem>>, %arg2: memref<27x64xbf16, #tpu.memory_space<vmem>>, %arg3: memref<1x64xf32, #tpu.memory_space<vmem>>, %arg4: memref<576x64xbf16, #tpu.memory_space<vmem>>, %arg5: memref<1x64xf32, #tpu.memory_space<vmem>>, %arg6: memref<576x64xbf16, #tpu.memory_space<vmem>>, %arg7: memref<1x64xf32, #tpu.memory_space<vmem>>, %arg8: memref<1x16x16x64xf32, #tpu.memory_space<vmem>>, %arg9: memref<1x16x16x64xf32, #tpu.memory_space<vmem>>, %arg10: memref<18x18x3xf32, #tpu.memory_space<vmem>>, %arg11: memref<18x18x64xf32, #tpu.memory_space<vmem>>) attributes {dimension_semantics = [#tpu.dimension_semantics<parallel>], iteration_bounds = array<i64: 2>, scalar_prefetch = 0 : i64, scratch_operands = 2 : i64, tpu.core_type = #tpu.core_type<tc>, window_params = [{transform_indices = @transform_0, window_bounds = array<i64: 1, 16, 16, 3>}, {pipeline_mode = #tpu.pipeline_mode<synchronous>, transform_indices = @transform_1, window_bounds = array<i64: 27, 64>}, {pipeline_mode = #tpu.pipeline_mode<synchronous>, transform_indices = @transform_2, window_bounds = array<i64: 1, 64>}, {pipeline_mode = #tpu.pipeline_mode<synchronous>, transform_indices = @transform_3, window_bounds = array<i64: 576, 64>}, {pipeline_mode = #tpu.pipeline_mode<synchronous>, transform_indices = @transform_4, window_bounds = array<i64: 1, 64>}, {pipeline_mode = #tpu.pipeline_mode<synchronous>, transform_indices = @transform_5, window_bounds = array<i64: 576, 64>}, {pipeline_mode = #tpu.pipeline_mode<synchronous>, transform_indices = @transform_6, window_bounds = array<i64: 1, 64>}, {transform_indices = @transform_7, window_bounds = array<i64: 1, 16, 16, 64>}, {transform_indices = @transform_8, window_bounds = array<i64: 1, 16, 16, 64>}]} {
    %cst = arith.constant 0.000000e+00 : f32
    %0 = vector.broadcast %cst : f32 to vector<18x18x3xf32>
    %c0 = arith.constant 0 : index
    %c0_0 = arith.constant 0 : index
    %c0_1 = arith.constant 0 : index
    %1 = vector.load %arg10[%c0, %c0_0, %c0_1] : memref<18x18x3xf32, #tpu.memory_space<vmem>>, vector<18x18x3xf32>
    tpu.vector_store %arg10[%c0, %c0_0, %c0_1], %0 {strides = array<i32>} : memref<18x18x3xf32, #tpu.memory_space<vmem>>, vector<18x18x3xf32>,
    %cst_2 = arith.constant 0.000000e+00 : f32
    %2 = vector.broadcast %cst_2 : f32 to vector<18x18x64xf32>
    %c0_3 = arith.constant 0 : index
    %c0_4 = arith.constant 0 : index
    %c0_5 = arith.constant 0 : index
    %3 = vector.load %arg11[%c0_3, %c0_4, %c0_5] : memref<18x18x64xf32, #tpu.memory_space<vmem>>, vector<18x18x64xf32>
    tpu.vector_store %arg11[%c0_3, %c0_4, %c0_5], %2 {strides = array<i32>} : memref<18x18x64xf32, #tpu.memory_space<vmem>>, vector<18x18x64xf32>,
    %c0_6 = arith.constant 0 : index
    %c0_7 = arith.constant 0 : index
    %c0_8 = arith.constant 0 : index
    %c0_9 = arith.constant 0 : index
    %4 = vector.load %arg1[%c0_6, %c0_7, %c0_8, %c0_9] : memref<1x16x16x3xf32, #tpu.memory_space<vmem>>, vector<1x16x16x3xf32>
    %5 = vector.shape_cast %4 : vector<1x16x16x3xf32> to vector<16x16x3xf32>
    %c1 = arith.constant 1 : index
    %c1_10 = arith.constant 1 : index
    %c0_11 = arith.constant 0 : index
    %6 = vector.load %arg10[%c1, %c1_10, %c0_11] : memref<18x18x3xf32, #tpu.memory_space<vmem>>, vector<16x16x3xf32>
    tpu.vector_store %arg10[%c1, %c1_10, %c0_11], %5 {strides = array<i32>} : memref<18x18x3xf32, #tpu.memory_space<vmem>>, vector<16x16x3xf32>,
    %c0_12 = arith.constant 0 : index
    %c0_13 = arith.constant 0 : index
    %c0_14 = arith.constant 0 : index
    %7 = vector.load %arg10[%c0_12, %c0_13, %c0_14] : memref<18x18x3xf32, #tpu.memory_space<vmem>>, vector<16x16x3xf32>
    %8 = vector.shape_cast %7 : vector<16x16x3xf32> to vector<256x3xf32>
    %c0_15 = arith.constant 0 : index
    %c1_16 = arith.constant 1 : index
    %c0_17 = arith.constant 0 : index
    %9 = vector.load %arg10[%c0_15, %c1_16, %c0_17] : memref<18x18x3xf32, #tpu.memory_space<vmem>>, vector<16x16x3xf32>
    %10 = vector.shape_cast %9 : vector<16x16x3xf32> to vector<256x3xf32>
    %c0_18 = arith.constant 0 : index
    %c2 = arith.constant 2 : index
    %c0_19 = arith.constant 0 : index
    %11 = vector.load %arg10[%c0_18, %c2, %c0_19] : memref<18x18x3xf32, #tpu.memory_space<vmem>>, vector<16x16x3xf32>
    %12 = vector.shape_cast %11 : vector<16x16x3xf32> to vector<256x3xf32>
    %c1_20 = arith.constant 1 : index
    %c0_21 = arith.constant 0 : index
    %c0_22 = arith.constant 0 : index
    %13 = vector.load %arg10[%c1_20, %c0_21, %c0_22] : memref<18x18x3xf32, #tpu.memory_space<vmem>>, vector<16x16x3xf32>
    %14 = vector.shape_cast %13 : vector<16x16x3xf32> to vector<256x3xf32>
    %c1_23 = arith.constant 1 : index
    %c1_24 = arith.constant 1 : index
    %c0_25 = arith.constant 0 : index
    %15 = vector.load %arg10[%c1_23, %c1_24, %c0_25] : memref<18x18x3xf32, #tpu.memory_space<vmem>>, vector<16x16x3xf32>
    %16 = vector.shape_cast %15 : vector<16x16x3xf32> to vector<256x3xf32>
    %c1_26 = arith.constant 1 : index
    %c2_27 = arith.constant 2 : index
    %c0_28 = arith.constant 0 : index
    %17 = vector.load %arg10[%c1_26, %c2_27, %c0_28] : memref<18x18x3xf32, #tpu.memory_space<vmem>>, vector<16x16x3xf32>
    %18 = vector.shape_cast %17 : vector<16x16x3xf32> to vector<256x3xf32>
    %c2_29 = arith.constant 2 : index
    %c0_30 = arith.constant 0 : index
    %c0_31 = arith.constant 0 : index
    %19 = vector.load %arg10[%c2_29, %c0_30, %c0_31] : memref<18x18x3xf32, #tpu.memory_space<vmem>>, vector<16x16x3xf32>
    %20 = vector.shape_cast %19 : vector<16x16x3xf32> to vector<256x3xf32>
    %c2_32 = arith.constant 2 : index
    %c1_33 = arith.constant 1 : index
    %c0_34 = arith.constant 0 : index
    %21 = vector.load %arg10[%c2_32, %c1_33, %c0_34] : memref<18x18x3xf32, #tpu.memory_space<vmem>>, vector<16x16x3xf32>
    %22 = vector.shape_cast %21 : vector<16x16x3xf32> to vector<256x3xf32>
    %c2_35 = arith.constant 2 : index
    %c2_36 = arith.constant 2 : index
    %c0_37 = arith.constant 0 : index
    %23 = vector.load %arg10[%c2_35, %c2_36, %c0_37] : memref<18x18x3xf32, #tpu.memory_space<vmem>>, vector<16x16x3xf32>
    %24 = vector.shape_cast %23 : vector<16x16x3xf32> to vector<256x3xf32>
    %25 = tpu.concatenate %8, %10, %12, %14, %16, %18, %20, %22, %24 in 1 : vector<256x3xf32>, vector<256x3xf32>, vector<256x3xf32>, vector<256x3xf32>, vector<256x3xf32>, vector<256x3xf32>, vector<256x3xf32>, vector<256x3xf32>, vector<256x3xf32> -> vector<256x27xf32>
    %26 = arith.truncf %25 : vector<256x27xf32> to vector<256x27xbf16>
    %c0_38 = arith.constant 0 : index
    %c0_39 = arith.constant 0 : index
    %27 = vector.load %arg2[%c0_38, %c0_39] : memref<27x64xbf16, #tpu.memory_space<vmem>>, vector<27x64xbf16>
    %cst_40 = arith.constant dense<0.000000e+00> : vector<256x64xf32>
    %28 = tpu.matmul %26, %27, %cst_40 {dimension_numbers = #tpu.dot_dimension_numbers<[1], [0], [0], [1], [0, 0, 1, 1], [], []>} : vector<256x27xbf16>, vector<27x64xbf16>, vector<256x64xf32> -> vector<256x64xf32>
    %c0_41 = arith.constant 0 : index
    %c0_42 = arith.constant 0 : index
    %29 = vector.load %arg3[%c0_41, %c0_42] : memref<1x64xf32, #tpu.memory_space<vmem>>, vector<1x64xf32>
    %30 = vector.broadcast %29 : vector<1x64xf32> to vector<256x64xf32>
    %31 = arith.addf %28, %30 : vector<256x64xf32>
    %cst_43 = arith.constant 0.000000e+00 : f32
    %32 = vector.broadcast %cst_43 : f32 to vector<256x64xf32>
    %33 = arith.maximumf %31, %32 : vector<256x64xf32>
    %34 = vector.shape_cast %33 : vector<256x64xf32> to vector<16x16x64xf32>
    %c0_44 = arith.constant 0 : index
    %c0_45 = arith.constant 0 : index
    %c0_46 = arith.constant 0 : index
    %c0_47 = arith.constant 0 : index
    %35 = vector.load %arg9[%c0_44, %c0_45, %c0_46, %c0_47] : memref<1x16x16x64xf32, #tpu.memory_space<vmem>>, vector<1x16x16x64xf32>
    %36 = vector.shape_cast %35 : vector<1x16x16x64xf32> to vector<16x16x64xf32>
    %37 = vector.shape_cast %34 : vector<16x16x64xf32> to vector<1x16x16x64xf32>
    tpu.vector_store %arg9[%c0_44, %c0_45, %c0_46, %c0_47], %37 {strides = array<i32>} : memref<1x16x16x64xf32, #tpu.memory_space<vmem>>, vector<1x16x16x64xf32>,
    %c1_48 = arith.constant 1 : index
    %c1_49 = arith.constant 1 : index
    %c0_50 = arith.constant 0 : index
    %38 = vector.load %arg11[%c1_48, %c1_49, %c0_50] : memref<18x18x64xf32, #tpu.memory_space<vmem>>, vector<16x16x64xf32>
    tpu.vector_store %arg11[%c1_48, %c1_49, %c0_50], %34 {strides = array<i32>} : memref<18x18x64xf32, #tpu.memory_space<vmem>>, vector<16x16x64xf32>,
    %c0_51 = arith.constant 0 : index
    %c0_52 = arith.constant 0 : index
    %c0_53 = arith.constant 0 : index
    %39 = vector.load %arg11[%c0_51, %c0_52, %c0_53] : memref<18x18x64xf32, #tpu.memory_space<vmem>>, vector<16x16x64xf32>
    %40 = vector.shape_cast %39 : vector<16x16x64xf32> to vector<256x64xf32>
    %c0_54 = arith.constant 0 : index
    %c1_55 = arith.constant 1 : index
    %c0_56 = arith.constant 0 : index
    %41 = vector.load %arg11[%c0_54, %c1_55, %c0_56] : memref<18x18x64xf32, #tpu.memory_space<vmem>>, vector<16x16x64xf32>
    %42 = vector.shape_cast %41 : vector<16x16x64xf32> to vector<256x64xf32>
    %c0_57 = arith.constant 0 : index
    %c2_58 = arith.constant 2 : index
    %c0_59 = arith.constant 0 : index
    %43 = vector.load %arg11[%c0_57, %c2_58, %c0_59] : memref<18x18x64xf32, #tpu.memory_space<vmem>>, vector<16x16x64xf32>
    %44 = vector.shape_cast %43 : vector<16x16x64xf32> to vector<256x64xf32>
    %c1_60 = arith.constant 1 : index
    %c0_61 = arith.constant 0 : index
    %c0_62 = arith.constant 0 : index
    %45 = vector.load %arg11[%c1_60, %c0_61, %c0_62] : memref<18x18x64xf32, #tpu.memory_space<vmem>>, vector<16x16x64xf32>
    %46 = vector.shape_cast %45 : vector<16x16x64xf32> to vector<256x64xf32>
    %c1_63 = arith.constant 1 : index
    %c1_64 = arith.constant 1 : index
    %c0_65 = arith.constant 0 : index
    %47 = vector.load %arg11[%c1_63, %c1_64, %c0_65] : memref<18x18x64xf32, #tpu.memory_space<vmem>>, vector<16x16x64xf32>
    %48 = vector.shape_cast %47 : vector<16x16x64xf32> to vector<256x64xf32>
    %c1_66 = arith.constant 1 : index
    %c2_67 = arith.constant 2 : index
    %c0_68 = arith.constant 0 : index
    %49 = vector.load %arg11[%c1_66, %c2_67, %c0_68] : memref<18x18x64xf32, #tpu.memory_space<vmem>>, vector<16x16x64xf32>
    %50 = vector.shape_cast %49 : vector<16x16x64xf32> to vector<256x64xf32>
    %c2_69 = arith.constant 2 : index
    %c0_70 = arith.constant 0 : index
    %c0_71 = arith.constant 0 : index
    %51 = vector.load %arg11[%c2_69, %c0_70, %c0_71] : memref<18x18x64xf32, #tpu.memory_space<vmem>>, vector<16x16x64xf32>
    %52 = vector.shape_cast %51 : vector<16x16x64xf32> to vector<256x64xf32>
    %c2_72 = arith.constant 2 : index
    %c1_73 = arith.constant 1 : index
    %c0_74 = arith.constant 0 : index
    %53 = vector.load %arg11[%c2_72, %c1_73, %c0_74] : memref<18x18x64xf32, #tpu.memory_space<vmem>>, vector<16x16x64xf32>
    %54 = vector.shape_cast %53 : vector<16x16x64xf32> to vector<256x64xf32>
    %c2_75 = arith.constant 2 : index
    %c2_76 = arith.constant 2 : index
    %c0_77 = arith.constant 0 : index
    %55 = vector.load %arg11[%c2_75, %c2_76, %c0_77] : memref<18x18x64xf32, #tpu.memory_space<vmem>>, vector<16x16x64xf32>
    %56 = vector.shape_cast %55 : vector<16x16x64xf32> to vector<256x64xf32>
    %57 = tpu.concatenate %40, %42, %44, %46, %48, %50, %52, %54, %56 in 1 : vector<256x64xf32>, vector<256x64xf32>, vector<256x64xf32>, vector<256x64xf32>, vector<256x64xf32>, vector<256x64xf32>, vector<256x64xf32>, vector<256x64xf32>, vector<256x64xf32> -> vector<256x576xf32>
    %58 = arith.truncf %57 : vector<256x576xf32> to vector<256x576xbf16>
    %c0_78 = arith.constant 0 : index
    %c0_79 = arith.constant 0 : index
    %59 = vector.load %arg4[%c0_78, %c0_79] : memref<576x64xbf16, #tpu.memory_space<vmem>>, vector<576x64xbf16>
    %cst_80 = arith.constant dense<0.000000e+00> : vector<256x64xf32>
    %60 = tpu.matmul %58, %59, %cst_80 {dimension_numbers = #tpu.dot_dimension_numbers<[1], [0], [0], [1], [0, 0, 1, 1], [], []>} : vector<256x576xbf16>, vector<576x64xbf16>, vector<256x64xf32> -> vector<256x64xf32>
    %c0_81 = arith.constant 0 : index
    %c0_82 = arith.constant 0 : index
    %61 = vector.load %arg5[%c0_81, %c0_82] : memref<1x64xf32, #tpu.memory_space<vmem>>, vector<1x64xf32>
    %62 = vector.broadcast %61 : vector<1x64xf32> to vector<256x64xf32>
    %63 = arith.addf %60, %62 : vector<256x64xf32>
    %cst_83 = arith.constant 0.000000e+00 : f32
    %64 = vector.broadcast %cst_83 : f32 to vector<256x64xf32>
    %65 = arith.maximumf %63, %64 : vector<256x64xf32>
    %66 = vector.shape_cast %65 : vector<256x64xf32> to vector<16x16x64xf32>
    %c1_84 = arith.constant 1 : index
    %c1_85 = arith.constant 1 : index
    %c0_86 = arith.constant 0 : index
    %67 = vector.load %arg11[%c1_84, %c1_85, %c0_86] : memref<18x18x64xf32, #tpu.memory_space<vmem>>, vector<16x16x64xf32>
    tpu.vector_store %arg11[%c1_84, %c1_85, %c0_86], %66 {strides = array<i32>} : memref<18x18x64xf32, #tpu.memory_space<vmem>>, vector<16x16x64xf32>,
    %c0_87 = arith.constant 0 : index
    %c0_88 = arith.constant 0 : index
    %c0_89 = arith.constant 0 : index
    %68 = vector.load %arg11[%c0_87, %c0_88, %c0_89] : memref<18x18x64xf32, #tpu.memory_space<vmem>>, vector<16x16x64xf32>
    %69 = vector.shape_cast %68 : vector<16x16x64xf32> to vector<256x64xf32>
    %c0_90 = arith.constant 0 : index
    %c1_91 = arith.constant 1 : index
    %c0_92 = arith.constant 0 : index
    %70 = vector.load %arg11[%c0_90, %c1_91, %c0_92] : memref<18x18x64xf32, #tpu.memory_space<vmem>>, vector<16x16x64xf32>
    %71 = vector.shape_cast %70 : vector<16x16x64xf32> to vector<256x64xf32>
    %c0_93 = arith.constant 0 : index
    %c2_94 = arith.constant 2 : index
    %c0_95 = arith.constant 0 : index
    %72 = vector.load %arg11[%c0_93, %c2_94, %c0_95] : memref<18x18x64xf32, #tpu.memory_space<vmem>>, vector<16x16x64xf32>
    %73 = vector.shape_cast %72 : vector<16x16x64xf32> to vector<256x64xf32>
    %c1_96 = arith.constant 1 : index
    %c0_97 = arith.constant 0 : index
    %c0_98 = arith.constant 0 : index
    %74 = vector.load %arg11[%c1_96, %c0_97, %c0_98] : memref<18x18x64xf32, #tpu.memory_space<vmem>>, vector<16x16x64xf32>
    %75 = vector.shape_cast %74 : vector<16x16x64xf32> to vector<256x64xf32>
    %c1_99 = arith.constant 1 : index
    %c1_100 = arith.constant 1 : index
    %c0_101 = arith.constant 0 : index
    %76 = vector.load %arg11[%c1_99, %c1_100, %c0_101] : memref<18x18x64xf32, #tpu.memory_space<vmem>>, vector<16x16x64xf32>
    %77 = vector.shape_cast %76 : vector<16x16x64xf32> to vector<256x64xf32>
    %c1_102 = arith.constant 1 : index
    %c2_103 = arith.constant 2 : index
    %c0_104 = arith.constant 0 : index
    %78 = vector.load %arg11[%c1_102, %c2_103, %c0_104] : memref<18x18x64xf32, #tpu.memory_space<vmem>>, vector<16x16x64xf32>
    %79 = vector.shape_cast %78 : vector<16x16x64xf32> to vector<256x64xf32>
    %c2_105 = arith.constant 2 : index
    %c0_106 = arith.constant 0 : index
    %c0_107 = arith.constant 0 : index
    %80 = vector.load %arg11[%c2_105, %c0_106, %c0_107] : memref<18x18x64xf32, #tpu.memory_space<vmem>>, vector<16x16x64xf32>
    %81 = vector.shape_cast %80 : vector<16x16x64xf32> to vector<256x64xf32>
    %c2_108 = arith.constant 2 : index
    %c1_109 = arith.constant 1 : index
    %c0_110 = arith.constant 0 : index
    %82 = vector.load %arg11[%c2_108, %c1_109, %c0_110] : memref<18x18x64xf32, #tpu.memory_space<vmem>>, vector<16x16x64xf32>
    %83 = vector.shape_cast %82 : vector<16x16x64xf32> to vector<256x64xf32>
    %c2_111 = arith.constant 2 : index
    %c2_112 = arith.constant 2 : index
    %c0_113 = arith.constant 0 : index
    %84 = vector.load %arg11[%c2_111, %c2_112, %c0_113] : memref<18x18x64xf32, #tpu.memory_space<vmem>>, vector<16x16x64xf32>
    %85 = vector.shape_cast %84 : vector<16x16x64xf32> to vector<256x64xf32>
    %86 = tpu.concatenate %69, %71, %73, %75, %77, %79, %81, %83, %85 in 1 : vector<256x64xf32>, vector<256x64xf32>, vector<256x64xf32>, vector<256x64xf32>, vector<256x64xf32>, vector<256x64xf32>, vector<256x64xf32>, vector<256x64xf32>, vector<256x64xf32> -> vector<256x576xf32>
    %87 = arith.truncf %86 : vector<256x576xf32> to vector<256x576xbf16>
    %c0_114 = arith.constant 0 : index
    %c0_115 = arith.constant 0 : index
    %88 = vector.load %arg6[%c0_114, %c0_115] : memref<576x64xbf16, #tpu.memory_space<vmem>>, vector<576x64xbf16>
    %cst_116 = arith.constant dense<0.000000e+00> : vector<256x64xf32>
    %89 = tpu.matmul %87, %88, %cst_116 {dimension_numbers = #tpu.dot_dimension_numbers<[1], [0], [0], [1], [0, 0, 1, 1], [], []>} : vector<256x576xbf16>, vector<576x64xbf16>, vector<256x64xf32> -> vector<256x64xf32>
    %c0_117 = arith.constant 0 : index
    %c0_118 = arith.constant 0 : index
    %90 = vector.load %arg7[%c0_117, %c0_118] : memref<1x64xf32, #tpu.memory_space<vmem>>, vector<1x64xf32>
    %91 = vector.broadcast %90 : vector<1x64xf32> to vector<256x64xf32>
    %92 = arith.addf %89, %91 : vector<256x64xf32>
    %93 = vector.shape_cast %92 : vector<256x64xf32> to vector<16x16x64xf32>
    %c0_119 = arith.constant 0 : index
    %c0_120 = arith.constant 0 : index
    %c0_121 = arith.constant 0 : index
    %c0_122 = arith.constant 0 : index
    %94 = vector.load %arg8[%c0_119, %c0_120, %c0_121, %c0_122] : memref<1x16x16x64xf32, #tpu.memory_space<vmem>>, vector<1x16x16x64xf32>
    %95 = vector.shape_cast %94 : vector<1x16x16x64xf32> to vector<16x16x64xf32>
    %96 = vector.shape_cast %93 : vector<16x16x64xf32> to vector<1x16x16x64xf32>
    tpu.vector_store %arg8[%c0_119, %c0_120, %c0_121, %c0_122], %96 {strides = array<i32>} : memref<1x16x16x64xf32, #tpu.memory_space<vmem>>, vector<1x16x16x64xf32>,
    return
  }
  func.func @transform_0(%arg0: i32) -> (i32, i32, i32, i32) {
    %c0_i32 = arith.constant 0 : i32
    %c0_i32_0 = arith.constant 0 : i32
    %c0_i32_1 = arith.constant 0 : i32
    %c0_i32_2 = arith.constant 0 : i32
    return %arg0, %c0_i32, %c0_i32_0, %c0_i32_1 : i32, i32, i32, i32
  }
  func.func @transform_1(%arg0: i32) -> (i32, i32) {
    %c0_i32 = arith.constant 0 : i32
    %c0_i32_0 = arith.constant 0 : i32
    %c0_i32_1 = arith.constant 0 : i32
    return %c0_i32, %c0_i32_0 : i32, i32
  }
  func.func @transform_2(%arg0: i32) -> (i32, i32) {
    %c0_i32 = arith.constant 0 : i32
    %c0_i32_0 = arith.constant 0 : i32
    %c0_i32_1 = arith.constant 0 : i32
    return %c0_i32, %c0_i32_0 : i32, i32
  }
  func.func @transform_3(%arg0: i32) -> (i32, i32) {
    %c0_i32 = arith.constant 0 : i32
    %c0_i32_0 = arith.constant 0 : i32
    %c0_i32_1 = arith.constant 0 : i32
    return %c0_i32, %c0_i32_0 : i32, i32
  }
  func.func @transform_4(%arg0: i32) -> (i32, i32) {
    %c0_i32 = arith.constant 0 : i32
    %c0_i32_0 = arith.constant 0 : i32
    %c0_i32_1 = arith.constant 0 : i32
    return %c0_i32, %c0_i32_0 : i32, i32
  }
  func.func @transform_5(%arg0: i32) -> (i32, i32) {
    %c0_i32 = arith.constant 0 : i32
    %c0_i32_0 = arith.constant 0 : i32
    %c0_i32_1 = arith.constant 0 : i32
    return %c0_i32, %c0_i32_0 : i32, i32
  }
  func.func @transform_6(%arg0: i32) -> (i32, i32) {
    %c0_i32 = arith.constant 0 : i32
    %c0_i32_0 = arith.constant 0 : i32
    %c0_i32_1 = arith.constant 0 : i32
    return %c0_i32, %c0_i32_0 : i32, i32
  }
  func.func @transform_7(%arg0: i32) -> (i32, i32, i32, i32) {
    %c0_i32 = arith.constant 0 : i32
    %c0_i32_0 = arith.constant 0 : i32
    %c0_i32_1 = arith.constant 0 : i32
    %c0_i32_2 = arith.constant 0 : i32
    return %arg0, %c0_i32, %c0_i32_0, %c0_i32_1 : i32, i32, i32, i32
  }
  func.func @transform_8(%arg0: i32) -> (i32, i32, i32, i32) {
    %c0_i32 = arith.constant 0 : i32
    %c0_i32_0 = arith.constant 0 : i32
    %c0_i32_1 = arith.constant 0 : i32
    %c0_i32_2 = arith.constant 0 : i32
    return %arg0, %c0_i32, %c0_i32_0, %c0_i32_1 : i32, i32, i32, i32
  }
}

</mosaic_0001>

<llo_original>
// kernel: tpu_custom_call.1
$region0: #{tpu_custom_call.1}
  #allocation0 [shape = 'u32[]', space=smem, size = 0x4, offset = 0x4, fixed_abs, tag = 'smem constant byte address 0x4 - core index']
  #allocation1 [shape = 'u32[72,128]{1,0:T(1,128)}', space=vmem, size = 0x9000, scoped, tag = 'internal scratch']
  #allocation2 [shape = 'f32[18,18,3]{2,1,0:T(8,128)}', space=vmem, size = 0x36000, scoped, tag = 'scratch operand']
  #allocation3 [shape = 'f32[18,18,64]{2,1,0:T(8,128)}', space=vmem, size = 0x36000, scoped, tag = 'scratch operand']
  %s0 = inlined_call_operand.vmem [shape: f32[2,16,16,3], index: 0, kind: input, shape index: {}]
  %s1 = inlined_call_operand.vmem [shape: bf16[27,64], index: 1, kind: input, shape index: {}]
  %s2 = inlined_call_operand.vmem [shape: f32[1,64], index: 2, kind: input, shape index: {}]
  %s3 = inlined_call_operand.vmem [shape: bf16[576,64], index: 3, kind: input, shape index: {}]
  %s4 = inlined_call_operand.vmem [shape: f32[1,64], index: 4, kind: input, shape index: {}]
  %s5 = inlined_call_operand.vmem [shape: bf16[576,64], index: 5, kind: input, shape index: {}]
  %s6 = inlined_call_operand.vmem [shape: f32[1,64], index: 6, kind: input, shape index: {}]
  %s7 = inlined_call_operand.hbm [shape: f32[2,16,16,64], index: 7, kind: output, shape index: {0}]
  %s8 = inlined_call_operand.hbm [shape: f32[2,16,16,64], index: 8, kind: output, shape index: {1}]
  %9 = xla_tuple %s7, %s8
  %s10 = sld [smem:[#allocation0]]
  $region69: #{tpu_custom_call.1} parent=0
    _
  %s12 = ssub.s32 1, %s10
  %s13 = scalar_select 0, %s12, %s10
  $region1: #{tpu_custom_call.1} parent=0
    #allocation4 [shape = 'u8[262144]{0}', space=vmem, size = 0x40000, scoped, tag = 'output window, operand 0']
    #allocation5 [shape = 's32[2]{0}', space=sflag, size = 0x8, scoped, tag = 'scoped memory for tpu_custom_call.1']
    #allocation6 [shape = 'u8[262144]{0}', space=vmem, size = 0x40000, scoped, tag = 'output window, operand 1']
    #allocation7 [shape = 's32[2]{0}', space=sflag, size = 0x8, scoped, tag = 'scoped memory for tpu_custom_call.1']
    %14 = vsyncpa [#allocation5], 0
    %s15 = scalar_lea.sflag [#allocation5], 1
    %16 = vsyncpa %s15, 0
    %17 = vsyncpa [#allocation7], 0
    %s18 = scalar_lea.sflag [#allocation7], 1
    %19 = vsyncpa %s18, 0
    loop: start=0, step=1, limit=4
    $region2: #{tpu_custom_call.1} parent=1 // loop_pre_header
      _
    $region3: #{tpu_custom_call.1} parent=1 // loop_header
      %s21 = sphi 0, %s25
      %p22 = scmp.ge.s32.totalorder %s21, 4
      %s31 = sphi 0, %s33
      %s34 = sphi 0, %s31
      %s35 = sphi 0, %s34
      %s51 = sphi 0, %s35
      %s55 = sphi 0, %s55
      %s57 = sphi 0, %s55
      %s58 = sphi 0, %s57
      %s72 = sphi 0, %s58
      %s76 = sphi 0, %s76
      %s78 = sphi 0, %s76
      %s79 = sphi 0, %s78
      %s93 = sphi 0, %s79
      %s97 = sphi 0, %s97
      %s99 = sphi 0, %s97
      %s100 = sphi 0, %s99
      %s114 = sphi 0, %s100
      %s118 = sphi 0, %s118
      %s120 = sphi 0, %s118
      %s121 = sphi 0, %s120
      %s135 = sphi 0, %s121
      %s139 = sphi 0, %s139
      %s141 = sphi 0, %s139
      %s142 = sphi 0, %s141
      %s156 = sphi 0, %s142
      %s160 = sphi 0, %s160
      %s162 = sphi 0, %s160
      %s163 = sphi 0, %s162
      %s177 = sphi 0, %s163
      %s183 = sphi 0, %s185
      %s186 = sphi 0, %s183
      %s187 = sphi 0, %s186
      %s203 = sphi 0, %s187
      %s209 = sphi 0, %s211
      %s212 = sphi 0, %s209
      %s213 = sphi 0, %s212
      %s229 = sphi 0, %s213
    $region4: #{tpu_custom_call.1} parent=1 // loop_header_branch
      %24 = sbr.rel (%p22) target = $region8
    $region5: #{tpu_custom_call.1} parent=1 // loop_body
      %s26 = ssub.s32 %s21, 1
      %s27 = ssub.s32 %s21, 2
      %s28 = sadd.s32 %s21, 1
      %s29 = ssub.s32 %s21, %s28
      %p30 = scmp.eq.s32.totalorder %s29, 0
      %s32 = sadd.s32 %s31, 1
      %s33 = scalar_select %p30, %s31, %s32
      %p36 = pneg %p30
      %p37 = scmp.eq.s32.totalorder %s21, 1
      %p38 = por %p36, %p37
      %p39 = scmp.ne.s32.totalorder %s31, %s34
      %p40 = scmp.eq.s32.totalorder %s21, 0
      %p41 = por %p39, %p40
      %p42 = scmp.ne.s32.totalorder %s31, %s34
      %p43 = scmp.eq.s32.totalorder %s26, 1
      %p44 = por %p42, %p43
      %p45 = scmp.ne.s32.totalorder %s34, %s35
      %p46 = scmp.eq.s32.totalorder %s26, 0
      %p47 = por %p45, %p46
      %p48 = scmp.ne.s32.totalorder %s34, %s35
      %p49 = scmp.eq.s32.totalorder %s27, 1
      %p50 = por %p48, %p49
      %p52 = scmp.ne.s32.totalorder %s35, %s51
      %p53 = scmp.eq.s32.totalorder %s27, 0
      %p54 = por %p52, %p53
      %s56 = sadd.s32 %s55, 1
      %p59 = scmp.eq.s32.totalorder %s21, 1
      %p60 = scmp.ne.s32.totalorder %s55, %s57
      %p61 = scmp.eq.s32.totalorder %s21, 0
      %p62 = por %p60, %p61
      %p63 = scmp.ne.s32.totalorder %s55, %s57
      %p64 = scmp.eq.s32.totalorder %s26, 1
      %p65 = por %p63, %p64
      %p66 = scmp.ne.s32.totalorder %s57, %s58
      %p67 = scmp.eq.s32.totalorder %s26, 0
      %p68 = por %p66, %p67
      %p69 = scmp.ne.s32.totalorder %s57, %s58
      %p70 = scmp.eq.s32.totalorder %s27, 1
      %p71 = por %p69, %p70
      %p73 = scmp.ne.s32.totalorder %s58, %s72
      %p74 = scmp.eq.s32.totalorder %s27, 0
      %p75 = por %p73, %p74
      %s77 = sadd.s32 %s76, 1
      %p80 = scmp.eq.s32.totalorder %s21, 1
      %p81 = scmp.ne.s32.totalorder %s76, %s78
      %p82 = scmp.eq.s32.totalorder %s21, 0
      %p83 = por %p81, %p82
      %p84 = scmp.ne.s32.totalorder %s76, %s78
      %p85 = scmp.eq.s32.totalorder %s26, 1
      %p86 = por %p84, %p85
      %p87 = scmp.ne.s32.totalorder %s78, %s79
      %p88 = scmp.eq.s32.totalorder %s26, 0
      %p89 = por %p87, %p88
      %p90 = scmp.ne.s32.totalorder %s78, %s79
      %p91 = scmp.eq.s32.totalorder %s27, 1
      %p92 = por %p90, %p91
      %p94 = scmp.ne.s32.totalorder %s79, %s93
      %p95 = scmp.eq.s32.totalorder %s27, 0
      %p96 = por %p94, %p95
      %s98 = sadd.s32 %s97, 1
      %p101 = scmp.eq.s32.totalorder %s21, 1
      %p102 = scmp.ne.s32.totalorder %s97, %s99
      %p103 = scmp.eq.s32.totalorder %s21, 0
      %p104 = por %p102, %p103
      %p105 = scmp.ne.s32.totalorder %s97, %s99
      %p106 = scmp.eq.s32.totalorder %s26, 1
      %p107 = por %p105, %p106
      %p108 = scmp.ne.s32.totalorder %s99, %s100
      %p109 = scmp.eq.s32.totalorder %s26, 0
      %p110 = por %p108, %p109
      %p111 = scmp.ne.s32.totalorder %s99, %s100
      %p112 = scmp.eq.s32.totalorder %s27, 1
      %p113 = por %p111, %p112
      %p115 = scmp.ne.s32.totalorder %s100, %s114
      %p116 = scmp.eq.s32.totalorder %s27, 0
      %p117 = por %p115, %p116
      %s119 = sadd.s32 %s118, 1
      %p122 = scmp.eq.s32.totalorder %s21, 1
      %p123 = scmp.ne.s32.totalorder %s118, %s120
      %p124 = scmp.eq.s32.totalorder %s21, 0
      %p125 = por %p123, %p124
      %p126 = scmp.ne.s32.totalorder %s118, %s120
      %p127 = scmp.eq.s32.totalorder %s26, 1
      %p128 = por %p126, %p127
      %p129 = scmp.ne.s32.totalorder %s120, %s121
      %p130 = scmp.eq.s32.totalorder %s26, 0
      %p131 = por %p129, %p130
      %p132 = scmp.ne.s32.totalorder %s120, %s121
      %p133 = scmp.eq.s32.totalorder %s27, 1
      %p134 = por %p132, %p133
      %p136 = scmp.ne.s32.totalorder %s121, %s135
      %p137 = scmp.eq.s32.totalorder %s27, 0
      %p138 = por %p136, %p137
      %s140 = sadd.s32 %s139, 1
      %p143 = scmp.eq.s32.totalorder %s21, 1
      %p144 = scmp.ne.s32.totalorder %s139, %s141
      %p145 = scmp.eq.s32.totalorder %s21, 0
      %p146 = por %p144, %p145
      %p147 = scmp.ne.s32.totalorder %s139, %s141
      %p148 = scmp.eq.s32.totalorder %s26, 1
      %p149 = por %p147, %p148
      %p150 = scmp.ne.s32.totalorder %s141, %s142
      %p151 = scmp.eq.s32.totalorder %s26, 0
      %p152 = por %p150, %p151
      %p153 = scmp.ne.s32.totalorder %s141, %s142
      %p154 = scmp.eq.s32.totalorder %s27, 1
      %p155 = por %p153, %p154
      %p157 = scmp.ne.s32.totalorder %s142, %s156
      %p158 = scmp.eq.s32.totalorder %s27, 0
      %p159 = por %p157, %p158
      %s161 = sadd.s32 %s160, 1
      %p164 = scmp.eq.s32.totalorder %s21, 1
      %p165 = scmp.ne.s32.totalorder %s160, %s162
      %p166 = scmp.eq.s32.totalorder %s21, 0
      %p167 = por %p165, %p166
      %p168 = scmp.ne.s32.totalorder %s160, %s162
      %p169 = scmp.eq.s32.totalorder %s26, 1
      %p170 = por %p168, %p169
      %p171 = scmp.ne.s32.totalorder %s162, %s163
      %p172 = scmp.eq.s32.totalorder %s26, 0
      %p173 = por %p171, %p172
      %p174 = scmp.ne.s32.totalorder %s162, %s163
      %p175 = scmp.eq.s32.totalorder %s27, 1
      %p176 = por %p174, %p175
      %p178 = scmp.ne.s32.totalorder %s163, %s177
      %p179 = scmp.eq.s32.totalorder %s27, 0
      %p180 = por %p178, %p179
      %s181 = ssub.s32 %s21, %s28
      %p182 = scmp.eq.s32.totalorder %s181, 0
      %s184 = sadd.s32 %s183, 1
      %s185 = scalar_select %p182, %s183, %s184
      %p188 = pneg %p182
      %p189 = scmp.eq.s32.totalorder %s21, 1
      %p190 = por %p188, %p189
      %p191 = scmp.ne.s32.totalorder %s183, %s186
      %p192 = scmp.eq.s32.totalorder %s21, 0
      %p193 = por %p191, %p192
      %p194 = scmp.ne.s32.totalorder %s183, %s186
      %p195 = scmp.eq.s32.totalorder %s26, 1
      %p196 = por %p194, %p195
      %p197 = scmp.ne.s32.totalorder %s186, %s187
      %p198 = scmp.eq.s32.totalorder %s26, 0
      %p199 = por %p197, %p198
      %p200 = scmp.ne.s32.totalorder %s186, %s187
      %p201 = scmp.eq.s32.totalorder %s27, 1
      %p202 = por %p200, %p201
      %p204 = scmp.ne.s32.totalorder %s187, %s203
      %p205 = scmp.eq.s32.totalorder %s27, 0
      %p206 = por %p204, %p205
      %s207 = ssub.s32 %s21, %s28
      %p208 = scmp.eq.s32.totalorder %s207, 0
      %s210 = sadd.s32 %s209, 1
      %s211 = scalar_select %p208, %s209, %s210
      %p214 = pneg %p208
      %p215 = scmp.eq.s32.totalorder %s21, 1
      %p216 = por %p214, %p215
      %p217 = scmp.ne.s32.totalorder %s209, %s212
      %p218 = scmp.eq.s32.totalorder %s21, 0
      %p219 = por %p217, %p218
      %p220 = scmp.ne.s32.totalorder %s209, %s212
      %p221 = scmp.eq.s32.totalorder %s26, 1
      %p222 = por %p220, %p221
      %p223 = scmp.ne.s32.totalorder %s212, %s213
      %p224 = scmp.eq.s32.totalorder %s26, 0
      %p225 = por %p223, %p224
      %p226 = scmp.ne.s32.totalorder %s212, %s213
      %p227 = scmp.eq.s32.totalorder %s27, 1
      %p228 = por %p226, %p227
      %p230 = scmp.ne.s32.totalorder %s213, %s229
      %p231 = scmp.eq.s32.totalorder %s27, 0
      %p232 = por %p230, %p231
      %p233 = scmp.le.s32.totalorder 1, %s21
      %p234 = scmp.lt.s32.totalorder %s21, 3
      %p235 = pnand %p233, %p234
      %p236 = pneg %p235
      // Predicated region
      $region9: #{tpu_custom_call.1} parent=5 // pred_check
        _
      $region10: #{tpu_custom_call.1} parent=5 // pred_check_branch
        %238 = sbr.rel (%p235) target = $region12
      $region11: #{tpu_custom_call.1} parent=5 // pred_region
        %s239 = ssub.s32 %s21, 1
        // Predicated region
        $region13: #{tpu_custom_call.1} parent=11 // pred_check
          %p240 = pneg %p68
        $region14: #{tpu_custom_call.1} parent=11 // pred_check_branch
          %242 = sbr.rel (%p240) target = $region16
        $region15: #{tpu_custom_call.1} parent=11 // pred_region
          _
        $region16: #{tpu_custom_call.1} parent=11 // pred_fallthru
          _
        // Predicated region
        $region17: #{tpu_custom_call.1} parent=11 // pred_check
          %p243 = pneg %p89
        $region18: #{tpu_custom_call.1} parent=11 // pred_check_branch
          %245 = sbr.rel (%p243) target = $region20
        $region19: #{tpu_custom_call.1} parent=11 // pred_region
          _
        $region20: #{tpu_custom_call.1} parent=11 // pred_fallthru
          _
        // Predicated region
        $region21: #{tpu_custom_call.1} parent=11 // pred_check
          %p246 = pneg %p110
        $region22: #{tpu_custom_call.1} parent=11 // pred_check_branch
          %248 = sbr.rel (%p246) target = $region24
        $region23: #{tpu_custom_call.1} parent=11 // pred_region
          _
        $region24: #{tpu_custom_call.1} parent=11 // pred_fallthru
          _
        // Predicated region
        $region25: #{tpu_custom_call.1} parent=11 // pred_check
          %p249 = pneg %p131
        $region26: #{tpu_custom_call.1} parent=11 // pred_check_branch
          %251 = sbr.rel (%p249) target = $region28
        $region27: #{tpu_custom_call.1} parent=11 // pred_region
          _
        $region28: #{tpu_custom_call.1} parent=11 // pred_fallthru
          _
        // Predicated region
        $region29: #{tpu_custom_call.1} parent=11 // pred_check
          %p252 = pneg %p152
        $region30: #{tpu_custom_call.1} parent=11 // pred_check_branch
          %254 = sbr.rel (%p252) target = $region32
        $region31: #{tpu_custom_call.1} parent=11 // pred_region
          _
        $region32: #{tpu_custom_call.1} parent=11 // pred_fallthru
          _
        // Predicated region
        $region33: #{tpu_custom_call.1} parent=11 // pred_check
          %p255 = pneg %p173
        $region34: #{tpu_custom_call.1} parent=11 // pred_check_branch
          %257 = sbr.rel (%p255) target = $region36
        $region35: #{tpu_custom_call.1} parent=11 // pred_region
          _
        $region36: #{tpu_custom_call.1} parent=11 // pred_fallthru
          _
      $region12: #{tpu_custom_call.1} parent=5 // pred_fallthru
        _
      %p258 = scmp.lt.s32.totalorder %s21, 2
      // Predicated region
      $region37: #{tpu_custom_call.1} parent=5 // pred_check
        %p259 = pneg %p258
      $region38: #{tpu_custom_call.1} parent=5 // pred_check_branch
        %261 = sbr.rel (%p259) target = $region40
      $region39: #{tpu_custom_call.1} parent=5 // pred_region
        // Predicated region
        $region41: #{tpu_custom_call.1} parent=39 // pred_check
          %p262 = pneg %p41
        $region42: #{tpu_custom_call.1} parent=39 // pred_check_branch
          %264 = sbr.rel (%p262) target = $region44
        $region43: #{tpu_custom_call.1} parent=39 // pred_region
          %p265 = scmp.lt.s32.totalorder %s21, 1
          %s266 = scalar_select %p265, %s21, 1
          %s267 = smul.addr %s266, 32
          %s268 = smul.addr %s267, 8
          %s269 = scalar_lea.vmem %s0, %s268
        $region44: #{tpu_custom_call.1} parent=39 // pred_fallthru
          _
      $region40: #{tpu_custom_call.1} parent=5 // pred_fallthru
        _
      %p270 = scmp.le.s32.totalorder 1, %s21
      %p271 = scmp.lt.s32.totalorder %s21, 3
      %p272 = pnand %p270, %p271
      %p273 = pneg %p272
      // Predicated region
      $region45: #{tpu_custom_call.1} parent=5 // pred_check
        _
      $region46: #{tpu_custom_call.1} parent=5 // pred_check_branch
        %275 = sbr.rel (%p272) target = $region48
      $region47: #{tpu_custom_call.1} parent=5 // pred_region
        %s276 = ssub.s32 %s21, 1
        %p277 = scmp.lt.s32.totalorder %s26, 1
        %s278 = scalar_select %p277, %s26, 1
        %s279 = smul.addr %s278, 32
        %s280 = smul.addr %s279, 8
        %s281 = scalar_lea.vmem %s0, %s280
        %p282 = pneg %p47
        %p283 = pneg %p44
        %p284 = pneg %p68
        %p285 = pneg %p65
        %p286 = pneg %p89
        %p287 = pneg %p86
        %p288 = pneg %p110
        %p289 = pneg %p107
        %p290 = pneg %p131
        %p291 = pneg %p128
        %p292 = pneg %p152
        %p293 = pneg %p149
        %p294 = pneg %p173
        %p295 = pneg %p170
        %p296 = pneg %p199
        %p297 = pneg %p196
        %s298 = sand.u32 %s186, 1
        %s299 = scalar_lea.sflag [#allocation5], %s298
        %s300 = sand.u32 %s186, 1
        %s301 = smul.addr %s300, 256
        %s302 = scalar_lea.vmem [#allocation4], %s301
        %p303 = pneg %p225
        %p304 = pneg %p222
        %s305 = sand.u32 %s212, 1
        %s306 = scalar_lea.sflag [#allocation7], %s305
        %s307 = sand.u32 %s212, 1
        %s308 = smul.addr %s307, 256
        %s309 = scalar_lea.vmem [#allocation6], %s308
        %p310 = scmp.lt.s32.totalorder %s26, 1
        %s311 = scalar_select %p310, %s26, 1
        %s312 = smul.addr %s311, 32
        %s313 = smul.addr %s312, 8
        %s314 = scalar_lea.vmem %s0, %s313
        %vm316 = vcmask 23552
        %317 = vst.msk [vmem:[#allocation2] sm:$0xff] %vm316, 0.0
        %318 = vst.msk [vmem:[#allocation2 + $0x8] sm:$0xff] %vm316, 0.0
        %vm319 = vcmask 17408
        %320 = vst.msk [vmem:[#allocation2 + $0x10] sm:$0x3] %vm319, 0.0
        %321 = vst.msk [vmem:[#allocation2 + $0x18] sm:$0xff] %vm316, 0.0
        %322 = vst.msk [vmem:[#allocation2 + $0x20] sm:$0xff] %vm316, 0.0
        %323 = vst.msk [vmem:[#allocation2 + $0x28] sm:$0x3] %vm319, 0.0
        %324 = vst.msk [vmem:[#allocation2 + $0x30] sm:$0xff] %vm316, 0.0
        %325 = vst.msk [vmem:[#allocation2 + $0x38] sm:$0xff] %vm316, 0.0
        %326 = vst.msk [vmem:[#allocation2 + $0x40] sm:$0x3] %vm319, 0.0
        %327 = vst.msk [vmem:[#allocation2 + $0x48] sm:$0xff] %vm316, 0.0
        %328 = vst.msk [vmem:[#allocation2 + $0x50] sm:$0xff] %vm316, 0.0
        %329 = vst.msk [vmem:[#allocation2 + $0x58] sm:$0x3] %vm319, 0.0
        %330 = vst.msk [vmem:[#allocation2 + $0x60] sm:$0xff] %vm316, 0.0
        %331 = vst.msk [vmem:[#allocation2 + $0x68] sm:$0xff] %vm316, 0.0
        %332 = vst.msk [vmem:[#allocation2 + $0x70] sm:$0x3] %vm319, 0.0
        %333 = vst.msk [vmem:[#allocation2 + $0x78] sm:$0xff] %vm316, 0.0
        %334 = vst.msk [vmem:[#allocation2 + $0x80] sm:$0xff] %vm316, 0.0
        %335 = vst.msk [vmem:[#allocation2 + $0x88] sm:$0x3] %vm319, 0.0
        %336 = vst.msk [vmem:[#allocation2 + $0x90] sm:$0xff] %vm316, 0.0
        %337 = vst.msk [vmem:[#allocation2 + $0x98] sm:$0xff] %vm316, 0.0
        %338 = vst.msk [vmem:[#allocation2 + $0xa0] sm:$0x3] %vm319, 0.0
        %339 = vst.msk [vmem:[#allocation2 + $0xa8] sm:$0xff] %vm316, 0.0
        %340 = vst.msk [vmem:[#allocation2 + $0xb0] sm:$0xff] %vm316, 0.0
        %341 = vst.msk [vmem:[#allocation2 + $0xb8] sm:$0x3] %vm319, 0.0
        %342 = vst.msk [vmem:[#allocation2 + $0xc0] sm:$0xff] %vm316, 0.0
        %343 = vst.msk [vmem:[#allocation2 + $0xc8] sm:$0xff] %vm316, 0.0
        %344 = vst.msk [vmem:[#allocation2 + $0xd0] sm:$0x3] %vm319, 0.0
        %345 = vst.msk [vmem:[#allocation2 + $0xd8] sm:$0xff] %vm316, 0.0
        %346 = vst.msk [vmem:[#allocation2 + $0xe0] sm:$0xff] %vm316, 0.0
        %347 = vst.msk [vmem:[#allocation2 + $0xe8] sm:$0x3] %vm319, 0.0
        %348 = vst.msk [vmem:[#allocation2 + $0xf0] sm:$0xff] %vm316, 0.0
        %349 = vst.msk [vmem:[#allocation2 + $0xf8] sm:$0xff] %vm316, 0.0
        %350 = vst.msk [vmem:[#allocation2 + $0x100] sm:$0x3] %vm319, 0.0
        %351 = vst.msk [vmem:[#allocation2 + $0x108] sm:$0xff] %vm316, 0.0
        %352 = vst.msk [vmem:[#allocation2 + $0x110] sm:$0xff] %vm316, 0.0
        %353 = vst.msk [vmem:[#allocation2 + $0x118] sm:$0x3] %vm319, 0.0
        %354 = vst.msk [vmem:[#allocation2 + $0x120] sm:$0xff] %vm316, 0.0
        %355 = vst.msk [vmem:[#allocation2 + $0x128] sm:$0xff] %vm316, 0.0
        %356 = vst.msk [vmem:[#allocation2 + $0x130] sm:$0x3] %vm319, 0.0
        %357 = vst.msk [vmem:[#allocation2 + $0x138] sm:$0xff] %vm316, 0.0
        %358 = vst.msk [vmem:[#allocation2 + $0x140] sm:$0xff] %vm316, 0.0
        %359 = vst.msk [vmem:[#allocation2 + $0x148] sm:$0x3] %vm319, 0.0
        %360 = vst.msk [vmem:[#allocation2 + $0x150] sm:$0xff] %vm316, 0.0
        %361 = vst.msk [vmem:[#allocation2 + $0x158] sm:$0xff] %vm316, 0.0
        %362 = vst.msk [vmem:[#allocation2 + $0x160] sm:$0x3] %vm319, 0.0
        %363 = vst.msk [vmem:[#allocation2 + $0x168] sm:$0xff] %vm316, 0.0
        %364 = vst.msk [vmem:[#allocation2 + $0x170] sm:$0xff] %vm316, 0.0
        %365 = vst.msk [vmem:[#allocation2 + $0x178] sm:$0x3] %vm319, 0.0
        %366 = vst.msk [vmem:[#allocation2 + $0x180] sm:$0xff] %vm316, 0.0
        %367 = vst.msk [vmem:[#allocation2 + $0x188] sm:$0xff] %vm316, 0.0
        %368 = vst.msk [vmem:[#allocation2 + $0x190] sm:$0x3] %vm319, 0.0
        %369 = vst.msk [vmem:[#allocation2 + $0x198] sm:$0xff] %vm316, 0.0
        %370 = vst.msk [vmem:[#allocation2 + $0x1a0] sm:$0xff] %vm316, 0.0
        %371 = vst.msk [vmem:[#allocation2 + $0x1a8] sm:$0x3] %vm319, 0.0
        %vm372 = vcmask 523264
        %373 = vst.msk [vmem:[#allocation3] sm:$0xff] %vm372, 0.0
        %374 = vst.msk [vmem:[#allocation3 + $0x8] sm:$0xff] %vm372, 0.0
        %vm375 = vcmask 517120
        %376 = vst.msk [vmem:[#allocation3 + $0x10] sm:$0x3] %vm375, 0.0
        %377 = vst.msk [vmem:[#allocation3 + $0x18] sm:$0xff] %vm372, 0.0
        %378 = vst.msk [vmem:[#allocation3 + $0x20] sm:$0xff] %vm372, 0.0
        %379 = vst.msk [vmem:[#allocation3 + $0x28] sm:$0x3] %vm375, 0.0
        %380 = vst.msk [vmem:[#allocation3 + $0x30] sm:$0xff] %vm372, 0.0
        %381 = vst.msk [vmem:[#allocation3 + $0x38] sm:$0xff] %vm372, 0.0
        %382 = vst.msk [vmem:[#allocation3 + $0x40] sm:$0x3] %vm375, 0.0
        %383 = vst.msk [vmem:[#allocation3 + $0x48] sm:$0xff] %vm372, 0.0
        %384 = vst.msk [vmem:[#allocation3 + $0x50] sm:$0xff] %vm372, 0.0
        %385 = vst.msk [vmem:[#allocation3 + $0x58] sm:$0x3] %vm375, 0.0
        %386 = vst.msk [vmem:[#allocation3 + $0x60] sm:$0xff] %vm372, 0.0
        %387 = vst.msk [vmem:[#allocation3 + $0x68] sm:$0xff] %vm372, 0.0
        %388 = vst.msk [vmem:[#allocation3 + $0x70] sm:$0x3] %vm375, 0.0
        %389 = vst.msk [vmem:[#allocation3 + $0x78] sm:$0xff] %vm372, 0.0
        %390 = vst.msk [vmem:[#allocation3 + $0x80] sm:$0xff] %vm372, 0.0
        %391 = vst.msk [vmem:[#allocation3 + $0x88] sm:$0x3] %vm375, 0.0
        %392 = vst.msk [vmem:[#allocation3 + $0x90] sm:$0xff] %vm372, 0.0
        %393 = vst.msk [vmem:[#allocation3 + $0x98] sm:$0xff] %vm372, 0.0
        %394 = vst.msk [vmem:[#allocation3 + $0xa0] sm:$0x3] %vm375, 0.0
        %395 = vst.msk [vmem:[#allocation3 + $0xa8] sm:$0xff] %vm372, 0.0
        %396 = vst.msk [vmem:[#allocation3 + $0xb0] sm:$0xff] %vm372, 0.0
        %397 = vst.msk [vmem:[#allocation3 + $0xb8] sm:$0x3] %vm375, 0.0
        %398 = vst.msk [vmem:[#allocation3 + $0xc0] sm:$0xff] %vm372, 0.0
        %399 = vst.msk [vmem:[#allocation3 + $0xc8] sm:$0xff] %vm372, 0.0
        %400 = vst.msk [vmem:[#allocation3 + $0xd0] sm:$0x3] %vm375, 0.0
        %401 = vst.msk [vmem:[#allocation3 + $0xd8] sm:$0xff] %vm372, 0.0
        %402 = vst.msk [vmem:[#allocation3 + $0xe0] sm:$0xff] %vm372, 0.0
        %403 = vst.msk [vmem:[#allocation3 + $0xe8] sm:$0x3] %vm375, 0.0
        %404 = vst.msk [vmem:[#allocation3 + $0xf0] sm:$0xff] %vm372, 0.0
        %405 = vst.msk [vmem:[#allocation3 + $0xf8] sm:$0xff] %vm372, 0.0
        %406 = vst.msk [vmem:[#allocation3 + $0x100] sm:$0x3] %vm375, 0.0
        %407 = vst.msk [vmem:[#allocation3 + $0x108] sm:$0xff] %vm372, 0.0
        %408 = vst.msk [vmem:[#allocation3 + $0x110] sm:$0xff] %vm372, 0.0
        %409 = vst.msk [vmem:[#allocation3 + $0x118] sm:$0x3] %vm375, 0.0
        %410 = vst.msk [vmem:[#allocation3 + $0x120] sm:$0xff] %vm372, 0.0
        %411 = vst.msk [vmem:[#allocation3 + $0x128] sm:$0xff] %vm372, 0.0
        %412 = vst.msk [vmem:[#allocation3 + $0x130] sm:$0x3] %vm375, 0.0
        %413 = vst.msk [vmem:[#allocation3 + $0x138] sm:$0xff] %vm372, 0.0
        %414 = vst.msk [vmem:[#allocation3 + $0x140] sm:$0xff] %vm372, 0.0
        %415 = vst.msk [vmem:[#allocation3 + $0x148] sm:$0x3] %vm375, 0.0
        %416 = vst.msk [vmem:[#allocation3 + $0x150] sm:$0xff] %vm372, 0.0
        %417 = vst.msk [vmem:[#allocation3 + $0x158] sm:$0xff] %vm372, 0.0
        %418 = vst.msk [vmem:[#allocation3 + $0x160] sm:$0x3] %vm375, 0.0
        %419 = vst.msk [vmem:[#allocation3 + $0x168] sm:$0xff] %vm372, 0.0
        %420 = vst.msk [vmem:[#allocation3 + $0x170] sm:$0xff] %vm372, 0.0
        %421 = vst.msk [vmem:[#allocation3 + $0x178] sm:$0x3] %vm375, 0.0
        %422 = vst.msk [vmem:[#allocation3 + $0x180] sm:$0xff] %vm372, 0.0
        %423 = vst.msk [vmem:[#allocation3 + $0x188] sm:$0xff] %vm372, 0.0
        %424 = vst.msk [vmem:[#allocation3 + $0x190] sm:$0x3] %vm375, 0.0
        %425 = vst.msk [vmem:[#allocation3 + $0x198] sm:$0xff] %vm372, 0.0
        %426 = vst.msk [vmem:[#allocation3 + $0x1a0] sm:$0xff] %vm372, 0.0
        %427 = vst.msk [vmem:[#allocation3 + $0x1a8] sm:$0x3] %vm375, 0.0
        %v428 = vld [vmem:[%s314] sm:$0xff]
        %v429 = vld [vmem:[%s314 + $0x8] sm:$0xff]
        %v430 = vld [vmem:[%s314 + $0x10] sm:$0xff]
        %v431 = vld [vmem:[%s314 + $0x18] sm:$0xff]
        %v432 = vld [vmem:[%s314 + $0x20] sm:$0xff]
        %v433 = vld [vmem:[%s314 + $0x28] sm:$0xff]
        %v434 = vld [vmem:[%s314 + $0x30] sm:$0xff]
        %v435 = vld [vmem:[%s314 + $0x38] sm:$0xff]
        %v436 = vld [vmem:[%s314 + $0x40] sm:$0xff]
        %v437 = vld [vmem:[%s314 + $0x48] sm:$0xff]
        %v438 = vld [vmem:[%s314 + $0x50] sm:$0xff]
        %v439 = vld [vmem:[%s314 + $0x58] sm:$0xff]
        %v440 = vld [vmem:[%s314 + $0x60] sm:$0xff]
        %v441 = vld [vmem:[%s314 + $0x68] sm:$0xff]
        %v442 = vld [vmem:[%s314 + $0x70] sm:$0xff]
        %v443 = vld [vmem:[%s314 + $0x78] sm:$0xff]
        %v444 = vld [vmem:[%s314 + $0x80] sm:$0xff]
        %v445 = vld [vmem:[%s314 + $0x88] sm:$0xff]
        %v446 = vld [vmem:[%s314 + $0x90] sm:$0xff]
        %v447 = vld [vmem:[%s314 + $0x98] sm:$0xff]
        %v448 = vld [vmem:[%s314 + $0xa0] sm:$0xff]
        %v449 = vld [vmem:[%s314 + $0xa8] sm:$0xff]
        %v450 = vld [vmem:[%s314 + $0xb0] sm:$0xff]
        %v451 = vld [vmem:[%s314 + $0xb8] sm:$0xff]
        %v452 = vld [vmem:[%s314 + $0xc0] sm:$0xff]
        %v453 = vld [vmem:[%s314 + $0xc8] sm:$0xff]
        %v454 = vld [vmem:[%s314 + $0xd0] sm:$0xff]
        %v455 = vld [vmem:[%s314 + $0xd8] sm:$0xff]
        %v456 = vld [vmem:[%s314 + $0xe0] sm:$0xff]
        %v457 = vld [vmem:[%s314 + $0xe8] sm:$0xff]
        %v458 = vld [vmem:[%s314 + $0xf0] sm:$0xff]
        %v459 = vld [vmem:[%s314 + $0xf8] sm:$0xff]
        %s460 = scalar_lea.vmem [#allocation2], 24
        %461 = vst.msk [vmem:[%s460 + $0x1] sm:$0xff] %vm316, %v428
        %462 = vst.msk [vmem:[%s460 + $0x9] sm:$0xff] %vm316, %v429
        %463 = vst.msk [vmem:[%s460 + $0x19] sm:$0xff] %vm316, %v430
        %464 = vst.msk [vmem:[%s460 + $0x21] sm:$0xff] %vm316, %v431
        %465 = vst.msk [vmem:[%s460 + $0x31] sm:$0xff] %vm316, %v432
        %466 = vst.msk [vmem:[%s460 + $0x39] sm:$0xff] %vm316, %v433
        %467 = vst.msk [vmem:[%s460 + $0x49] sm:$0xff] %vm316, %v434
        %468 = vst.msk [vmem:[%s460 + $0x51] sm:$0xff] %vm316, %v435
        %469 = vst.msk [vmem:[%s460 + $0x61] sm:$0xff] %vm316, %v436
        %470 = vst.msk [vmem:[%s460 + $0x69] sm:$0xff] %vm316, %v437
        %471 = vst.msk [vmem:[%s460 + $0x79] sm:$0xff] %vm316, %v438
        %472 = vst.msk [vmem:[%s460 + $0x81] sm:$0xff] %vm316, %v439
        %473 = vst.msk [vmem:[%s460 + $0x91] sm:$0xff] %vm316, %v440
        %474 = vst.msk [vmem:[%s460 + $0x99] sm:$0xff] %vm316, %v441
        %475 = vst.msk [vmem:[%s460 + $0xa9] sm:$0xff] %vm316, %v442
        %476 = vst.msk [vmem:[%s460 + $0xb1] sm:$0xff] %vm316, %v443
        %477 = vst.msk [vmem:[%s460 + $0xc1] sm:$0xff] %vm316, %v444
        %478 = vst.msk [vmem:[%s460 + $0xc9] sm:$0xff] %vm316, %v445
        %479 = vst.msk [vmem:[%s460 + $0xd9] sm:$0xff] %vm316, %v446
        %480 = vst.msk [vmem:[%s460 + $0xe1] sm:$0xff] %vm316, %v447
        %481 = vst.msk [vmem:[%s460 + $0xf1] sm:$0xff] %vm316, %v448
        %482 = vst.msk [vmem:[%s460 + $0xf9] sm:$0xff] %vm316, %v449
        %483 = vst.msk [vmem:[%s460 + $0x109] sm:$0xff] %vm316, %v450
        %484 = vst.msk [vmem:[%s460 + $0x111] sm:$0xff] %vm316, %v451
        %485 = vst.msk [vmem:[%s460 + $0x121] sm:$0xff] %vm316, %v452
        %486 = vst.msk [vmem:[%s460 + $0x129] sm:$0xff] %vm316, %v453
        %487 = vst.msk [vmem:[%s460 + $0x139] sm:$0xff] %vm316, %v454
        %488 = vst.msk [vmem:[%s460 + $0x141] sm:$0xff] %vm316, %v455
        %489 = vst.msk [vmem:[%s460 + $0x151] sm:$0xff] %vm316, %v456
        %490 = vst.msk [vmem:[%s460 + $0x159] sm:$0xff] %vm316, %v457
        %491 = vst.msk [vmem:[%s460 + $0x169] sm:$0xff] %vm316, %v458
        %492 = vst.msk [vmem:[%s460 + $0x171] sm:$0xff] %vm316, %v459
        %v493 = vld [vmem:[#allocation2] sm:$0xff]
        %v494 = vld [vmem:[#allocation2 + $0x8] sm:$0xff]
        %v495 = vld [vmem:[#allocation2 + $0x18] sm:$0xff]
        %v496 = vld [vmem:[#allocation2 + $0x20] sm:$0xff]
        %v497 = vld [vmem:[#allocation2 + $0x30] sm:$0xff]
        %v498 = vld [vmem:[#allocation2 + $0x38] sm:$0xff]
        %v499 = vld [vmem:[#allocation2 + $0x48] sm:$0xff]
        %v500 = vld [vmem:[#allocation2 + $0x50] sm:$0xff]
        %v501 = vld [vmem:[#allocation2 + $0x60] sm:$0xff]
        %v502 = vld [vmem:[#allocation2 + $0x68] sm:$0xff]
        %v503 = vld [vmem:[#allocation2 + $0x78] sm:$0xff]
        %v504 = vld [vmem:[#allocation2 + $0x80] sm:$0xff]
        %v505 = vld [vmem:[#allocation2 + $0x90] sm:$0xff]
        %v506 = vld [vmem:[#allocation2 + $0x98] sm:$0xff]
        %v507 = vld [vmem:[#allocation2 + $0xa8] sm:$0xff]
        %v508 = vld [vmem:[#allocation2 + $0xb0] sm:$0xff]
        %v509 = vld [vmem:[#allocation2 + $0xc0] sm:$0xff]
        %v510 = vld [vmem:[#allocation2 + $0xc8] sm:$0xff]
        %v511 = vld [vmem:[#allocation2 + $0xd8] sm:$0xff]
        %v512 = vld [vmem:[#allocation2 + $0xe0] sm:$0xff]
        %v513 = vld [vmem:[#allocation2 + $0xf0] sm:$0xff]
        %v514 = vld [vmem:[#allocation2 + $0xf8] sm:$0xff]
        %v515 = vld [vmem:[#allocation2 + $0x108] sm:$0xff]
        %v516 = vld [vmem:[#allocation2 + $0x110] sm:$0xff]
        %v517 = vld [vmem:[#allocation2 + $0x120] sm:$0xff]
        %v518 = vld [vmem:[#allocation2 + $0x128] sm:$0xff]
        %v519 = vld [vmem:[#allocation2 + $0x138] sm:$0xff]
        %v520 = vld [vmem:[#allocation2 + $0x140] sm:$0xff]
        %v521 = vld [vmem:[#allocation2 + $0x150] sm:$0xff]
        %v522 = vld [vmem:[#allocation2 + $0x158] sm:$0xff]
        %v523 = vld [vmem:[#allocation2 + $0x168] sm:$0xff]
        %v524 = vld [vmem:[#allocation2 + $0x170] sm:$0xff]
        %v525 = vld [vmem:[#allocation2 + $0x1] sm:$0xff]
        %v526 = vld [vmem:[#allocation2 + $0x9] sm:$0xff]
        %v527 = vld [vmem:[#allocation2 + $0x19] sm:$0xff]
        %v528 = vld [vmem:[#allocation2 + $0x21] sm:$0xff]
        %v529 = vld [vmem:[#allocation2 + $0x31] sm:$0xff]
        %v530 = vld [vmem:[#allocation2 + $0x39] sm:$0xff]
        %v531 = vld [vmem:[#allocation2 + $0x49] sm:$0xff]
        %v532 = vld [vmem:[#allocation2 + $0x51] sm:$0xff]
        %v533 = vld [vmem:[#allocation2 + $0x61] sm:$0xff]
        %v534 = vld [vmem:[#allocation2 + $0x69] sm:$0xff]
        %v535 = vld [vmem:[#allocation2 + $0x79] sm:$0xff]
        %v536 = vld [vmem:[#allocation2 + $0x81] sm:$0xff]
        %v537 = vld [vmem:[#allocation2 + $0x91] sm:$0xff]
        %v538 = vld [vmem:[#allocation2 + $0x99] sm:$0xff]
        %v539 = vld [vmem:[#allocation2 + $0xa9] sm:$0xff]
        %v540 = vld [vmem:[#allocation2 + $0xb1] sm:$0xff]
        %v541 = vld [vmem:[#allocation2 + $0xc1] sm:$0xff]
        %v542 = vld [vmem:[#allocation2 + $0xc9] sm:$0xff]
        %v543 = vld [vmem:[#allocation2 + $0xd9] sm:$0xff]
        %v544 = vld [vmem:[#allocation2 + $0xe1] sm:$0xff]
        %v545 = vld [vmem:[#allocation2 + $0xf1] sm:$0xff]
        %v546 = vld [vmem:[#allocation2 + $0xf9] sm:$0xff]
        %v547 = vld [vmem:[#allocation2 + $0x109] sm:$0xff]
        %v548 = vld [vmem:[#allocation2 + $0x111] sm:$0xff]
        %v549 = vld [vmem:[#allocation2 + $0x121] sm:$0xff]
        %v550 = vld [vmem:[#allocation2 + $0x129] sm:$0xff]
        %v551 = vld [vmem:[#allocation2 + $0x139] sm:$0xff]
        %v552 = vld [vmem:[#allocation2 + $0x141] sm:$0xff]
        %v553 = vld [vmem:[#allocation2 + $0x151] sm:$0xff]
        %v554 = vld [vmem:[#allocation2 + $0x159] sm:$0xff]
        %v555 = vld [vmem:[#allocation2 + $0x169] sm:$0xff]
        %v556 = vld [vmem:[#allocation2 + $0x171] sm:$0xff]
        %v557 = vld [vmem:[#allocation2 + $0x2] sm:$0xff]
        %v558 = vld [vmem:[#allocation2 + $0xa] sm:$0xff]
        %v559 = vld [vmem:[#allocation2 + $0x1a] sm:$0xff]
        %v560 = vld [vmem:[#allocation2 + $0x22] sm:$0xff]
        %v561 = vld [vmem:[#allocation2 + $0x32] sm:$0xff]
        %v562 = vld [vmem:[#allocation2 + $0x3a] sm:$0xff]
        %v563 = vld [vmem:[#allocation2 + $0x4a] sm:$0xff]
        %v564 = vld [vmem:[#allocation2 + $0x52] sm:$0xff]
        %v565 = vld [vmem:[#allocation2 + $0x62] sm:$0xff]
        %v566 = vld [vmem:[#allocation2 + $0x6a] sm:$0xff]
        %v567 = vld [vmem:[#allocation2 + $0x7a] sm:$0xff]
        %v568 = vld [vmem:[#allocation2 + $0x82] sm:$0xff]
        %v569 = vld [vmem:[#allocation2 + $0x92] sm:$0xff]
        %v570 = vld [vmem:[#allocation2 + $0x9a] sm:$0xff]
        %v571 = vld [vmem:[#allocation2 + $0xaa] sm:$0xff]
        %v572 = vld [vmem:[#allocation2 + $0xb2] sm:$0xff]
        %v573 = vld [vmem:[#allocation2 + $0xc2] sm:$0xff]
        %v574 = vld [vmem:[#allocation2 + $0xca] sm:$0xff]
        %v575 = vld [vmem:[#allocation2 + $0xda] sm:$0xff]
        %v576 = vld [vmem:[#allocation2 + $0xe2] sm:$0xff]
        %v577 = vld [vmem:[#allocation2 + $0xf2] sm:$0xff]
        %v578 = vld [vmem:[#allocation2 + $0xfa] sm:$0xff]
        %v579 = vld [vmem:[#allocation2 + $0x10a] sm:$0xff]
        %v580 = vld [vmem:[#allocation2 + $0x112] sm:$0xff]
        %v581 = vld [vmem:[#allocation2 + $0x122] sm:$0xff]
        %v582 = vld [vmem:[#allocation2 + $0x12a] sm:$0xff]
        %v583 = vld [vmem:[#allocation2 + $0x13a] sm:$0xff]
        %v584 = vld [vmem:[#allocation2 + $0x142] sm:$0xff]
        %v585 = vld [vmem:[#allocation2 + $0x152] sm:$0xff]
        %v586 = vld [vmem:[#allocation2 + $0x15a] sm:$0xff]
        %v587 = vld [vmem:[#allocation2 + $0x16a] sm:$0xff]
        %v588 = vld [vmem:[#allocation2 + $0x172] sm:$0xff]
        %v589 = vld [vmem:[%s460] sm:$0xff]
        %v590 = vld [vmem:[%s460 + $0x8] sm:$0xff]
        %v591 = vld [vmem:[%s460 + $0x18] sm:$0xff]
        %v592 = vld [vmem:[%s460 + $0x20] sm:$0xff]
        %v593 = vld [vmem:[%s460 + $0x30] sm:$0xff]
        %v594 = vld [vmem:[%s460 + $0x38] sm:$0xff]
        %v595 = vld [vmem:[%s460 + $0x48] sm:$0xff]
        %v596 = vld [vmem:[%s460 + $0x50] sm:$0xff]
        %v597 = vld [vmem:[%s460 + $0x60] sm:$0xff]
        %v598 = vld [vmem:[%s460 + $0x68] sm:$0xff]
        %v599 = vld [vmem:[%s460 + $0x78] sm:$0xff]
        %v600 = vld [vmem:[%s460 + $0x80] sm:$0xff]
        %v601 = vld [vmem:[%s460 + $0x90] sm:$0xff]
        %v602 = vld [vmem:[%s460 + $0x98] sm:$0xff]
        %v603 = vld [vmem:[%s460 + $0xa8] sm:$0xff]
        %v604 = vld [vmem:[%s460 + $0xb0] sm:$0xff]
        %v605 = vld [vmem:[%s460 + $0xc0] sm:$0xff]
        %v606 = vld [vmem:[%s460 + $0xc8] sm:$0xff]
        %v607 = vld [vmem:[%s460 + $0xd8] sm:$0xff]
        %v608 = vld [vmem:[%s460 + $0xe0] sm:$0xff]
        %v609 = vld [vmem:[%s460 + $0xf0] sm:$0xff]
        %v610 = vld [vmem:[%s460 + $0xf8] sm:$0xff]
        %v611 = vld [vmem:[%s460 + $0x108] sm:$0xff]
        %v612 = vld [vmem:[%s460 + $0x110] sm:$0xff]
        %v613 = vld [vmem:[%s460 + $0x120] sm:$0xff]
        %v614 = vld [vmem:[%s460 + $0x128] sm:$0xff]
        %v615 = vld [vmem:[%s460 + $0x138] sm:$0xff]
        %v616 = vld [vmem:[%s460 + $0x140] sm:$0xff]
        %v617 = vld [vmem:[%s460 + $0x150] sm:$0xff]
        %v618 = vld [vmem:[%s460 + $0x158] sm:$0xff]
        %v619 = vld [vmem:[%s460 + $0x168] sm:$0xff]
        %v620 = vld [vmem:[%s460 + $0x170] sm:$0xff]
        %v621 = vld [vmem:[%s460 + $0x1] sm:$0xff]
        %v622 = vld [vmem:[%s460 + $0x9] sm:$0xff]
        %v623 = vld [vmem:[%s460 + $0x19] sm:$0xff]
        %v624 = vld [vmem:[%s460 + $0x21] sm:$0xff]
        %v625 = vld [vmem:[%s460 + $0x31] sm:$0xff]
        %v626 = vld [vmem:[%s460 + $0x39] sm:$0xff]
        %v627 = vld [vmem:[%s460 + $0x49] sm:$0xff]
        %v628 = vld [vmem:[%s460 + $0x51] sm:$0xff]
        %v629 = vld [vmem:[%s460 + $0x61] sm:$0xff]
        %v630 = vld [vmem:[%s460 + $0x69] sm:$0xff]
        %v631 = vld [vmem:[%s460 + $0x79] sm:$0xff]
        %v632 = vld [vmem:[%s460 + $0x81] sm:$0xff]
        %v633 = vld [vmem:[%s460 + $0x91] sm:$0xff]
        %v634 = vld [vmem:[%s460 + $0x99] sm:$0xff]
        %v635 = vld [vmem:[%s460 + $0xa9] sm:$0xff]
        %v636 = vld [vmem:[%s460 + $0xb1] sm:$0xff]
        %v637 = vld [vmem:[%s460 + $0xc1] sm:$0xff]
        %v638 = vld [vmem:[%s460 + $0xc9] sm:$0xff]
        %v639 = vld [vmem:[%s460 + $0xd9] sm:$0xff]
        %v640 = vld [vmem:[%s460 + $0xe1] sm:$0xff]
        %v641 = vld [vmem:[%s460 + $0xf1] sm:$0xff]
        %v642 = vld [vmem:[%s460 + $0xf9] sm:$0xff]
        %v643 = vld [vmem:[%s460 + $0x109] sm:$0xff]
        %v644 = vld [vmem:[%s460 + $0x111] sm:$0xff]
        %v645 = vld [vmem:[%s460 + $0x121] sm:$0xff]
        %v646 = vld [vmem:[%s460 + $0x129] sm:$0xff]
        %v647 = vld [vmem:[%s460 + $0x139] sm:$0xff]
        %v648 = vld [vmem:[%s460 + $0x141] sm:$0xff]
        %v649 = vld [vmem:[%s460 + $0x151] sm:$0xff]
        %v650 = vld [vmem:[%s460 + $0x159] sm:$0xff]
        %v651 = vld [vmem:[%s460 + $0x169] sm:$0xff]
        %v652 = vld [vmem:[%s460 + $0x171] sm:$0xff]
        %v653 = vld [vmem:[%s460 + $0x2] sm:$0xff]
        %v654 = vld [vmem:[%s460 + $0xa] sm:$0xff]
        %v655 = vld [vmem:[%s460 + $0x1a] sm:$0xff]
        %v656 = vld [vmem:[%s460 + $0x22] sm:$0xff]
        %v657 = vld [vmem:[%s460 + $0x32] sm:$0xff]
        %v658 = vld [vmem:[%s460 + $0x3a] sm:$0xff]
        %v659 = vld [vmem:[%s460 + $0x4a] sm:$0xff]
        %v660 = vld [vmem:[%s460 + $0x52] sm:$0xff]
        %v661 = vld [vmem:[%s460 + $0x62] sm:$0xff]
        %v662 = vld [vmem:[%s460 + $0x6a] sm:$0xff]
        %v663 = vld [vmem:[%s460 + $0x7a] sm:$0xff]
        %v664 = vld [vmem:[%s460 + $0x82] sm:$0xff]
        %v665 = vld [vmem:[%s460 + $0x92] sm:$0xff]
        %v666 = vld [vmem:[%s460 + $0x9a] sm:$0xff]
        %v667 = vld [vmem:[%s460 + $0xaa] sm:$0xff]
        %v668 = vld [vmem:[%s460 + $0xb2] sm:$0xff]
        %v669 = vld [vmem:[%s460 + $0xc2] sm:$0xff]
        %v670 = vld [vmem:[%s460 + $0xca] sm:$0xff]
        %v671 = vld [vmem:[%s460 + $0xda] sm:$0xff]
        %v672 = vld [vmem:[%s460 + $0xe2] sm:$0xff]
        %v673 = vld [vmem:[%s460 + $0xf2] sm:$0xff]
        %v674 = vld [vmem:[%s460 + $0xfa] sm:$0xff]
        %v675 = vld [vmem:[%s460 + $0x10a] sm:$0xff]
        %v676 = vld [vmem:[%s460 + $0x112] sm:$0xff]
        %v677 = vld [vmem:[%s460 + $0x122] sm:$0xff]
        %v678 = vld [vmem:[%s460 + $0x12a] sm:$0xff]
        %v679 = vld [vmem:[%s460 + $0x13a] sm:$0xff]
        %v680 = vld [vmem:[%s460 + $0x142] sm:$0xff]
        %v681 = vld [vmem:[%s460 + $0x152] sm:$0xff]
        %v682 = vld [vmem:[%s460 + $0x15a] sm:$0xff]
        %v683 = vld [vmem:[%s460 + $0x16a] sm:$0xff]
        %v684 = vld [vmem:[%s460 + $0x172] sm:$0xff]
        %s685 = scalar_lea.vmem [#allocation2], 48
        %v686 = vld [vmem:[%s685] sm:$0xff]
        %v687 = vld [vmem:[%s685 + $0x8] sm:$0xff]
        %v688 = vld [vmem:[%s685 + $0x18] sm:$0xff]
        %v689 = vld [vmem:[%s685 + $0x20] sm:$0xff]
        %v690 = vld [vmem:[%s685 + $0x30] sm:$0xff]
        %v691 = vld [vmem:[%s685 + $0x38] sm:$0xff]
        %v692 = vld [vmem:[%s685 + $0x48] sm:$0xff]
        %v693 = vld [vmem:[%s685 + $0x50] sm:$0xff]
        %v694 = vld [vmem:[%s685 + $0x60] sm:$0xff]
        %v695 = vld [vmem:[%s685 + $0x68] sm:$0xff]
        %v696 = vld [vmem:[%s685 + $0x78] sm:$0xff]
        %v697 = vld [vmem:[%s685 + $0x80] sm:$0xff]
        %v698 = vld [vmem:[%s685 + $0x90] sm:$0xff]
        %v699 = vld [vmem:[%s685 + $0x98] sm:$0xff]
        %v700 = vld [vmem:[%s685 + $0xa8] sm:$0xff]
        %v701 = vld [vmem:[%s685 + $0xb0] sm:$0xff]
        %v702 = vld [vmem:[%s685 + $0xc0] sm:$0xff]
        %v703 = vld [vmem:[%s685 + $0xc8] sm:$0xff]
        %v704 = vld [vmem:[%s685 + $0xd8] sm:$0xff]
        %v705 = vld [vmem:[%s685 + $0xe0] sm:$0xff]
        %v706 = vld [vmem:[%s685 + $0xf0] sm:$0xff]
        %v707 = vld [vmem:[%s685 + $0xf8] sm:$0xff]
        %v708 = vld [vmem:[%s685 + $0x108] sm:$0xff]
        %v709 = vld [vmem:[%s685 + $0x110] sm:$0xff]
        %v710 = vld [vmem:[%s685 + $0x120] sm:$0xff]
        %v711 = vld [vmem:[%s685 + $0x128] sm:$0xff]
        %v712 = vld [vmem:[%s685 + $0x138] sm:$0xff]
        %v713 = vld [vmem:[%s685 + $0x140] sm:$0xff]
        %v714 = vld [vmem:[%s685 + $0x150] sm:$0xff]
        %v715 = vld [vmem:[%s685 + $0x158] sm:$0xff]
        %v716 = vld [vmem:[%s685 + $0x168] sm:$0xff]
        %v717 = vld [vmem:[%s685 + $0x170] sm:$0xff]
        %v718 = vld [vmem:[%s685 + $0x1] sm:$0xff]
        %v719 = vld [vmem:[%s685 + $0x9] sm:$0xff]
        %v720 = vld [vmem:[%s685 + $0x19] sm:$0xff]
        %v721 = vld [vmem:[%s685 + $0x21] sm:$0xff]
        %v722 = vld [vmem:[%s685 + $0x31] sm:$0xff]
        %v723 = vld [vmem:[%s685 + $0x39] sm:$0xff]
        %v724 = vld [vmem:[%s685 + $0x49] sm:$0xff]
        %v725 = vld [vmem:[%s685 + $0x51] sm:$0xff]
        %v726 = vld [vmem:[%s685 + $0x61] sm:$0xff]
        %v727 = vld [vmem:[%s685 + $0x69] sm:$0xff]
        %v728 = vld [vmem:[%s685 + $0x79] sm:$0xff]
        %v729 = vld [vmem:[%s685 + $0x81] sm:$0xff]
        %v730 = vld [vmem:[%s685 + $0x91] sm:$0xff]
        %v731 = vld [vmem:[%s685 + $0x99] sm:$0xff]
        %v732 = vld [vmem:[%s685 + $0xa9] sm:$0xff]
        %v733 = vld [vmem:[%s685 + $0xb1] sm:$0xff]
        %v734 = vld [vmem:[%s685 + $0xc1] sm:$0xff]
        %v735 = vld [vmem:[%s685 + $0xc9] sm:$0xff]
        %v736 = vld [vmem:[%s685 + $0xd9] sm:$0xff]
        %v737 = vld [vmem:[%s685 + $0xe1] sm:$0xff]
        %v738 = vld [vmem:[%s685 + $0xf1] sm:$0xff]
        %v739 = vld [vmem:[%s685 + $0xf9] sm:$0xff]
        %v740 = vld [vmem:[%s685 + $0x109] sm:$0xff]
        %v741 = vld [vmem:[%s685 + $0x111] sm:$0xff]
        %v742 = vld [vmem:[%s685 + $0x121] sm:$0xff]
        %v743 = vld [vmem:[%s685 + $0x129] sm:$0xff]
        %v744 = vld [vmem:[%s685 + $0x139] sm:$0xff]
        %v745 = vld [vmem:[%s685 + $0x141] sm:$0xff]
        %v746 = vld [vmem:[%s685 + $0x151] sm:$0xff]
        %v747 = vld [vmem:[%s685 + $0x159] sm:$0xff]
        %v748 = vld [vmem:[%s685 + $0x169] sm:$0xff]
        %v749 = vld [vmem:[%s685 + $0x171] sm:$0xff]
        %v750 = vld [vmem:[%s685 + $0x2] sm:$0xff]
        %v751 = vld [vmem:[%s685 + $0xa] sm:$0xff]
        %v752 = vld [vmem:[%s685 + $0x1a] sm:$0xff]
        %v753 = vld [vmem:[%s685 + $0x22] sm:$0xff]
        %v754 = vld [vmem:[%s685 + $0x32] sm:$0xff]
        %v755 = vld [vmem:[%s685 + $0x3a] sm:$0xff]
        %v756 = vld [vmem:[%s685 + $0x4a] sm:$0xff]
        %v757 = vld [vmem:[%s685 + $0x52] sm:$0xff]
        %v758 = vld [vmem:[%s685 + $0x62] sm:$0xff]
        %v759 = vld [vmem:[%s685 + $0x6a] sm:$0xff]
        %v760 = vld [vmem:[%s685 + $0x7a] sm:$0xff]
        %v761 = vld [vmem:[%s685 + $0x82] sm:$0xff]
        %v762 = vld [vmem:[%s685 + $0x92] sm:$0xff]
        %v763 = vld [vmem:[%s685 + $0x9a] sm:$0xff]
        %v764 = vld [vmem:[%s685 + $0xaa] sm:$0xff]
        %v765 = vld [vmem:[%s685 + $0xb2] sm:$0xff]
        %v766 = vld [vmem:[%s685 + $0xc2] sm:$0xff]
        %v767 = vld [vmem:[%s685 + $0xca] sm:$0xff]
        %v768 = vld [vmem:[%s685 + $0xda] sm:$0xff]
        %v769 = vld [vmem:[%s685 + $0xe2] sm:$0xff]
        %v770 = vld [vmem:[%s685 + $0xf2] sm:$0xff]
        %v771 = vld [vmem:[%s685 + $0xfa] sm:$0xff]
        %v772 = vld [vmem:[%s685 + $0x10a] sm:$0xff]
        %v773 = vld [vmem:[%s685 + $0x112] sm:$0xff]
        %v774 = vld [vmem:[%s685 + $0x122] sm:$0xff]
        %v775 = vld [vmem:[%s685 + $0x12a] sm:$0xff]
        %v776 = vld [vmem:[%s685 + $0x13a] sm:$0xff]
        %v777 = vld [vmem:[%s685 + $0x142] sm:$0xff]
        %v778 = vld [vmem:[%s685 + $0x152] sm:$0xff]
        %v779 = vld [vmem:[%s685 + $0x15a] sm:$0xff]
        %v780 = vld [vmem:[%s685 + $0x16a] sm:$0xff]
        %v781 = vld [vmem:[%s685 + $0x172] sm:$0xff]
        %814 = vrot.lane.b32.xlu0 %v525, 3
        %v815 = vpop.permute.xlu0 %814
        %816 = vrot.lane.b32.xlu0 %v526, 3
        %v817 = vpop.permute.xlu0 %816
        %818 = vrot.lane.b32.xlu0 %v527, 3
        %v819 = vpop.permute.xlu0 %818
        %820 = vrot.lane.b32.xlu0 %v528, 3
        %v821 = vpop.permute.xlu0 %820
        %822 = vrot.lane.b32.xlu0 %v529, 3
        %v823 = vpop.permute.xlu0 %822
        %824 = vrot.lane.b32.xlu0 %v530, 3
        %v825 = vpop.permute.xlu0 %824
        %826 = vrot.lane.b32.xlu0 %v531, 3
        %v827 = vpop.permute.xlu0 %826
        %828 = vrot.lane.b32.xlu0 %v532, 3
        %v829 = vpop.permute.xlu0 %828
        %830 = vrot.lane.b32.xlu0 %v533, 3
        %v831 = vpop.permute.xlu0 %830
        %832 = vrot.lane.b32.xlu0 %v534, 3
        %v833 = vpop.permute.xlu0 %832
        %834 = vrot.lane.b32.xlu0 %v535, 3
        %v835 = vpop.permute.xlu0 %834
        %836 = vrot.lane.b32.xlu0 %v536, 3
        %v837 = vpop.permute.xlu0 %836
        %838 = vrot.lane.b32.xlu0 %v537, 3
        %v839 = vpop.permute.xlu0 %838
        %840 = vrot.lane.b32.xlu0 %v538, 3
        %v841 = vpop.permute.xlu0 %840
        %842 = vrot.lane.b32.xlu0 %v539, 3
        %v843 = vpop.permute.xlu0 %842
        %844 = vrot.lane.b32.xlu0 %v540, 3
        %v845 = vpop.permute.xlu0 %844
        %846 = vrot.lane.b32.xlu0 %v541, 3
        %v847 = vpop.permute.xlu0 %846
        %848 = vrot.lane.b32.xlu0 %v542, 3
        %v849 = vpop.permute.xlu0 %848
        %850 = vrot.lane.b32.xlu0 %v543, 3
        %v851 = vpop.permute.xlu0 %850
        %852 = vrot.lane.b32.xlu0 %v544, 3
        %v853 = vpop.permute.xlu0 %852
        %854 = vrot.lane.b32.xlu0 %v545, 3
        %v855 = vpop.permute.xlu0 %854
        %856 = vrot.lane.b32.xlu0 %v546, 3
        %v857 = vpop.permute.xlu0 %856
        %858 = vrot.lane.b32.xlu0 %v547, 3
        %v859 = vpop.permute.xlu0 %858
        %860 = vrot.lane.b32.xlu0 %v548, 3
        %v861 = vpop.permute.xlu0 %860
        %862 = vrot.lane.b32.xlu0 %v549, 3
        %v863 = vpop.permute.xlu0 %862
        %864 = vrot.lane.b32.xlu0 %v550, 3
        %v865 = vpop.permute.xlu0 %864
        %866 = vrot.lane.b32.xlu0 %v551, 3
        %v867 = vpop.permute.xlu0 %866
        %868 = vrot.lane.b32.xlu0 %v552, 3
        %v869 = vpop.permute.xlu0 %868
        %870 = vrot.lane.b32.xlu0 %v553, 3
        %v871 = vpop.permute.xlu0 %870
        %872 = vrot.lane.b32.xlu0 %v554, 3
        %v873 = vpop.permute.xlu0 %872
        %874 = vrot.lane.b32.xlu0 %v555, 3
        %v875 = vpop.permute.xlu0 %874
        %876 = vrot.lane.b32.xlu0 %v556, 3
        %v877 = vpop.permute.xlu0 %876
        %942 = vrot.lane.b32.xlu0 %v557, 6
        %v943 = vpop.permute.xlu0 %942
        %944 = vrot.lane.b32.xlu0 %v558, 6
        %v945 = vpop.permute.xlu0 %944
        %946 = vrot.lane.b32.xlu0 %v559, 6
        %v947 = vpop.permute.xlu0 %946
        %948 = vrot.lane.b32.xlu0 %v560, 6
        %v949 = vpop.permute.xlu0 %948
        %950 = vrot.lane.b32.xlu0 %v561, 6
        %v951 = vpop.permute.xlu0 %950
        %952 = vrot.lane.b32.xlu0 %v562, 6
        %v953 = vpop.permute.xlu0 %952
        %954 = vrot.lane.b32.xlu0 %v563, 6
        %v955 = vpop.permute.xlu0 %954
        %956 = vrot.lane.b32.xlu0 %v564, 6
        %v957 = vpop.permute.xlu0 %956
        %958 = vrot.lane.b32.xlu0 %v565, 6
        %v959 = vpop.permute.xlu0 %958
        %960 = vrot.lane.b32.xlu0 %v566, 6
        %v961 = vpop.permute.xlu0 %960
        %962 = vrot.lane.b32.xlu0 %v567, 6
        %v963 = vpop.permute.xlu0 %962
        %964 = vrot.lane.b32.xlu0 %v568, 6
        %v965 = vpop.permute.xlu0 %964
        %966 = vrot.lane.b32.xlu0 %v569, 6
        %v967 = vpop.permute.xlu0 %966
        %968 = vrot.lane.b32.xlu0 %v570, 6
        %v969 = vpop.permute.xlu0 %968
        %970 = vrot.lane.b32.xlu0 %v571, 6
        %v971 = vpop.permute.xlu0 %970
        %972 = vrot.lane.b32.xlu0 %v572, 6
        %v973 = vpop.permute.xlu0 %972
        %974 = vrot.lane.b32.xlu0 %v573, 6
        %v975 = vpop.permute.xlu0 %974
        %976 = vrot.lane.b32.xlu0 %v574, 6
        %v977 = vpop.permute.xlu0 %976
        %978 = vrot.lane.b32.xlu0 %v575, 6
        %v979 = vpop.permute.xlu0 %978
        %980 = vrot.lane.b32.xlu0 %v576, 6
        %v981 = vpop.permute.xlu0 %980
        %982 = vrot.lane.b32.xlu0 %v577, 6
        %v983 = vpop.permute.xlu0 %982
        %984 = vrot.lane.b32.xlu0 %v578, 6
        %v985 = vpop.permute.xlu0 %984
        %986 = vrot.lane.b32.xlu0 %v579, 6
        %v987 = vpop.permute.xlu0 %986
        %988 = vrot.lane.b32.xlu0 %v580, 6
        %v989 = vpop.permute.xlu0 %988
        %990 = vrot.lane.b32.xlu0 %v581, 6
        %v991 = vpop.permute.xlu0 %990
        %992 = vrot.lane.b32.xlu0 %v582, 6
        %v993 = vpop.permute.xlu0 %992
        %994 = vrot.lane.b32.xlu0 %v583, 6
        %v995 = vpop.permute.xlu0 %994
        %996 = vrot.lane.b32.xlu0 %v584, 6
        %v997 = vpop.permute.xlu0 %996
        %998 = vrot.lane.b32.xlu0 %v585, 6
        %v999 = vpop.permute.xlu0 %998
        %1000 = vrot.lane.b32.xlu0 %v586, 6
        %v1001 = vpop.permute.xlu0 %1000
        %1002 = vrot.lane.b32.xlu0 %v587, 6
        %v1003 = vpop.permute.xlu0 %1002
        %1004 = vrot.lane.b32.xlu0 %v588, 6
        %v1005 = vpop.permute.xlu0 %1004
        %1070 = vrot.lane.b32.xlu0 %v589, 9
        %v1071 = vpop.permute.xlu0 %1070
        %1072 = vrot.lane.b32.xlu0 %v590, 9
        %v1073 = vpop.permute.xlu0 %1072
        %1074 = vrot.lane.b32.xlu0 %v591, 9
        %v1075 = vpop.permute.xlu0 %1074
        %1076 = vrot.lane.b32.xlu0 %v592, 9
        %v1077 = vpop.permute.xlu0 %1076
        %1078 = vrot.lane.b32.xlu0 %v593, 9
        %v1079 = vpop.permute.xlu0 %1078
        %1080 = vrot.lane.b32.xlu0 %v594, 9
        %v1081 = vpop.permute.xlu0 %1080
        %1082 = vrot.lane.b32.xlu0 %v595, 9
        %v1083 = vpop.permute.xlu0 %1082
        %1084 = vrot.lane.b32.xlu0 %v596, 9
        %v1085 = vpop.permute.xlu0 %1084
        %1086 = vrot.lane.b32.xlu0 %v597, 9
        %v1087 = vpop.permute.xlu0 %1086
        %1088 = vrot.lane.b32.xlu0 %v598, 9
        %v1089 = vpop.permute.xlu0 %1088
        %1090 = vrot.lane.b32.xlu0 %v599, 9
        %v1091 = vpop.permute.xlu0 %1090
        %1092 = vrot.lane.b32.xlu0 %v600, 9
        %v1093 = vpop.permute.xlu0 %1092
        %1094 = vrot.lane.b32.xlu0 %v601, 9
        %v1095 = vpop.permute.xlu0 %1094
        %1096 = vrot.lane.b32.xlu0 %v602, 9
        %v1097 = vpop.permute.xlu0 %1096
        %1098 = vrot.lane.b32.xlu0 %v603, 9
        %v1099 = vpop.permute.xlu0 %1098
        %1100 = vrot.lane.b32.xlu0 %v604, 9
        %v1101 = vpop.permute.xlu0 %1100
        %1102 = vrot.lane.b32.xlu0 %v605, 9
        %v1103 = vpop.permute.xlu0 %1102
        %1104 = vrot.lane.b32.xlu0 %v606, 9
        %v1105 = vpop.permute.xlu0 %1104
        %1106 = vrot.lane.b32.xlu0 %v607, 9
        %v1107 = vpop.permute.xlu0 %1106
        %1108 = vrot.lane.b32.xlu0 %v608, 9
        %v1109 = vpop.permute.xlu0 %1108
        %1110 = vrot.lane.b32.xlu0 %v609, 9
        %v1111 = vpop.permute.xlu0 %1110
        %1112 = vrot.lane.b32.xlu0 %v610, 9
        %v1113 = vpop.permute.xlu0 %1112
        %1114 = vrot.lane.b32.xlu0 %v611, 9
        %v1115 = vpop.permute.xlu0 %1114
        %1116 = vrot.lane.b32.xlu0 %v612, 9
        %v1117 = vpop.permute.xlu0 %1116
        %1118 = vrot.lane.b32.xlu0 %v613, 9
        %v1119 = vpop.permute.xlu0 %1118
        %1120 = vrot.lane.b32.xlu0 %v614, 9
        %v1121 = vpop.permute.xlu0 %1120
        %1122 = vrot.lane.b32.xlu0 %v615, 9
        %v1123 = vpop.permute.xlu0 %1122
        %1124 = vrot.lane.b32.xlu0 %v616, 9
        %v1125 = vpop.permute.xlu0 %1124
        %1126 = vrot.lane.b32.xlu0 %v617, 9
        %v1127 = vpop.permute.xlu0 %1126
        %1128 = vrot.lane.b32.xlu0 %v618, 9
        %v1129 = vpop.permute.xlu0 %1128
        %1130 = vrot.lane.b32.xlu0 %v619, 9
        %v1131 = vpop.permute.xlu0 %1130
        %1132 = vrot.lane.b32.xlu0 %v620, 9
        %v1133 = vpop.permute.xlu0 %1132
        %1198 = vrot.lane.b32.xlu0 %v621, 12
        %v1199 = vpop.permute.xlu0 %1198
        %1200 = vrot.lane.b32.xlu0 %v622, 12
        %v1201 = vpop.permute.xlu0 %1200
        %1202 = vrot.lane.b32.xlu0 %v623, 12
        %v1203 = vpop.permute.xlu0 %1202
        %1204 = vrot.lane.b32.xlu0 %v624, 12
        %v1205 = vpop.permute.xlu0 %1204
        %1206 = vrot.lane.b32.xlu0 %v625, 12
        %v1207 = vpop.permute.xlu0 %1206
        %1208 = vrot.lane.b32.xlu0 %v626, 12
        %v1209 = vpop.permute.xlu0 %1208
        %1210 = vrot.lane.b32.xlu0 %v627, 12
        %v1211 = vpop.permute.xlu0 %1210
        %1212 = vrot.lane.b32.xlu0 %v628, 12
        %v1213 = vpop.permute.xlu0 %1212
        %1214 = vrot.lane.b32.xlu0 %v629, 12
        %v1215 = vpop.permute.xlu0 %1214
        %1216 = vrot.lane.b32.xlu0 %v630, 12
        %v1217 = vpop.permute.xlu0 %1216
        %1218 = vrot.lane.b32.xlu0 %v631, 12
        %v1219 = vpop.permute.xlu0 %1218
        %1220 = vrot.lane.b32.xlu0 %v632, 12
        %v1221 = vpop.permute.xlu0 %1220
        %1222 = vrot.lane.b32.xlu0 %v633, 12
        %v1223 = vpop.permute.xlu0 %1222
        %1224 = vrot.lane.b32.xlu0 %v634, 12
        %v1225 = vpop.permute.xlu0 %1224
        %1226 = vrot.lane.b32.xlu0 %v635, 12
        %v1227 = vpop.permute.xlu0 %1226
        %1228 = vrot.lane.b32.xlu0 %v636, 12
        %v1229 = vpop.permute.xlu0 %1228
        %1230 = vrot.lane.b32.xlu0 %v637, 12
        %v1231 = vpop.permute.xlu0 %1230
        %1232 = vrot.lane.b32.xlu0 %v638, 12
        %v1233 = vpop.permute.xlu0 %1232
        %1234 = vrot.lane.b32.xlu0 %v639, 12
        %v1235 = vpop.permute.xlu0 %1234
        %1236 = vrot.lane.b32.xlu0 %v640, 12
        %v1237 = vpop.permute.xlu0 %1236
        %1238 = vrot.lane.b32.xlu0 %v641, 12
        %v1239 = vpop.permute.xlu0 %1238
        %1240 = vrot.lane.b32.xlu0 %v642, 12
        %v1241 = vpop.permute.xlu0 %1240
        %1242 = vrot.lane.b32.xlu0 %v643, 12
        %v1243 = vpop.permute.xlu0 %1242
        %1244 = vrot.lane.b32.xlu0 %v644, 12
        %v1245 = vpop.permute.xlu0 %1244
        %1246 = vrot.lane.b32.xlu0 %v645, 12
        %v1247 = vpop.permute.xlu0 %1246
        %1248 = vrot.lane.b32.xlu0 %v646, 12
        %v1249 = vpop.permute.xlu0 %1248
        %1250 = vrot.lane.b32.xlu0 %v647, 12
        %v1251 = vpop.permute.xlu0 %1250
        %1252 = vrot.lane.b32.xlu0 %v648, 12
        %v1253 = vpop.permute.xlu0 %1252
        %1254 = vrot.lane.b32.xlu0 %v649, 12
        %v1255 = vpop.permute.xlu0 %1254
        %1256 = vrot.lane.b32.xlu0 %v650, 12
        %v1257 = vpop.permute.xlu0 %1256
        %1258 = vrot.lane.b32.xlu0 %v651, 12
        %v1259 = vpop.permute.xlu0 %1258
        %1260 = vrot.lane.b32.xlu0 %v652, 12
        %v1261 = vpop.permute.xlu0 %1260
        %1326 = vrot.lane.b32.xlu0 %v653, 15
        %v1327 = vpop.permute.xlu0 %1326
        %1328 = vrot.lane.b32.xlu0 %v654, 15
        %v1329 = vpop.permute.xlu0 %1328
        %1330 = vrot.lane.b32.xlu0 %v655, 15
        %v1331 = vpop.permute.xlu0 %1330
        %1332 = vrot.lane.b32.xlu0 %v656, 15
        %v1333 = vpop.permute.xlu0 %1332
        %1334 = vrot.lane.b32.xlu0 %v657, 15
        %v1335 = vpop.permute.xlu0 %1334
        %1336 = vrot.lane.b32.xlu0 %v658, 15
        %v1337 = vpop.permute.xlu0 %1336
        %1338 = vrot.lane.b32.xlu0 %v659, 15
        %v1339 = vpop.permute.xlu0 %1338
        %1340 = vrot.lane.b32.xlu0 %v660, 15
        %v1341 = vpop.permute.xlu0 %1340
        %1342 = vrot.lane.b32.xlu0 %v661, 15
        %v1343 = vpop.permute.xlu0 %1342
        %1344 = vrot.lane.b32.xlu0 %v662, 15
        %v1345 = vpop.permute.xlu0 %1344
        %1346 = vrot.lane.b32.xlu0 %v663, 15
        %v1347 = vpop.permute.xlu0 %1346
        %1348 = vrot.lane.b32.xlu0 %v664, 15
        %v1349 = vpop.permute.xlu0 %1348
        %1350 = vrot.lane.b32.xlu0 %v665, 15
        %v1351 = vpop.permute.xlu0 %1350
        %1352 = vrot.lane.b32.xlu0 %v666, 15
        %v1353 = vpop.permute.xlu0 %1352
        %1354 = vrot.lane.b32.xlu0 %v667, 15
        %v1355 = vpop.permute.xlu0 %1354
        %1356 = vrot.lane.b32.xlu0 %v668, 15
        %v1357 = vpop.permute.xlu0 %1356
        %1358 = vrot.lane.b32.xlu0 %v669, 15
        %v1359 = vpop.permute.xlu0 %1358
        %1360 = vrot.lane.b32.xlu0 %v670, 15
        %v1361 = vpop.permute.xlu0 %1360
        %1362 = vrot.lane.b32.xlu0 %v671, 15
        %v1363 = vpop.permute.xlu0 %1362
        %1364 = vrot.lane.b32.xlu0 %v672, 15
        %v1365 = vpop.permute.xlu0 %1364
        %1366 = vrot.lane.b32.xlu0 %v673, 15
        %v1367 = vpop.permute.xlu0 %1366
        %1368 = vrot.lane.b32.xlu0 %v674, 15
        %v1369 = vpop.permute.xlu0 %1368
        %1370 = vrot.lane.b32.xlu0 %v675, 15
        %v1371 = vpop.permute.xlu0 %1370
        %1372 = vrot.lane.b32.xlu0 %v676, 15
        %v1373 = vpop.permute.xlu0 %1372
        %1374 = vrot.lane.b32.xlu0 %v677, 15
        %v1375 = vpop.permute.xlu0 %1374
        %1376 = vrot.lane.b32.xlu0 %v678, 15
        %v1377 = vpop.permute.xlu0 %1376
        %1378 = vrot.lane.b32.xlu0 %v679, 15
        %v1379 = vpop.permute.xlu0 %1378
        %1380 = vrot.lane.b32.xlu0 %v680, 15
        %v1381 = vpop.permute.xlu0 %1380
        %1382 = vrot.lane.b32.xlu0 %v681, 15
        %v1383 = vpop.permute.xlu0 %1382
        %1384 = vrot.lane.b32.xlu0 %v682, 15
        %v1385 = vpop.permute.xlu0 %1384
        %1386 = vrot.lane.b32.xlu0 %v683, 15
        %v1387 = vpop.permute.xlu0 %1386
        %1388 = vrot.lane.b32.xlu0 %v684, 15
        %v1389 = vpop.permute.xlu0 %1388
        %1454 = vrot.lane.b32.xlu0 %v686, 18
        %v1455 = vpop.permute.xlu0 %1454
        %1456 = vrot.lane.b32.xlu0 %v687, 18
        %v1457 = vpop.permute.xlu0 %1456
        %1458 = vrot.lane.b32.xlu0 %v688, 18
        %v1459 = vpop.permute.xlu0 %1458
        %1460 = vrot.lane.b32.xlu0 %v689, 18
        %v1461 = vpop.permute.xlu0 %1460
        %1462 = vrot.lane.b32.xlu0 %v690, 18
        %v1463 = vpop.permute.xlu0 %1462
        %1464 = vrot.lane.b32.xlu0 %v691, 18
        %v1465 = vpop.permute.xlu0 %1464
        %1466 = vrot.lane.b32.xlu0 %v692, 18
        %v1467 = vpop.permute.xlu0 %1466
        %1468 = vrot.lane.b32.xlu0 %v693, 18
        %v1469 = vpop.permute.xlu0 %1468
        %1470 = vrot.lane.b32.xlu0 %v694, 18
        %v1471 = vpop.permute.xlu0 %1470
        %1472 = vrot.lane.b32.xlu0 %v695, 18
        %v1473 = vpop.permute.xlu0 %1472
        %1474 = vrot.lane.b32.xlu0 %v696, 18
        %v1475 = vpop.permute.xlu0 %1474
        %1476 = vrot.lane.b32.xlu0 %v697, 18
        %v1477 = vpop.permute.xlu0 %1476
        %1478 = vrot.lane.b32.xlu0 %v698, 18
        %v1479 = vpop.permute.xlu0 %1478
        %1480 = vrot.lane.b32.xlu0 %v699, 18
        %v1481 = vpop.permute.xlu0 %1480
        %1482 = vrot.lane.b32.xlu0 %v700, 18
        %v1483 = vpop.permute.xlu0 %1482
        %1484 = vrot.lane.b32.xlu0 %v701, 18
        %v1485 = vpop.permute.xlu0 %1484
        %1486 = vrot.lane.b32.xlu0 %v702, 18
        %v1487 = vpop.permute.xlu0 %1486
        %1488 = vrot.lane.b32.xlu0 %v703, 18
        %v1489 = vpop.permute.xlu0 %1488
        %1490 = vrot.lane.b32.xlu0 %v704, 18
        %v1491 = vpop.permute.xlu0 %1490
        %1492 = vrot.lane.b32.xlu0 %v705, 18
        %v1493 = vpop.permute.xlu0 %1492
        %1494 = vrot.lane.b32.xlu0 %v706, 18
        %v1495 = vpop.permute.xlu0 %1494
        %1496 = vrot.lane.b32.xlu0 %v707, 18
        %v1497 = vpop.permute.xlu0 %1496
        %1498 = vrot.lane.b32.xlu0 %v708, 18
        %v1499 = vpop.permute.xlu0 %1498
        %1500 = vrot.lane.b32.xlu0 %v709, 18
        %v1501 = vpop.permute.xlu0 %1500
        %1502 = vrot.lane.b32.xlu0 %v710, 18
        %v1503 = vpop.permute.xlu0 %1502
        %1504 = vrot.lane.b32.xlu0 %v711, 18
        %v1505 = vpop.permute.xlu0 %1504
        %1506 = vrot.lane.b32.xlu0 %v712, 18
        %v1507 = vpop.permute.xlu0 %1506
        %1508 = vrot.lane.b32.xlu0 %v713, 18
        %v1509 = vpop.permute.xlu0 %1508
        %1510 = vrot.lane.b32.xlu0 %v714, 18
        %v1511 = vpop.permute.xlu0 %1510
        %1512 = vrot.lane.b32.xlu0 %v715, 18
        %v1513 = vpop.permute.xlu0 %1512
        %1514 = vrot.lane.b32.xlu0 %v716, 18
        %v1515 = vpop.permute.xlu0 %1514
        %1516 = vrot.lane.b32.xlu0 %v717, 18
        %v1517 = vpop.permute.xlu0 %1516
        %1582 = vrot.lane.b32.xlu0 %v718, 21
        %v1583 = vpop.permute.xlu0 %1582
        %1584 = vrot.lane.b32.xlu0 %v719, 21
        %v1585 = vpop.permute.xlu0 %1584
        %1586 = vrot.lane.b32.xlu0 %v720, 21
        %v1587 = vpop.permute.xlu0 %1586
        %1588 = vrot.lane.b32.xlu0 %v721, 21
        %v1589 = vpop.permute.xlu0 %1588
        %1590 = vrot.lane.b32.xlu0 %v722, 21
        %v1591 = vpop.permute.xlu0 %1590
        %1592 = vrot.lane.b32.xlu0 %v723, 21
        %v1593 = vpop.permute.xlu0 %1592
        %1594 = vrot.lane.b32.xlu0 %v724, 21
        %v1595 = vpop.permute.xlu0 %1594
        %1596 = vrot.lane.b32.xlu0 %v725, 21
        %v1597 = vpop.permute.xlu0 %1596
        %1598 = vrot.lane.b32.xlu0 %v726, 21
        %v1599 = vpop.permute.xlu0 %1598
        %1600 = vrot.lane.b32.xlu0 %v727, 21
        %v1601 = vpop.permute.xlu0 %1600
        %1602 = vrot.lane.b32.xlu0 %v728, 21
        %v1603 = vpop.permute.xlu0 %1602
        %1604 = vrot.lane.b32.xlu0 %v729, 21
        %v1605 = vpop.permute.xlu0 %1604
        %1606 = vrot.lane.b32.xlu0 %v730, 21
        %v1607 = vpop.permute.xlu0 %1606
        %1608 = vrot.lane.b32.xlu0 %v731, 21
        %v1609 = vpop.permute.xlu0 %1608
        %1610 = vrot.lane.b32.xlu0 %v732, 21
        %v1611 = vpop.permute.xlu0 %1610
        %1612 = vrot.lane.b32.xlu0 %v733, 21
        %v1613 = vpop.permute.xlu0 %1612
        %1614 = vrot.lane.b32.xlu0 %v734, 21
        %v1615 = vpop.permute.xlu0 %1614
        %1616 = vrot.lane.b32.xlu0 %v735, 21
        %v1617 = vpop.permute.xlu0 %1616
        %1618 = vrot.lane.b32.xlu0 %v736, 21
        %v1619 = vpop.permute.xlu0 %1618
        %1620 = vrot.lane.b32.xlu0 %v737, 21
        %v1621 = vpop.permute.xlu0 %1620
        %1622 = vrot.lane.b32.xlu0 %v738, 21
        %v1623 = vpop.permute.xlu0 %1622
        %1624 = vrot.lane.b32.xlu0 %v739, 21
        %v1625 = vpop.permute.xlu0 %1624
        %1626 = vrot.lane.b32.xlu0 %v740, 21
        %v1627 = vpop.permute.xlu0 %1626
        %1628 = vrot.lane.b32.xlu0 %v741, 21
        %v1629 = vpop.permute.xlu0 %1628
        %1630 = vrot.lane.b32.xlu0 %v742, 21
        %v1631 = vpop.permute.xlu0 %1630
        %1632 = vrot.lane.b32.xlu0 %v743, 21
        %v1633 = vpop.permute.xlu0 %1632
        %1634 = vrot.lane.b32.xlu0 %v744, 21
        %v1635 = vpop.permute.xlu0 %1634
        %1636 = vrot.lane.b32.xlu0 %v745, 21
        %v1637 = vpop.permute.xlu0 %1636
        %1638 = vrot.lane.b32.xlu0 %v746, 21
        %v1639 = vpop.permute.xlu0 %1638
        %1640 = vrot.lane.b32.xlu0 %v747, 21
        %v1641 = vpop.permute.xlu0 %1640
        %1642 = vrot.lane.b32.xlu0 %v748, 21
        %v1643 = vpop.permute.xlu0 %1642
        %1644 = vrot.lane.b32.xlu0 %v749, 21
        %v1645 = vpop.permute.xlu0 %1644
        %1710 = vrot.lane.b32.xlu0 %v750, 24
        %v1711 = vpop.permute.xlu0 %1710
        %1712 = vrot.lane.b32.xlu0 %v751, 24
        %v1713 = vpop.permute.xlu0 %1712
        %1714 = vrot.lane.b32.xlu0 %v752, 24
        %v1715 = vpop.permute.xlu0 %1714
        %1716 = vrot.lane.b32.xlu0 %v753, 24
        %v1717 = vpop.permute.xlu0 %1716
        %1718 = vrot.lane.b32.xlu0 %v754, 24
        %v1719 = vpop.permute.xlu0 %1718
        %1720 = vrot.lane.b32.xlu0 %v755, 24
        %v1721 = vpop.permute.xlu0 %1720
        %1722 = vrot.lane.b32.xlu0 %v756, 24
        %v1723 = vpop.permute.xlu0 %1722
        %1724 = vrot.lane.b32.xlu0 %v757, 24
        %v1725 = vpop.permute.xlu0 %1724
        %1726 = vrot.lane.b32.xlu0 %v758, 24
        %v1727 = vpop.permute.xlu0 %1726
        %1728 = vrot.lane.b32.xlu0 %v759, 24
        %v1729 = vpop.permute.xlu0 %1728
        %1730 = vrot.lane.b32.xlu0 %v760, 24
        %v1731 = vpop.permute.xlu0 %1730
        %1732 = vrot.lane.b32.xlu0 %v761, 24
        %v1733 = vpop.permute.xlu0 %1732
        %1734 = vrot.lane.b32.xlu0 %v762, 24
        %v1735 = vpop.permute.xlu0 %1734
        %1736 = vrot.lane.b32.xlu0 %v763, 24
        %v1737 = vpop.permute.xlu0 %1736
        %1738 = vrot.lane.b32.xlu0 %v764, 24
        %v1739 = vpop.permute.xlu0 %1738
        %1740 = vrot.lane.b32.xlu0 %v765, 24
        %v1741 = vpop.permute.xlu0 %1740
        %1742 = vrot.lane.b32.xlu0 %v766, 24
        %v1743 = vpop.permute.xlu0 %1742
        %1744 = vrot.lane.b32.xlu0 %v767, 24
        %v1745 = vpop.permute.xlu0 %1744
        %1746 = vrot.lane.b32.xlu0 %v768, 24
        %v1747 = vpop.permute.xlu0 %1746
        %1748 = vrot.lane.b32.xlu0 %v769, 24
        %v1749 = vpop.permute.xlu0 %1748
        %1750 = vrot.lane.b32.xlu0 %v770, 24
        %v1751 = vpop.permute.xlu0 %1750
        %1752 = vrot.lane.b32.xlu0 %v771, 24
        %v1753 = vpop.permute.xlu0 %1752
        %1754 = vrot.lane.b32.xlu0 %v772, 24
        %v1755 = vpop.permute.xlu0 %1754
        %1756 = vrot.lane.b32.xlu0 %v773, 24
        %v1757 = vpop.permute.xlu0 %1756
        %1758 = vrot.lane.b32.xlu0 %v774, 24
        %v1759 = vpop.permute.xlu0 %1758
        %1760 = vrot.lane.b32.xlu0 %v775, 24
        %v1761 = vpop.permute.xlu0 %1760
        %1762 = vrot.lane.b32.xlu0 %v776, 24
        %v1763 = vpop.permute.xlu0 %1762
        %1764 = vrot.lane.b32.xlu0 %v777, 24
        %v1765 = vpop.permute.xlu0 %1764
        %1766 = vrot.lane.b32.xlu0 %v778, 24
        %v1767 = vpop.permute.xlu0 %1766
        %1768 = vrot.lane.b32.xlu0 %v779, 24
        %v1769 = vpop.permute.xlu0 %1768
        %1770 = vrot.lane.b32.xlu0 %v780, 24
        %v1771 = vpop.permute.xlu0 %1770
        %1772 = vrot.lane.b32.xlu0 %v781, 24
        %v1773 = vpop.permute.xlu0 %1772
        %v1806 = vsel %vm316, %v493, %v815
        %v1807 = vsel %vm316, %v494, %v817
        %v1808 = vsel %vm316, %v495, %v819
        %v1809 = vsel %vm316, %v496, %v821
        %v1810 = vsel %vm316, %v497, %v823
        %v1811 = vsel %vm316, %v498, %v825
        %v1812 = vsel %vm316, %v499, %v827
        %v1813 = vsel %vm316, %v500, %v829
        %v1814 = vsel %vm316, %v501, %v831
        %v1815 = vsel %vm316, %v502, %v833
        %v1816 = vsel %vm316, %v503, %v835
        %v1817 = vsel %vm316, %v504, %v837
        %v1818 = vsel %vm316, %v505, %v839
        %v1819 = vsel %vm316, %v506, %v841
        %v1820 = vsel %vm316, %v507, %v843
        %v1821 = vsel %vm316, %v508, %v845
        %v1822 = vsel %vm316, %v509, %v847
        %v1823 = vsel %vm316, %v510, %v849
        %v1824 = vsel %vm316, %v511, %v851
        %v1825 = vsel %vm316, %v512, %v853
        %v1826 = vsel %vm316, %v513, %v855
        %v1827 = vsel %vm316, %v514, %v857
        %v1828 = vsel %vm316, %v515, %v859
        %v1829 = vsel %vm316, %v516, %v861
        %v1830 = vsel %vm316, %v517, %v863
        %v1831 = vsel %vm316, %v518, %v865
        %v1832 = vsel %vm316, %v519, %v867
        %v1833 = vsel %vm316, %v520, %v869
        %v1834 = vsel %vm316, %v521, %v871
        %v1835 = vsel %vm316, %v522, %v873
        %v1836 = vsel %vm316, %v523, %v875
        %v1837 = vsel %vm316, %v524, %v877
        %vm1838 = vcmask 48128
        %v1839 = vsel %vm1838, %v1806, %v943
        %v1840 = vsel %vm1838, %v1807, %v945
        %v1841 = vsel %vm1838, %v1808, %v947
        %v1842 = vsel %vm1838, %v1809, %v949
        %v1843 = vsel %vm1838, %v1810, %v951
        %v1844 = vsel %vm1838, %v1811, %v953
        %v1845 = vsel %vm1838, %v1812, %v955
        %v1846 = vsel %vm1838, %v1813, %v957
        %v1847 = vsel %vm1838, %v1814, %v959
        %v1848 = vsel %vm1838, %v1815, %v961
        %v1849 = vsel %vm1838, %v1816, %v963
        %v1850 = vsel %vm1838, %v1817, %v965
        %v1851 = vsel %vm1838, %v1818, %v967
        %v1852 = vsel %vm1838, %v1819, %v969
        %v1853 = vsel %vm1838, %v1820, %v971
        %v1854 = vsel %vm1838, %v1821, %v973
        %v1855 = vsel %vm1838, %v1822, %v975
        %v1856 = vsel %vm1838, %v1823, %v977
        %v1857 = vsel %vm1838, %v1824, %v979
        %v1858 = vsel %vm1838, %v1825, %v981
        %v1859 = vsel %vm1838, %v1826, %v983
        %v1860 = vsel %vm1838, %v1827, %v985
        %v1861 = vsel %vm1838, %v1828, %v987
        %v1862 = vsel %vm1838, %v1829, %v989
        %v1863 = vsel %vm1838, %v1830, %v991
        %v1864 = vsel %vm1838, %v1831, %v993
        %v1865 = vsel %vm1838, %v1832, %v995
        %v1866 = vsel %vm1838, %v1833, %v997
        %v1867 = vsel %vm1838, %v1834, %v999
        %v1868 = vsel %vm1838, %v1835, %v1001
        %v1869 = vsel %vm1838, %v1836, %v1003
        %v1870 = vsel %vm1838, %v1837, %v1005
        %vm1871 = vcmask 72704
        %v1872 = vsel %vm1871, %v1839, %v1071
        %v1873 = vsel %vm1871, %v1840, %v1073
        %v1874 = vsel %vm1871, %v1841, %v1075
        %v1875 = vsel %vm1871, %v1842, %v1077
        %v1876 = vsel %vm1871, %v1843, %v1079
        %v1877 = vsel %vm1871, %v1844, %v1081
        %v1878 = vsel %vm1871, %v1845, %v1083
        %v1879 = vsel %vm1871, %v1846, %v1085
        %v1880 = vsel %vm1871, %v1847, %v1087
        %v1881 = vsel %vm1871, %v1848, %v1089
        %v1882 = vsel %vm1871, %v1849, %v1091
        %v1883 = vsel %vm1871, %v1850, %v1093
        %v1884 = vsel %vm1871, %v1851, %v1095
        %v1885 = vsel %vm1871, %v1852, %v1097
        %v1886 = vsel %vm1871, %v1853, %v1099
        %v1887 = vsel %vm1871, %v1854, %v1101
        %v1888 = vsel %vm1871, %v1855, %v1103
        %v1889 = vsel %vm1871, %v1856, %v1105
        %v1890 = vsel %vm1871, %v1857, %v1107
        %v1891 = vsel %vm1871, %v1858, %v1109
        %v1892 = vsel %vm1871, %v1859, %v1111
        %v1893 = vsel %vm1871, %v1860, %v1113
        %v1894 = vsel %vm1871, %v1861, %v1115
        %v1895 = vsel %vm1871, %v1862, %v1117
        %v1896 = vsel %vm1871, %v1863, %v1119
        %v1897 = vsel %vm1871, %v1864, %v1121
        %v1898 = vsel %vm1871, %v1865, %v1123
        %v1899 = vsel %vm1871, %v1866, %v1125
        %v1900 = vsel %vm1871, %v1867, %v1127
        %v1901 = vsel %vm1871, %v1868, %v1129
        %v1902 = vsel %vm1871, %v1869, %v1131
        %v1903 = vsel %vm1871, %v1870, %v1133
        %vm1904 = vcmask 97280
        %v1905 = vsel %vm1904, %v1872, %v1199
        %v1906 = vsel %vm1904, %v1873, %v1201
        %v1907 = vsel %vm1904, %v1874, %v1203
        %v1908 = vsel %vm1904, %v1875, %v1205
        %v1909 = vsel %vm1904, %v1876, %v1207
        %v1910 = vsel %vm1904, %v1877, %v1209
        %v1911 = vsel %vm1904, %v1878, %v1211
        %v1912 = vsel %vm1904, %v1879, %v1213
        %v1913 = vsel %vm1904, %v1880, %v1215
        %v1914 = vsel %vm1904, %v1881, %v1217
        %v1915 = vsel %vm1904, %v1882, %v1219
        %v1916 = vsel %vm1904, %v1883, %v1221
        %v1917 = vsel %vm1904, %v1884, %v1223
        %v1918 = vsel %vm1904, %v1885, %v1225
        %v1919 = vsel %vm1904, %v1886, %v1227
        %v1920 = vsel %vm1904, %v1887, %v1229
        %v1921 = vsel %vm1904, %v1888, %v1231
        %v1922 = vsel %vm1904, %v1889, %v1233
        %v1923 = vsel %vm1904, %v1890, %v1235
        %v1924 = vsel %vm1904, %v1891, %v1237
        %v1925 = vsel %vm1904, %v1892, %v1239
        %v1926 = vsel %vm1904, %v1893, %v1241
        %v1927 = vsel %vm1904, %v1894, %v1243
        %v1928 = vsel %vm1904, %v1895, %v1245
        %v1929 = vsel %vm1904, %v1896, %v1247
        %v1930 = vsel %vm1904, %v1897, %v1249
        %v1931 = vsel %vm1904, %v1898, %v1251
        %v1932 = vsel %vm1904, %v1899, %v1253
        %v1933 = vsel %vm1904, %v1900, %v1255
        %v1934 = vsel %vm1904, %v1901, %v1257
        %v1935 = vsel %vm1904, %v1902, %v1259
        %v1936 = vsel %vm1904, %v1903, %v1261
        %vm1937 = vcmask 121856
        %v1938 = vsel %vm1937, %v1905, %v1327
        %v1939 = vsel %vm1937, %v1906, %v1329
        %v1940 = vsel %vm1937, %v1907, %v1331
        %v1941 = vsel %vm1937, %v1908, %v1333
        %v1942 = vsel %vm1937, %v1909, %v1335
        %v1943 = vsel %vm1937, %v1910, %v1337
        %v1944 = vsel %vm1937, %v1911, %v1339
        %v1945 = vsel %vm1937, %v1912, %v1341
        %v1946 = vsel %vm1937, %v1913, %v1343
        %v1947 = vsel %vm1937, %v1914, %v1345
        %v1948 = vsel %vm1937, %v1915, %v1347
        %v1949 = vsel %vm1937, %v1916, %v1349
        %v1950 = vsel %vm1937, %v1917, %v1351
        %v1951 = vsel %vm1937, %v1918, %v1353
        %v1952 = vsel %vm1937, %v1919, %v1355
        %v1953 = vsel %vm1937, %v1920, %v1357
        %v1954 = vsel %vm1937, %v1921, %v1359
        %v1955 = vsel %vm1937, %v1922, %v1361
        %v1956 = vsel %vm1937, %v1923, %v1363
        %v1957 = vsel %vm1937, %v1924, %v1365
        %v1958 = vsel %vm1937, %v1925, %v1367
        %v1959 = vsel %vm1937, %v1926, %v1369
        %v1960 = vsel %vm1937, %v1927, %v1371
        %v1961 = vsel %vm1937, %v1928, %v1373
        %v1962 = vsel %vm1937, %v1929, %v1375
        %v1963 = vsel %vm1937, %v1930, %v1377
        %v1964 = vsel %vm1937, %v1931, %v1379
        %v1965 = vsel %vm1937, %v1932, %v1381
        %v1966 = vsel %vm1937, %v1933, %v1383
        %v1967 = vsel %vm1937, %v1934, %v1385
        %v1968 = vsel %vm1937, %v1935, %v1387
        %v1969 = vsel %vm1937, %v1936, %v1389
        %vm1970 = vcmask 146432
        %v1971 = vsel %vm1970, %v1938, %v1455
        %v1972 = vsel %vm1970, %v1939, %v1457
        %v1973 = vsel %vm1970, %v1940, %v1459
        %v1974 = vsel %vm1970, %v1941, %v1461
        %v1975 = vsel %vm1970, %v1942, %v1463
        %v1976 = vsel %vm1970, %v1943, %v1465
        %v1977 = vsel %vm1970, %v1944, %v1467
        %v1978 = vsel %vm1970, %v1945, %v1469
        %v1979 = vsel %vm1970, %v1946, %v1471
        %v1980 = vsel %vm1970, %v1947, %v1473
        %v1981 = vsel %vm1970, %v1948, %v1475
        %v1982 = vsel %vm1970, %v1949, %v1477
        %v1983 = vsel %vm1970, %v1950, %v1479
        %v1984 = vsel %vm1970, %v1951, %v1481
        %v1985 = vsel %vm1970, %v1952, %v1483
        %v1986 = vsel %vm1970, %v1953, %v1485
        %v1987 = vsel %vm1970, %v1954, %v1487
        %v1988 = vsel %vm1970, %v1955, %v1489
        %v1989 = vsel %vm1970, %v1956, %v1491
        %v1990 = vsel %vm1970, %v1957, %v1493
        %v1991 = vsel %vm1970, %v1958, %v1495
        %v1992 = vsel %vm1970, %v1959, %v1497
        %v1993 = vsel %vm1970, %v1960, %v1499
        %v1994 = vsel %vm1970, %v1961, %v1501
        %v1995 = vsel %vm1970, %v1962, %v1503
        %v1996 = vsel %vm1970, %v1963, %v1505
        %v1997 = vsel %vm1970, %v1964, %v1507
        %v1998 = vsel %vm1970, %v1965, %v1509
        %v1999 = vsel %vm1970, %v1966, %v1511
        %v2000 = vsel %vm1970, %v1967, %v1513
        %v2001 = vsel %vm1970, %v1968, %v1515
        %v2002 = vsel %vm1970, %v1969, %v1517
        %vm2003 = vcmask 171008
        %v2004 = vsel %vm2003, %v1971, %v1583
        %v2005 = vsel %vm2003, %v1972, %v1585
        %v2006 = vsel %vm2003, %v1973, %v1587
        %v2007 = vsel %vm2003, %v1974, %v1589
        %v2008 = vsel %vm2003, %v1975, %v1591
        %v2009 = vsel %vm2003, %v1976, %v1593
        %v2010 = vsel %vm2003, %v1977, %v1595
        %v2011 = vsel %vm2003, %v1978, %v1597
        %v2012 = vsel %vm2003, %v1979, %v1599
        %v2013 = vsel %vm2003, %v1980, %v1601
        %v2014 = vsel %vm2003, %v1981, %v1603
        %v2015 = vsel %vm2003, %v1982, %v1605
        %v2016 = vsel %vm2003, %v1983, %v1607
        %v2017 = vsel %vm2003, %v1984, %v1609
        %v2018 = vsel %vm2003, %v1985, %v1611
        %v2019 = vsel %vm2003, %v1986, %v1613
        %v2020 = vsel %vm2003, %v1987, %v1615
        %v2021 = vsel %vm2003, %v1988, %v1617
        %v2022 = vsel %vm2003, %v1989, %v1619
        %v2023 = vsel %vm2003, %v1990, %v1621
        %v2024 = vsel %vm2003, %v1991, %v1623
        %v2025 = vsel %vm2003, %v1992, %v1625
        %v2026 = vsel %vm2003, %v1993, %v1627
        %v2027 = vsel %vm2003, %v1994, %v1629
        %v2028 = vsel %vm2003, %v1995, %v1631
        %v2029 = vsel %vm2003, %v1996, %v1633
        %v2030 = vsel %vm2003, %v1997, %v1635
        %v2031 = vsel %vm2003, %v1998, %v1637
        %v2032 = vsel %vm2003, %v1999, %v1639
        %v2033 = vsel %vm2003, %v2000, %v1641
        %v2034 = vsel %vm2003, %v2001, %v1643
        %v2035 = vsel %vm2003, %v2002, %v1645
        %vm2036 = vcmask 195584
        %v2037 = vsel %vm2036, %v2004, %v1711
        %v2038 = vsel %vm2036, %v2005, %v1713
        %v2039 = vsel %vm2036, %v2006, %v1715
        %v2040 = vsel %vm2036, %v2007, %v1717
        %v2041 = vsel %vm2036, %v2008, %v1719
        %v2042 = vsel %vm2036, %v2009, %v1721
        %v2043 = vsel %vm2036, %v2010, %v1723
        %v2044 = vsel %vm2036, %v2011, %v1725
        %v2045 = vsel %vm2036, %v2012, %v1727
        %v2046 = vsel %vm2036, %v2013, %v1729
        %v2047 = vsel %vm2036, %v2014, %v1731
        %v2048 = vsel %vm2036, %v2015, %v1733
        %v2049 = vsel %vm2036, %v2016, %v1735
        %v2050 = vsel %vm2036, %v2017, %v1737
        %v2051 = vsel %vm2036, %v2018, %v1739
        %v2052 = vsel %vm2036, %v2019, %v1741
        %v2053 = vsel %vm2036, %v2020, %v1743
        %v2054 = vsel %vm2036, %v2021, %v1745
        %v2055 = vsel %vm2036, %v2022, %v1747
        %v2056 = vsel %vm2036, %v2023, %v1749
        %v2057 = vsel %vm2036, %v2024, %v1751
        %v2058 = vsel %vm2036, %v2025, %v1753
        %v2059 = vsel %vm2036, %v2026, %v1755
        %v2060 = vsel %vm2036, %v2027, %v1757
        %v2061 = vsel %vm2036, %v2028, %v1759
        %v2062 = vsel %vm2036, %v2029, %v1761
        %v2063 = vsel %vm2036, %v2030, %v1763
        %v2064 = vsel %vm2036, %v2031, %v1765
        %v2065 = vsel %vm2036, %v2032, %v1767
        %v2066 = vsel %vm2036, %v2033, %v1769
        %v2067 = vsel %vm2036, %v2034, %v1771
        %v2068 = vsel %vm2036, %v2035, %v1773
        %v2069 = vpack.c.bf16 %v2038, %v2037
        %v2070 = vpack.c.bf16 %v2040, %v2039
        %v2071 = vpack.c.bf16 %v2042, %v2041
        %v2072 = vpack.c.bf16 %v2044, %v2043
        %v2073 = vpack.c.bf16 %v2046, %v2045
        %v2074 = vpack.c.bf16 %v2048, %v2047
        %v2075 = vpack.c.bf16 %v2050, %v2049
        %v2076 = vpack.c.bf16 %v2052, %v2051
        %v2077 = vpack.c.bf16 %v2054, %v2053
        %v2078 = vpack.c.bf16 %v2056, %v2055
        %v2079 = vpack.c.bf16 %v2058, %v2057
        %v2080 = vpack.c.bf16 %v2060, %v2059
        %v2081 = vpack.c.bf16 %v2062, %v2061
        %v2082 = vpack.c.bf16 %v2064, %v2063
        %v2083 = vpack.c.bf16 %v2066, %v2065
        %v2084 = vpack.c.bf16 %v2068, %v2067
        %v2085 = vld [vmem:[%s1] sm:$0xf]
        %v2086 = vld [vmem:[%s1 + $0x4] sm:$0xf]
        %v2087 = vld [vmem:[%s1 + $0x8] sm:$0xf]
        %v2088 = vld [vmem:[%s1 + $0xc] sm:$0x3]
        %v2089 = vld [vmem:[%s2] sm:$0x1]
        %v2091 = vperm.slane %v2089, 0
        %v2097 = vunpack.c.l.b16 %v2085
        %v2098 = vunpack.c.l.b16 %v2086
        %v2099 = vunpack.c.l.b16 %v2087
        %v2100 = vunpack.c.l.b16 %v2088
        %v2101 = vpack.c.b16 %v2098, %v2097
        %v2102 = vpack.c.b16 %v2100, %v2099
        %vm2104 = vcmask 220160
        %v2106 = vsel %vm2104, %v2069, 0
        %v2109 = vsel %vm2104, %v2070, 0
        %v2112 = vsel %vm2104, %v2071, 0
        %v2115 = vsel %vm2104, %v2072, 0
        %v2118 = vsel %vm2104, %v2073, 0
        %v2121 = vsel %vm2104, %v2074, 0
        %v2124 = vsel %vm2104, %v2075, 0
        %v2127 = vsel %vm2104, %v2076, 0
        %v2130 = vsel %vm2104, %v2077, 0
        %v2133 = vsel %vm2104, %v2078, 0
        %v2136 = vsel %vm2104, %v2079, 0
        %v2139 = vsel %vm2104, %v2080, 0
        %v2142 = vsel %vm2104, %v2081, 0
        %v2145 = vsel %vm2104, %v2082, 0
        %v2148 = vsel %vm2104, %v2083, 0
        %v2151 = vsel %vm2104, %v2084, 0
        %vm2153 = vcmask 1044480
        %vm2154 = vcmask 1045504
        %v2155 = vsel %vm2153, 4294967295, 65535
        %v2156 = vsel %vm2154, %v2155, 0
        %v2158 = vand.u32 %v2102, %v2156
        %2160 = vmatpush.bf16.msra.mxu0 0
        %2161 = vmatpush.bf16.msra.mxu0 0
        %2162 = vmatpush.bf16.msra.mxu0 0
        %2163 = vmatpush.bf16.msra.mxu0 0
        %2164 = vmatpush.bf16.msra.mxu0 0
        %2165 = vmatpush.bf16.msra.mxu0 0
        %2166 = vmatpush.bf16.msra.mxu0 %v2158
        %2167 = vmatpush.bf16.msra.mxu0 %v2101
        %2168 = vmatmul.bf16.gmra.mxu0 %v2106
        %v2169 = vpop.f32.mrf.mxu0
        %v2170 = vadd.f32 %v2091, %v2169
        %v2171 = vpop.f32.mrf.mxu0
        %v2172 = vadd.f32 %v2091, %v2171
        %2173 = vmatmul.bf16.gmra.mxu0 %v2109
        %v2174 = vpop.f32.mrf.mxu0
        %v2175 = vadd.f32 %v2091, %v2174
        %v2176 = vpop.f32.mrf.mxu0
        %v2177 = vadd.f32 %v2091, %v2176
        %2178 = vmatmul.bf16.gmra.mxu0 %v2112
        %v2179 = vpop.f32.mrf.mxu0
        %v2180 = vadd.f32 %v2091, %v2179
        %v2181 = vpop.f32.mrf.mxu0
        %v2182 = vadd.f32 %v2091, %v2181
        %2183 = vmatmul.bf16.gmra.mxu0 %v2115
        %v2184 = vpop.f32.mrf.mxu0
        %v2185 = vadd.f32 %v2091, %v2184
        %v2186 = vpop.f32.mrf.mxu0
        %v2187 = vadd.f32 %v2091, %v2186
        %2188 = vmatmul.bf16.gmra.mxu0 %v2118
        %v2189 = vpop.f32.mrf.mxu0
        %v2190 = vadd.f32 %v2091, %v2189
        %v2191 = vpop.f32.mrf.mxu0
        %v2192 = vadd.f32 %v2091, %v2191
        %2193 = vmatmul.bf16.gmra.mxu0 %v2121
        %v2194 = vpop.f32.mrf.mxu0
        %v2195 = vadd.f32 %v2091, %v2194
        %v2196 = vpop.f32.mrf.mxu0
        %v2197 = vadd.f32 %v2091, %v2196
        %2198 = vmatmul.bf16.gmra.mxu0 %v2124
        %v2199 = vpop.f32.mrf.mxu0
        %v2200 = vadd.f32 %v2091, %v2199
        %v2201 = vpop.f32.mrf.mxu0
        %v2202 = vadd.f32 %v2091, %v2201
        %2203 = vmatmul.bf16.gmra.mxu0 %v2127
        %v2204 = vpop.f32.mrf.mxu0
        %v2205 = vadd.f32 %v2091, %v2204
        %v2206 = vpop.f32.mrf.mxu0
        %v2207 = vadd.f32 %v2091, %v2206
        %2208 = vmatmul.bf16.gmra.mxu0 %v2130
        %v2209 = vpop.f32.mrf.mxu0
        %v2210 = vadd.f32 %v2091, %v2209
        %v2211 = vpop.f32.mrf.mxu0
        %v2212 = vadd.f32 %v2091, %v2211
        %2213 = vmatmul.bf16.gmra.mxu0 %v2133
        %v2214 = vpop.f32.mrf.mxu0
        %v2215 = vadd.f32 %v2091, %v2214
        %v2216 = vpop.f32.mrf.mxu0
        %v2217 = vadd.f32 %v2091, %v2216
        %2218 = vmatmul.bf16.gmra.mxu0 %v2136
        %v2219 = vpop.f32.mrf.mxu0
        %v2220 = vadd.f32 %v2091, %v2219
        %v2221 = vpop.f32.mrf.mxu0
        %v2222 = vadd.f32 %v2091, %v2221
        %2223 = vmatmul.bf16.gmra.mxu0 %v2139
        %v2224 = vpop.f32.mrf.mxu0
        %v2225 = vadd.f32 %v2091, %v2224
        %v2226 = vpop.f32.mrf.mxu0
        %v2227 = vadd.f32 %v2091, %v2226
        %2228 = vmatmul.bf16.gmra.mxu0 %v2142
        %v2229 = vpop.f32.mrf.mxu0
        %v2230 = vadd.f32 %v2091, %v2229
        %v2231 = vpop.f32.mrf.mxu0
        %v2232 = vadd.f32 %v2091, %v2231
        %2233 = vmatmul.bf16.gmra.mxu0 %v2145
        %v2234 = vpop.f32.mrf.mxu0
        %v2235 = vadd.f32 %v2091, %v2234
        %v2236 = vpop.f32.mrf.mxu0
        %v2237 = vadd.f32 %v2091, %v2236
        %2238 = vmatmul.bf16.gmra.mxu0 %v2148
        %v2239 = vpop.f32.mrf.mxu0
        %v2240 = vadd.f32 %v2091, %v2239
        %v2241 = vpop.f32.mrf.mxu0
        %v2242 = vadd.f32 %v2091, %v2241
        %2243 = vmatmul.bf16.gmra.mxu0 %v2151
        %v2244 = vpop.f32.mrf.mxu0
        %v2245 = vadd.f32 %v2091, %v2244
        %v2246 = vpop.f32.mrf.mxu0
        %v2247 = vadd.f32 %v2091, %v2246
        %2248 = vdwg.mxu0
        %v2249 = vmax.f32 %v2170, 0.0
        %v2250 = vmax.f32 %v2172, 0.0
        %v2251 = vmax.f32 %v2175, 0.0
        %v2252 = vmax.f32 %v2177, 0.0
        %v2253 = vmax.f32 %v2180, 0.0
        %v2254 = vmax.f32 %v2182, 0.0
        %v2255 = vmax.f32 %v2185, 0.0
        %v2256 = vmax.f32 %v2187, 0.0
        %v2257 = vmax.f32 %v2190, 0.0
        %v2258 = vmax.f32 %v2192, 0.0
        %v2259 = vmax.f32 %v2195, 0.0
        %v2260 = vmax.f32 %v2197, 0.0
        %v2261 = vmax.f32 %v2200, 0.0
        %v2262 = vmax.f32 %v2202, 0.0
        %v2263 = vmax.f32 %v2205, 0.0
        %v2264 = vmax.f32 %v2207, 0.0
        %v2265 = vmax.f32 %v2210, 0.0
        %v2266 = vmax.f32 %v2212, 0.0
        %v2267 = vmax.f32 %v2215, 0.0
        %v2268 = vmax.f32 %v2217, 0.0
        %v2269 = vmax.f32 %v2220, 0.0
        %v2270 = vmax.f32 %v2222, 0.0
        %v2271 = vmax.f32 %v2225, 0.0
        %v2272 = vmax.f32 %v2227, 0.0
        %v2273 = vmax.f32 %v2230, 0.0
        %v2274 = vmax.f32 %v2232, 0.0
        %v2275 = vmax.f32 %v2235, 0.0
        %v2276 = vmax.f32 %v2237, 0.0
        %v2277 = vmax.f32 %v2240, 0.0
        %v2278 = vmax.f32 %v2242, 0.0
        %v2279 = vmax.f32 %v2245, 0.0
        %v2280 = vmax.f32 %v2247, 0.0
        %2281 = vst.msk [vmem:[%s309] sm:$0xff] %vm372, %v2249
        %2282 = vst.msk [vmem:[%s309 + $0x8] sm:$0xff] %vm372, %v2250
        %2283 = vst.msk [vmem:[%s309 + $0x10] sm:$0xff] %vm372, %v2251
        %2284 = vst.msk [vmem:[%s309 + $0x18] sm:$0xff] %vm372, %v2252
        %2285 = vst.msk [vmem:[%s309 + $0x20] sm:$0xff] %vm372, %v2253
        %2286 = vst.msk [vmem:[%s309 + $0x28] sm:$0xff] %vm372, %v2254
        %2287 = vst.msk [vmem:[%s309 + $0x30] sm:$0xff] %vm372, %v2255
        %2288 = vst.msk [vmem:[%s309 + $0x38] sm:$0xff] %vm372, %v2256
        %2289 = vst.msk [vmem:[%s309 + $0x40] sm:$0xff] %vm372, %v2257
        %2290 = vst.msk [vmem:[%s309 + $0x48] sm:$0xff] %vm372, %v2258
        %2291 = vst.msk [vmem:[%s309 + $0x50] sm:$0xff] %vm372, %v2259
        %2292 = vst.msk [vmem:[%s309 + $0x58] sm:$0xff] %vm372, %v2260
        %2293 = vst.msk [vmem:[%s309 + $0x60] sm:$0xff] %vm372, %v2261
        %2294 = vst.msk [vmem:[%s309 + $0x68] sm:$0xff] %vm372, %v2262
        %2295 = vst.msk [vmem:[%s309 + $0x70] sm:$0xff] %vm372, %v2263
        %2296 = vst.msk [vmem:[%s309 + $0x78] sm:$0xff] %vm372, %v2264
        %2297 = vst.msk [vmem:[%s309 + $0x80] sm:$0xff] %vm372, %v2265
        %2298 = vst.msk [vmem:[%s309 + $0x88] sm:$0xff] %vm372, %v2266
        %2299 = vst.msk [vmem:[%s309 + $0x90] sm:$0xff] %vm372, %v2267
        %2300 = vst.msk [vmem:[%s309 + $0x98] sm:$0xff] %vm372, %v2268
        %2301 = vst.msk [vmem:[%s309 + $0xa0] sm:$0xff] %vm372, %v2269
        %2302 = vst.msk [vmem:[%s309 + $0xa8] sm:$0xff] %vm372, %v2270
        %2303 = vst.msk [vmem:[%s309 + $0xb0] sm:$0xff] %vm372, %v2271
        %2304 = vst.msk [vmem:[%s309 + $0xb8] sm:$0xff] %vm372, %v2272
        %2305 = vst.msk [vmem:[%s309 + $0xc0] sm:$0xff] %vm372, %v2273
        %2306 = vst.msk [vmem:[%s309 + $0xc8] sm:$0xff] %vm372, %v2274
        %2307 = vst.msk [vmem:[%s309 + $0xd0] sm:$0xff] %vm372, %v2275
        %2308 = vst.msk [vmem:[%s309 + $0xd8] sm:$0xff] %vm372, %v2276
        %2309 = vst.msk [vmem:[%s309 + $0xe0] sm:$0xff] %vm372, %v2277
        %2310 = vst.msk [vmem:[%s309 + $0xe8] sm:$0xff] %vm372, %v2278
        %2311 = vst.msk [vmem:[%s309 + $0xf0] sm:$0xff] %vm372, %v2279
        %2312 = vst.msk [vmem:[%s309 + $0xf8] sm:$0xff] %vm372, %v2280
        %s2313 = scalar_lea.vmem [#allocation3], 24
        %2314 = vst.msk [vmem:[%s2313 + $0x1] sm:$0xff] %vm372, %v2249
        %2315 = vst.msk [vmem:[%s2313 + $0x9] sm:$0xff] %vm372, %v2250
        %2316 = vst.msk [vmem:[%s2313 + $0x19] sm:$0xff] %vm372, %v2251
        %2317 = vst.msk [vmem:[%s2313 + $0x21] sm:$0xff] %vm372, %v2252
        %2318 = vst.msk [vmem:[%s2313 + $0x31] sm:$0xff] %vm372, %v2253
        %2319 = vst.msk [vmem:[%s2313 + $0x39] sm:$0xff] %vm372, %v2254
        %2320 = vst.msk [vmem:[%s2313 + $0x49] sm:$0xff] %vm372, %v2255
        %2321 = vst.msk [vmem:[%s2313 + $0x51] sm:$0xff] %vm372, %v2256
        %2322 = vst.msk [vmem:[%s2313 + $0x61] sm:$0xff] %vm372, %v2257
        %2323 = vst.msk [vmem:[%s2313 + $0x69] sm:$0xff] %vm372, %v2258
        %2324 = vst.msk [vmem:[%s2313 + $0x79] sm:$0xff] %vm372, %v2259
        %2325 = vst.msk [vmem:[%s2313 + $0x81] sm:$0xff] %vm372, %v2260
        %2326 = vst.msk [vmem:[%s2313 + $0x91] sm:$0xff] %vm372, %v2261
        %2327 = vst.msk [vmem:[%s2313 + $0x99] sm:$0xff] %vm372, %v2262
        %2328 = vst.msk [vmem:[%s2313 + $0xa9] sm:$0xff] %vm372, %v2263
        %2329 = vst.msk [vmem:[%s2313 + $0xb1] sm:$0xff] %vm372, %v2264
        %2330 = vst.msk [vmem:[%s2313 + $0xc1] sm:$0xff] %vm372, %v2265
        %2331 = vst.msk [vmem:[%s2313 + $0xc9] sm:$0xff] %vm372, %v2266
        %2332 = vst.msk [vmem:[%s2313 + $0xd9] sm:$0xff] %vm372, %v2267
        %2333 = vst.msk [vmem:[%s2313 + $0xe1] sm:$0xff] %vm372, %v2268
        %2334 = vst.msk [vmem:[%s2313 + $0xf1] sm:$0xff] %vm372, %v2269
        %2335 = vst.msk [vmem:[%s2313 + $0xf9] sm:$0xff] %vm372, %v2270
        %2336 = vst.msk [vmem:[%s2313 + $0x109] sm:$0xff] %vm372, %v2271
        %2337 = vst.msk [vmem:[%s2313 + $0x111] sm:$0xff] %vm372, %v2272
        %2338 = vst.msk [vmem:[%s2313 + $0x121] sm:$0xff] %vm372, %v2273
        %2339 = vst.msk [vmem:[%s2313 + $0x129] sm:$0xff] %vm372, %v2274
        %2340 = vst.msk [vmem:[%s2313 + $0x139] sm:$0xff] %vm372, %v2275
        %2341 = vst.msk [vmem:[%s2313 + $0x141] sm:$0xff] %vm372, %v2276
        %2342 = vst.msk [vmem:[%s2313 + $0x151] sm:$0xff] %vm372, %v2277
        %2343 = vst.msk [vmem:[%s2313 + $0x159] sm:$0xff] %vm372, %v2278
        %2344 = vst.msk [vmem:[%s2313 + $0x169] sm:$0xff] %vm372, %v2279
        %2345 = vst.msk [vmem:[%s2313 + $0x171] sm:$0xff] %vm372, %v2280
        %v2346 = vld [vmem:[#allocation3] sm:$0xff]
        %v2347 = vld [vmem:[#allocation3 + $0x8] sm:$0xff]
        %v2348 = vld [vmem:[#allocation3 + $0x18] sm:$0xff]
        %v2349 = vld [vmem:[#allocation3 + $0x20] sm:$0xff]
        %v2350 = vld [vmem:[#allocation3 + $0x30] sm:$0xff]
        %v2351 = vld [vmem:[#allocation3 + $0x38] sm:$0xff]
        %v2352 = vld [vmem:[#allocation3 + $0x48] sm:$0xff]
        %v2353 = vld [vmem:[#allocation3 + $0x50] sm:$0xff]
        %v2354 = vld [vmem:[#allocation3 + $0x60] sm:$0xff]
        %v2355 = vld [vmem:[#allocation3 + $0x68] sm:$0xff]
        %v2356 = vld [vmem:[#allocation3 + $0x78] sm:$0xff]
        %v2357 = vld [vmem:[#allocation3 + $0x80] sm:$0xff]
        %v2358 = vld [vmem:[#allocation3 + $0x90] sm:$0xff]
        %v2359 = vld [vmem:[#allocation3 + $0x98] sm:$0xff]
        %v2360 = vld [vmem:[#allocation3 + $0xa8] sm:$0xff]
        %v2361 = vld [vmem:[#allocation3 + $0xb0] sm:$0xff]
        %v2362 = vld [vmem:[#allocation3 + $0xc0] sm:$0xff]
        %v2363 = vld [vmem:[#allocation3 + $0xc8] sm:$0xff]
        %v2364 = vld [vmem:[#allocation3 + $0xd8] sm:$0xff]
        %v2365 = vld [vmem:[#allocation3 + $0xe0] sm:$0xff]
        %v2366 = vld [vmem:[#allocation3 + $0xf0] sm:$0xff]
        %v2367 = vld [vmem:[#allocation3 + $0xf8] sm:$0xff]
        %v2368 = vld [vmem:[#allocation3 + $0x108] sm:$0xff]
        %v2369 = vld [vmem:[#allocation3 + $0x110] sm:$0xff]
        %v2370 = vld [vmem:[#allocation3 + $0x120] sm:$0xff]
        %v2371 = vld [vmem:[#allocation3 + $0x128] sm:$0xff]
        %v2372 = vld [vmem:[#allocation3 + $0x138] sm:$0xff]
        %v2373 = vld [vmem:[#allocation3 + $0x140] sm:$0xff]
        %v2374 = vld [vmem:[#allocation3 + $0x150] sm:$0xff]
        %v2375 = vld [vmem:[#allocation3 + $0x158] sm:$0xff]
        %v2376 = vld [vmem:[#allocation3 + $0x168] sm:$0xff]
        %v2377 = vld [vmem:[#allocation3 + $0x170] sm:$0xff]
        %v2378 = vld [vmem:[#allocation3 + $0x1] sm:$0xff]
        %v2379 = vld [vmem:[#allocation3 + $0x9] sm:$0xff]
        %v2380 = vld [vmem:[#allocation3 + $0x19] sm:$0xff]
        %v2381 = vld [vmem:[#allocation3 + $0x21] sm:$0xff]
        %v2382 = vld [vmem:[#allocation3 + $0x31] sm:$0xff]
        %v2383 = vld [vmem:[#allocation3 + $0x39] sm:$0xff]
        %v2384 = vld [vmem:[#allocation3 + $0x49] sm:$0xff]
        %v2385 = vld [vmem:[#allocation3 + $0x51] sm:$0xff]
        %v2386 = vld [vmem:[#allocation3 + $0x61] sm:$0xff]
        %v2387 = vld [vmem:[#allocation3 + $0x69] sm:$0xff]
        %v2388 = vld [vmem:[#allocation3 + $0x79] sm:$0xff]
        %v2389 = vld [vmem:[#allocation3 + $0x81] sm:$0xff]
        %v2390 = vld [vmem:[#allocation3 + $0x91] sm:$0xff]
        %v2391 = vld [vmem:[#allocation3 + $0x99] sm:$0xff]
        %v2392 = vld [vmem:[#allocation3 + $0xa9] sm:$0xff]
        %v2393 = vld [vmem:[#allocation3 + $0xb1] sm:$0xff]
        %v2394 = vld [vmem:[#allocation3 + $0xc1] sm:$0xff]
        %v2395 = vld [vmem:[#allocation3 + $0xc9] sm:$0xff]
        %v2396 = vld [vmem:[#allocation3 + $0xd9] sm:$0xff]
        %v2397 = vld [vmem:[#allocation3 + $0xe1] sm:$0xff]
        %v2398 = vld [vmem:[#allocation3 + $0xf1] sm:$0xff]
        %v2399 = vld [vmem:[#allocation3 + $0xf9] sm:$0xff]
        %v2400 = vld [vmem:[#allocation3 + $0x109] sm:$0xff]
        %v2401 = vld [vmem:[#allocation3 + $0x111] sm:$0xff]
        %v2402 = vld [vmem:[#allocation3 + $0x121] sm:$0xff]
        %v2403 = vld [vmem:[#allocation3 + $0x129] sm:$0xff]
        %v2404 = vld [vmem:[#allocation3 + $0x139] sm:$0xff]
        %v2405 = vld [vmem:[#allocation3 + $0x141] sm:$0xff]
        %v2406 = vld [vmem:[#allocation3 + $0x151] sm:$0xff]
        %v2407 = vld [vmem:[#allocation3 + $0x159] sm:$0xff]
        %v2408 = vld [vmem:[#allocation3 + $0x169] sm:$0xff]
        %v2409 = vld [vmem:[#allocation3 + $0x171] sm:$0xff]
        %v2410 = vld [vmem:[#allocation3 + $0x2] sm:$0xff]
        %v2411 = vld [vmem:[#allocation3 + $0xa] sm:$0xff]
        %v2412 = vld [vmem:[#allocation3 + $0x1a] sm:$0xff]
        %v2413 = vld [vmem:[#allocation3 + $0x22] sm:$0xff]
        %v2414 = vld [vmem:[#allocation3 + $0x32] sm:$0xff]
        %v2415 = vld [vmem:[#allocation3 + $0x3a] sm:$0xff]
        %v2416 = vld [vmem:[#allocation3 + $0x4a] sm:$0xff]
        %v2417 = vld [vmem:[#allocation3 + $0x52] sm:$0xff]
        %v2418 = vld [vmem:[#allocation3 + $0x62] sm:$0xff]
        %v2419 = vld [vmem:[#allocation3 + $0x6a] sm:$0xff]
        %v2420 = vld [vmem:[#allocation3 + $0x7a] sm:$0xff]
        %v2421 = vld [vmem:[#allocation3 + $0x82] sm:$0xff]
        %v2422 = vld [vmem:[#allocation3 + $0x92] sm:$0xff]
        %v2423 = vld [vmem:[#allocation3 + $0x9a] sm:$0xff]
        %v2424 = vld [vmem:[#allocation3 + $0xaa] sm:$0xff]
        %v2425 = vld [vmem:[#allocation3 + $0xb2] sm:$0xff]
        %v2426 = vld [vmem:[#allocation3 + $0xc2] sm:$0xff]
        %v2427 = vld [vmem:[#allocation3 + $0xca] sm:$0xff]
        %v2428 = vld [vmem:[#allocation3 + $0xda] sm:$0xff]
        %v2429 = vld [vmem:[#allocation3 + $0xe2] sm:$0xff]
        %v2430 = vld [vmem:[#allocation3 + $0xf2] sm:$0xff]
        %v2431 = vld [vmem:[#allocation3 + $0xfa] sm:$0xff]
        %v2432 = vld [vmem:[#allocation3 + $0x10a] sm:$0xff]
        %v2433 = vld [vmem:[#allocation3 + $0x112] sm:$0xff]
        %v2434 = vld [vmem:[#allocation3 + $0x122] sm:$0xff]
        %v2435 = vld [vmem:[#allocation3 + $0x12a] sm:$0xff]
        %v2436 = vld [vmem:[#allocation3 + $0x13a] sm:$0xff]
        %v2437 = vld [vmem:[#allocation3 + $0x142] sm:$0xff]
        %v2438 = vld [vmem:[#allocation3 + $0x152] sm:$0xff]
        %v2439 = vld [vmem:[#allocation3 + $0x15a] sm:$0xff]
        %v2440 = vld [vmem:[#allocation3 + $0x16a] sm:$0xff]
        %v2441 = vld [vmem:[#allocation3 + $0x172] sm:$0xff]
        %v2442 = vld [vmem:[%s2313] sm:$0xff]
        %v2443 = vld [vmem:[%s2313 + $0x8] sm:$0xff]
        %v2444 = vld [vmem:[%s2313 + $0x18] sm:$0xff]
        %v2445 = vld [vmem:[%s2313 + $0x20] sm:$0xff]
        %v2446 = vld [vmem:[%s2313 + $0x30] sm:$0xff]
        %v2447 = vld [vmem:[%s2313 + $0x38] sm:$0xff]
        %v2448 = vld [vmem:[%s2313 + $0x48] sm:$0xff]
        %v2449 = vld [vmem:[%s2313 + $0x50] sm:$0xff]
        %v2450 = vld [vmem:[%s2313 + $0x60] sm:$0xff]
        %v2451 = vld [vmem:[%s2313 + $0x68] sm:$0xff]
        %v2452 = vld [vmem:[%s2313 + $0x78] sm:$0xff]
        %v2453 = vld [vmem:[%s2313 + $0x80] sm:$0xff]
        %v2454 = vld [vmem:[%s2313 + $0x90] sm:$0xff]
        %v2455 = vld [vmem:[%s2313 + $0x98] sm:$0xff]
        %v2456 = vld [vmem:[%s2313 + $0xa8] sm:$0xff]
        %v2457 = vld [vmem:[%s2313 + $0xb0] sm:$0xff]
        %v2458 = vld [vmem:[%s2313 + $0xc0] sm:$0xff]
        %v2459 = vld [vmem:[%s2313 + $0xc8] sm:$0xff]
        %v2460 = vld [vmem:[%s2313 + $0xd8] sm:$0xff]
        %v2461 = vld [vmem:[%s2313 + $0xe0] sm:$0xff]
        %v2462 = vld [vmem:[%s2313 + $0xf0] sm:$0xff]
        %v2463 = vld [vmem:[%s2313 + $0xf8] sm:$0xff]
        %v2464 = vld [vmem:[%s2313 + $0x108] sm:$0xff]
        %v2465 = vld [vmem:[%s2313 + $0x110] sm:$0xff]
        %v2466 = vld [vmem:[%s2313 + $0x120] sm:$0xff]
        %v2467 = vld [vmem:[%s2313 + $0x128] sm:$0xff]
        %v2468 = vld [vmem:[%s2313 + $0x138] sm:$0xff]
        %v2469 = vld [vmem:[%s2313 + $0x140] sm:$0xff]
        %v2470 = vld [vmem:[%s2313 + $0x150] sm:$0xff]
        %v2471 = vld [vmem:[%s2313 + $0x158] sm:$0xff]
        %v2472 = vld [vmem:[%s2313 + $0x168] sm:$0xff]
        %v2473 = vld [vmem:[%s2313 + $0x170] sm:$0xff]
        %v2474 = vld [vmem:[%s2313 + $0x1] sm:$0xff]
        %v2475 = vld [vmem:[%s2313 + $0x9] sm:$0xff]
        %v2476 = vld [vmem:[%s2313 + $0x19] sm:$0xff]
        %v2477 = vld [vmem:[%s2313 + $0x21] sm:$0xff]
        %v2478 = vld [vmem:[%s2313 + $0x31] sm:$0xff]
        %v2479 = vld [vmem:[%s2313 + $0x39] sm:$0xff]
        %v2480 = vld [vmem:[%s2313 + $0x49] sm:$0xff]
        %v2481 = vld [vmem:[%s2313 + $0x51] sm:$0xff]
        %v2482 = vld [vmem:[%s2313 + $0x61] sm:$0xff]
        %v2483 = vld [vmem:[%s2313 + $0x69] sm:$0xff]
        %v2484 = vld [vmem:[%s2313 + $0x79] sm:$0xff]
        %v2485 = vld [vmem:[%s2313 + $0x81] sm:$0xff]
        %v2486 = vld [vmem:[%s2313 + $0x91] sm:$0xff]
        %v2487 = vld [vmem:[%s2313 + $0x99] sm:$0xff]
        %v2488 = vld [vmem:[%s2313 + $0xa9] sm:$0xff]
        %v2489 = vld [vmem:[%s2313 + $0xb1] sm:$0xff]
        %v2490 = vld [vmem:[%s2313 + $0xc1] sm:$0xff]
        %v2491 = vld [vmem:[%s2313 + $0xc9] sm:$0xff]
        %v2492 = vld [vmem:[%s2313 + $0xd9] sm:$0xff]
        %v2493 = vld [vmem:[%s2313 + $0xe1] sm:$0xff]
        %v2494 = vld [vmem:[%s2313 + $0xf1] sm:$0xff]
        %v2495 = vld [vmem:[%s2313 + $0xf9] sm:$0xff]
        %v2496 = vld [vmem:[%s2313 + $0x109] sm:$0xff]
        %v2497 = vld [vmem:[%s2313 + $0x111] sm:$0xff]
        %v2498 = vld [vmem:[%s2313 + $0x121] sm:$0xff]
        %v2499 = vld [vmem:[%s2313 + $0x129] sm:$0xff]
        %v2500 = vld [vmem:[%s2313 + $0x139] sm:$0xff]
        %v2501 = vld [vmem:[%s2313 + $0x141] sm:$0xff]
        %v2502 = vld [vmem:[%s2313 + $0x151] sm:$0xff]
        %v2503 = vld [vmem:[%s2313 + $0x159] sm:$0xff]
        %v2504 = vld [vmem:[%s2313 + $0x169] sm:$0xff]
        %v2505 = vld [vmem:[%s2313 + $0x171] sm:$0xff]
        %v2506 = vld [vmem:[%s2313 + $0x2] sm:$0xff]
        %v2507 = vld [vmem:[%s2313 + $0xa] sm:$0xff]
        %v2508 = vld [vmem:[%s2313 + $0x1a] sm:$0xff]
        %v2509 = vld [vmem:[%s2313 + $0x22] sm:$0xff]
        %v2510 = vld [vmem:[%s2313 + $0x32] sm:$0xff]
        %v2511 = vld [vmem:[%s2313 + $0x3a] sm:$0xff]
        %v2512 = vld [vmem:[%s2313 + $0x4a] sm:$0xff]
        %v2513 = vld [vmem:[%s2313 + $0x52] sm:$0xff]
        %v2514 = vld [vmem:[%s2313 + $0x62] sm:$0xff]
        %v2515 = vld [vmem:[%s2313 + $0x6a] sm:$0xff]
        %v2516 = vld [vmem:[%s2313 + $0x7a] sm:$0xff]
        %v2517 = vld [vmem:[%s2313 + $0x82] sm:$0xff]
        %v2518 = vld [vmem:[%s2313 + $0x92] sm:$0xff]
        %v2519 = vld [vmem:[%s2313 + $0x9a] sm:$0xff]
        %v2520 = vld [vmem:[%s2313 + $0xaa] sm:$0xff]
        %v2521 = vld [vmem:[%s2313 + $0xb2] sm:$0xff]
        %v2522 = vld [vmem:[%s2313 + $0xc2] sm:$0xff]
        %v2523 = vld [vmem:[%s2313 + $0xca] sm:$0xff]
        %v2524 = vld [vmem:[%s2313 + $0xda] sm:$0xff]
        %v2525 = vld [vmem:[%s2313 + $0xe2] sm:$0xff]
        %v2526 = vld [vmem:[%s2313 + $0xf2] sm:$0xff]
        %v2527 = vld [vmem:[%s2313 + $0xfa] sm:$0xff]
        %v2528 = vld [vmem:[%s2313 + $0x10a] sm:$0xff]
        %v2529 = vld [vmem:[%s2313 + $0x112] sm:$0xff]
        %v2530 = vld [vmem:[%s2313 + $0x122] sm:$0xff]
        %v2531 = vld [vmem:[%s2313 + $0x12a] sm:$0xff]
        %v2532 = vld [vmem:[%s2313 + $0x13a] sm:$0xff]
        %v2533 = vld [vmem:[%s2313 + $0x142] sm:$0xff]
        %v2534 = vld [vmem:[%s2313 + $0x152] sm:$0xff]
        %v2535 = vld [vmem:[%s2313 + $0x15a] sm:$0xff]
        %v2536 = vld [vmem:[%s2313 + $0x16a] sm:$0xff]
        %v2537 = vld [vmem:[%s2313 + $0x172] sm:$0xff]
        %s2538 = scalar_lea.vmem [#allocation3], 48
        %v2539 = vld [vmem:[%s2538] sm:$0xff]
        %v2540 = vld [vmem:[%s2538 + $0x8] sm:$0xff]
        %v2541 = vld [vmem:[%s2538 + $0x18] sm:$0xff]
        %v2542 = vld [vmem:[%s2538 + $0x20] sm:$0xff]
        %v2543 = vld [vmem:[%s2538 + $0x30] sm:$0xff]
        %v2544 = vld [vmem:[%s2538 + $0x38] sm:$0xff]
        %v2545 = vld [vmem:[%s2538 + $0x48] sm:$0xff]
        %v2546 = vld [vmem:[%s2538 + $0x50] sm:$0xff]
        %v2547 = vld [vmem:[%s2538 + $0x60] sm:$0xff]
        %v2548 = vld [vmem:[%s2538 + $0x68] sm:$0xff]
        %v2549 = vld [vmem:[%s2538 + $0x78] sm:$0xff]
        %v2550 = vld [vmem:[%s2538 + $0x80] sm:$0xff]
        %v2551 = vld [vmem:[%s2538 + $0x90] sm:$0xff]
        %v2552 = vld [vmem:[%s2538 + $0x98] sm:$0xff]
        %v2553 = vld [vmem:[%s2538 + $0xa8] sm:$0xff]
        %v2554 = vld [vmem:[%s2538 + $0xb0] sm:$0xff]
        %v2555 = vld [vmem:[%s2538 + $0xc0] sm:$0xff]
        %v2556 = vld [vmem:[%s2538 + $0xc8] sm:$0xff]
        %v2557 = vld [vmem:[%s2538 + $0xd8] sm:$0xff]
        %v2558 = vld [vmem:[%s2538 + $0xe0] sm:$0xff]
        %v2559 = vld [vmem:[%s2538 + $0xf0] sm:$0xff]
        %v2560 = vld [vmem:[%s2538 + $0xf8] sm:$0xff]
        %v2561 = vld [vmem:[%s2538 + $0x108] sm:$0xff]
        %v2562 = vld [vmem:[%s2538 + $0x110] sm:$0xff]
        %v2563 = vld [vmem:[%s2538 + $0x120] sm:$0xff]
        %v2564 = vld [vmem:[%s2538 + $0x128] sm:$0xff]
        %v2565 = vld [vmem:[%s2538 + $0x138] sm:$0xff]
        %v2566 = vld [vmem:[%s2538 + $0x140] sm:$0xff]
        %v2567 = vld [vmem:[%s2538 + $0x150] sm:$0xff]
        %v2568 = vld [vmem:[%s2538 + $0x158] sm:$0xff]
        %v2569 = vld [vmem:[%s2538 + $0x168] sm:$0xff]
        %v2570 = vld [vmem:[%s2538 + $0x170] sm:$0xff]
        %v2571 = vld [vmem:[%s2538 + $0x1] sm:$0xff]
        %v2572 = vld [vmem:[%s2538 + $0x9] sm:$0xff]
        %v2573 = vld [vmem:[%s2538 + $0x19] sm:$0xff]
        %v2574 = vld [vmem:[%s2538 + $0x21] sm:$0xff]
        %v2575 = vld [vmem:[%s2538 + $0x31] sm:$0xff]
        %v2576 = vld [vmem:[%s2538 + $0x39] sm:$0xff]
        %v2577 = vld [vmem:[%s2538 + $0x49] sm:$0xff]
        %v2578 = vld [vmem:[%s2538 + $0x51] sm:$0xff]
        %v2579 = vld [vmem:[%s2538 + $0x61] sm:$0xff]
        %v2580 = vld [vmem:[%s2538 + $0x69] sm:$0xff]
        %v2581 = vld [vmem:[%s2538 + $0x79] sm:$0xff]
        %v2582 = vld [vmem:[%s2538 + $0x81] sm:$0xff]
        %v2583 = vld [vmem:[%s2538 + $0x91] sm:$0xff]
        %v2584 = vld [vmem:[%s2538 + $0x99] sm:$0xff]
        %v2585 = vld [vmem:[%s2538 + $0xa9] sm:$0xff]
        %v2586 = vld [vmem:[%s2538 + $0xb1] sm:$0xff]
        %v2587 = vld [vmem:[%s2538 + $0xc1] sm:$0xff]
        %v2588 = vld [vmem:[%s2538 + $0xc9] sm:$0xff]
        %v2589 = vld [vmem:[%s2538 + $0xd9] sm:$0xff]
        %v2590 = vld [vmem:[%s2538 + $0xe1] sm:$0xff]
        %v2591 = vld [vmem:[%s2538 + $0xf1] sm:$0xff]
        %v2592 = vld [vmem:[%s2538 + $0xf9] sm:$0xff]
        %v2593 = vld [vmem:[%s2538 + $0x109] sm:$0xff]
        %v2594 = vld [vmem:[%s2538 + $0x111] sm:$0xff]
        %v2595 = vld [vmem:[%s2538 + $0x121] sm:$0xff]
        %v2596 = vld [vmem:[%s2538 + $0x129] sm:$0xff]
        %v2597 = vld [vmem:[%s2538 + $0x139] sm:$0xff]
        %v2598 = vld [vmem:[%s2538 + $0x141] sm:$0xff]
        %v2599 = vld [vmem:[%s2538 + $0x151] sm:$0xff]
        %v2600 = vld [vmem:[%s2538 + $0x159] sm:$0xff]
        %v2601 = vld [vmem:[%s2538 + $0x169] sm:$0xff]
        %v2602 = vld [vmem:[%s2538 + $0x171] sm:$0xff]
        %v2603 = vld [vmem:[%s2538 + $0x2] sm:$0xff]
        %v2604 = vld [vmem:[%s2538 + $0xa] sm:$0xff]
        %v2605 = vld [vmem:[%s2538 + $0x1a] sm:$0xff]
        %v2606 = vld [vmem:[%s2538 + $0x22] sm:$0xff]
        %v2607 = vld [vmem:[%s2538 + $0x32] sm:$0xff]
        %v2608 = vld [vmem:[%s2538 + $0x3a] sm:$0xff]
        %v2609 = vld [vmem:[%s2538 + $0x4a] sm:$0xff]
        %v2610 = vld [vmem:[%s2538 + $0x52] sm:$0xff]
        %v2611 = vld [vmem:[%s2538 + $0x62] sm:$0xff]
        %v2612 = vld [vmem:[%s2538 + $0x6a] sm:$0xff]
        %v2613 = vld [vmem:[%s2538 + $0x7a] sm:$0xff]
        %v2614 = vld [vmem:[%s2538 + $0x82] sm:$0xff]
        %v2615 = vld [vmem:[%s2538 + $0x92] sm:$0xff]
        %v2616 = vld [vmem:[%s2538 + $0x9a] sm:$0xff]
        %v2617 = vld [vmem:[%s2538 + $0xaa] sm:$0xff]
        %v2618 = vld [vmem:[%s2538 + $0xb2] sm:$0xff]
        %v2619 = vld [vmem:[%s2538 + $0xc2] sm:$0xff]
        %v2620 = vld [vmem:[%s2538 + $0xca] sm:$0xff]
        %v2621 = vld [vmem:[%s2538 + $0xda] sm:$0xff]
        %v2622 = vld [vmem:[%s2538 + $0xe2] sm:$0xff]
        %v2623 = vld [vmem:[%s2538 + $0xf2] sm:$0xff]
        %v2624 = vld [vmem:[%s2538 + $0xfa] sm:$0xff]
        %v2625 = vld [vmem:[%s2538 + $0x10a] sm:$0xff]
        %v2626 = vld [vmem:[%s2538 + $0x112] sm:$0xff]
        %v2627 = vld [vmem:[%s2538 + $0x122] sm:$0xff]
        %v2628 = vld [vmem:[%s2538 + $0x12a] sm:$0xff]
        %v2629 = vld [vmem:[%s2538 + $0x13a] sm:$0xff]
        %v2630 = vld [vmem:[%s2538 + $0x142] sm:$0xff]
        %v2631 = vld [vmem:[%s2538 + $0x152] sm:$0xff]
        %v2632 = vld [vmem:[%s2538 + $0x15a] sm:$0xff]
        %v2633 = vld [vmem:[%s2538 + $0x16a] sm:$0xff]
        %v2634 = vld [vmem:[%s2538 + $0x172] sm:$0xff]
        %2667 = vrot.lane.b32.xlu0 %v2378, 64
        %v2668 = vpop.permute.xlu0 %2667
        %2669 = vrot.lane.b32.xlu0 %v2379, 64
        %v2670 = vpop.permute.xlu0 %2669
        %2671 = vrot.lane.b32.xlu0 %v2380, 64
        %v2672 = vpop.permute.xlu0 %2671
        %2673 = vrot.lane.b32.xlu0 %v2381, 64
        %v2674 = vpop.permute.xlu0 %2673
        %2675 = vrot.lane.b32.xlu0 %v2382, 64
        %v2676 = vpop.permute.xlu0 %2675
        %2677 = vrot.lane.b32.xlu0 %v2383, 64
        %v2678 = vpop.permute.xlu0 %2677
        %2679 = vrot.lane.b32.xlu0 %v2384, 64
        %v2680 = vpop.permute.xlu0 %2679
        %2681 = vrot.lane.b32.xlu0 %v2385, 64
        %v2682 = vpop.permute.xlu0 %2681
        %2683 = vrot.lane.b32.xlu0 %v2386, 64
        %v2684 = vpop.permute.xlu0 %2683
        %2685 = vrot.lane.b32.xlu0 %v2387, 64
        %v2686 = vpop.permute.xlu0 %2685
        %2687 = vrot.lane.b32.xlu0 %v2388, 64
        %v2688 = vpop.permute.xlu0 %2687
        %2689 = vrot.lane.b32.xlu0 %v2389, 64
        %v2690 = vpop.permute.xlu0 %2689
        %2691 = vrot.lane.b32.xlu0 %v2390, 64
        %v2692 = vpop.permute.xlu0 %2691
        %2693 = vrot.lane.b32.xlu0 %v2391, 64
        %v2694 = vpop.permute.xlu0 %2693
        %2695 = vrot.lane.b32.xlu0 %v2392, 64
        %v2696 = vpop.permute.xlu0 %2695
        %2697 = vrot.lane.b32.xlu0 %v2393, 64
        %v2698 = vpop.permute.xlu0 %2697
        %2699 = vrot.lane.b32.xlu0 %v2394, 64
        %v2700 = vpop.permute.xlu0 %2699
        %2701 = vrot.lane.b32.xlu0 %v2395, 64
        %v2702 = vpop.permute.xlu0 %2701
        %2703 = vrot.lane.b32.xlu0 %v2396, 64
        %v2704 = vpop.permute.xlu0 %2703
        %2705 = vrot.lane.b32.xlu0 %v2397, 64
        %v2706 = vpop.permute.xlu0 %2705
        %2707 = vrot.lane.b32.xlu0 %v2398, 64
        %v2708 = vpop.permute.xlu0 %2707
        %2709 = vrot.lane.b32.xlu0 %v2399, 64
        %v2710 = vpop.permute.xlu0 %2709
        %2711 = vrot.lane.b32.xlu0 %v2400, 64
        %v2712 = vpop.permute.xlu0 %2711
        %2713 = vrot.lane.b32.xlu0 %v2401, 64
        %v2714 = vpop.permute.xlu0 %2713
        %2715 = vrot.lane.b32.xlu0 %v2402, 64
        %v2716 = vpop.permute.xlu0 %2715
        %2717 = vrot.lane.b32.xlu0 %v2403, 64
        %v2718 = vpop.permute.xlu0 %2717
        %2719 = vrot.lane.b32.xlu0 %v2404, 64
        %v2720 = vpop.permute.xlu0 %2719
        %2721 = vrot.lane.b32.xlu0 %v2405, 64
        %v2722 = vpop.permute.xlu0 %2721
        %2723 = vrot.lane.b32.xlu0 %v2406, 64
        %v2724 = vpop.permute.xlu0 %2723
        %2725 = vrot.lane.b32.xlu0 %v2407, 64
        %v2726 = vpop.permute.xlu0 %2725
        %2727 = vrot.lane.b32.xlu0 %v2408, 64
        %v2728 = vpop.permute.xlu0 %2727
        %2729 = vrot.lane.b32.xlu0 %v2409, 64
        %v2730 = vpop.permute.xlu0 %2729
        %2795 = vrot.lane.b32.xlu0 %v2442, 64
        %v2796 = vpop.permute.xlu0 %2795
        %2797 = vrot.lane.b32.xlu0 %v2443, 64
        %v2798 = vpop.permute.xlu0 %2797
        %2799 = vrot.lane.b32.xlu0 %v2444, 64
        %v2800 = vpop.permute.xlu0 %2799
        %2801 = vrot.lane.b32.xlu0 %v2445, 64
        %v2802 = vpop.permute.xlu0 %2801
        %2803 = vrot.lane.b32.xlu0 %v2446, 64
        %v2804 = vpop.permute.xlu0 %2803
        %2805 = vrot.lane.b32.xlu0 %v2447, 64
        %v2806 = vpop.permute.xlu0 %2805
        %2807 = vrot.lane.b32.xlu0 %v2448, 64
        %v2808 = vpop.permute.xlu0 %2807
        %2809 = vrot.lane.b32.xlu0 %v2449, 64
        %v2810 = vpop.permute.xlu0 %2809
        %2811 = vrot.lane.b32.xlu0 %v2450, 64
        %v2812 = vpop.permute.xlu0 %2811
        %2813 = vrot.lane.b32.xlu0 %v2451, 64
        %v2814 = vpop.permute.xlu0 %2813
        %2815 = vrot.lane.b32.xlu0 %v2452, 64
        %v2816 = vpop.permute.xlu0 %2815
        %2817 = vrot.lane.b32.xlu0 %v2453, 64
        %v2818 = vpop.permute.xlu0 %2817
        %2819 = vrot.lane.b32.xlu0 %v2454, 64
        %v2820 = vpop.permute.xlu0 %2819
        %2821 = vrot.lane.b32.xlu0 %v2455, 64
        %v2822 = vpop.permute.xlu0 %2821
        %2823 = vrot.lane.b32.xlu0 %v2456, 64
        %v2824 = vpop.permute.xlu0 %2823
        %2825 = vrot.lane.b32.xlu0 %v2457, 64
        %v2826 = vpop.permute.xlu0 %2825
        %2827 = vrot.lane.b32.xlu0 %v2458, 64
        %v2828 = vpop.permute.xlu0 %2827
        %2829 = vrot.lane.b32.xlu0 %v2459, 64
        %v2830 = vpop.permute.xlu0 %2829
        %2831 = vrot.lane.b32.xlu0 %v2460, 64
        %v2832 = vpop.permute.xlu0 %2831
        %2833 = vrot.lane.b32.xlu0 %v2461, 64
        %v2834 = vpop.permute.xlu0 %2833
        %2835 = vrot.lane.b32.xlu0 %v2462, 64
        %v2836 = vpop.permute.xlu0 %2835
        %2837 = vrot.lane.b32.xlu0 %v2463, 64
        %v2838 = vpop.permute.xlu0 %2837
        %2839 = vrot.lane.b32.xlu0 %v2464, 64
        %v2840 = vpop.permute.xlu0 %2839
        %2841 = vrot.lane.b32.xlu0 %v2465, 64
        %v2842 = vpop.permute.xlu0 %2841
        %2843 = vrot.lane.b32.xlu0 %v2466, 64
        %v2844 = vpop.permute.xlu0 %2843
        %2845 = vrot.lane.b32.xlu0 %v2467, 64
        %v2846 = vpop.permute.xlu0 %2845
        %2847 = vrot.lane.b32.xlu0 %v2468, 64
        %v2848 = vpop.permute.xlu0 %2847
        %2849 = vrot.lane.b32.xlu0 %v2469, 64
        %v2850 = vpop.permute.xlu0 %2849
        %2851 = vrot.lane.b32.xlu0 %v2470, 64
        %v2852 = vpop.permute.xlu0 %2851
        %2853 = vrot.lane.b32.xlu0 %v2471, 64
        %v2854 = vpop.permute.xlu0 %2853
        %2855 = vrot.lane.b32.xlu0 %v2472, 64
        %v2856 = vpop.permute.xlu0 %2855
        %2857 = vrot.lane.b32.xlu0 %v2473, 64
        %v2858 = vpop.permute.xlu0 %2857
        %2923 = vrot.lane.b32.xlu0 %v2506, 64
        %v2924 = vpop.permute.xlu0 %2923
        %2925 = vrot.lane.b32.xlu0 %v2507, 64
        %v2926 = vpop.permute.xlu0 %2925
        %2927 = vrot.lane.b32.xlu0 %v2508, 64
        %v2928 = vpop.permute.xlu0 %2927
        %2929 = vrot.lane.b32.xlu0 %v2509, 64
        %v2930 = vpop.permute.xlu0 %2929
        %2931 = vrot.lane.b32.xlu0 %v2510, 64
        %v2932 = vpop.permute.xlu0 %2931
        %2933 = vrot.lane.b32.xlu0 %v2511, 64
        %v2934 = vpop.permute.xlu0 %2933
        %2935 = vrot.lane.b32.xlu0 %v2512, 64
        %v2936 = vpop.permute.xlu0 %2935
        %2937 = vrot.lane.b32.xlu0 %v2513, 64
        %v2938 = vpop.permute.xlu0 %2937
        %2939 = vrot.lane.b32.xlu0 %v2514, 64
        %v2940 = vpop.permute.xlu0 %2939
        %2941 = vrot.lane.b32.xlu0 %v2515, 64
        %v2942 = vpop.permute.xlu0 %2941
        %2943 = vrot.lane.b32.xlu0 %v2516, 64
        %v2944 = vpop.permute.xlu0 %2943
        %2945 = vrot.lane.b32.xlu0 %v2517, 64
        %v2946 = vpop.permute.xlu0 %2945
        %2947 = vrot.lane.b32.xlu0 %v2518, 64
        %v2948 = vpop.permute.xlu0 %2947
        %2949 = vrot.lane.b32.xlu0 %v2519, 64
        %v2950 = vpop.permute.xlu0 %2949
        %2951 = vrot.lane.b32.xlu0 %v2520, 64
        %v2952 = vpop.permute.xlu0 %2951
        %2953 = vrot.lane.b32.xlu0 %v2521, 64
        %v2954 = vpop.permute.xlu0 %2953
        %2955 = vrot.lane.b32.xlu0 %v2522, 64
        %v2956 = vpop.permute.xlu0 %2955
        %2957 = vrot.lane.b32.xlu0 %v2523, 64
        %v2958 = vpop.permute.xlu0 %2957
        %2959 = vrot.lane.b32.xlu0 %v2524, 64
        %v2960 = vpop.permute.xlu0 %2959
        %2961 = vrot.lane.b32.xlu0 %v2525, 64
        %v2962 = vpop.permute.xlu0 %2961
        %2963 = vrot.lane.b32.xlu0 %v2526, 64
        %v2964 = vpop.permute.xlu0 %2963
        %2965 = vrot.lane.b32.xlu0 %v2527, 64
        %v2966 = vpop.permute.xlu0 %2965
        %2967 = vrot.lane.b32.xlu0 %v2528, 64
        %v2968 = vpop.permute.xlu0 %2967
        %2969 = vrot.lane.b32.xlu0 %v2529, 64
        %v2970 = vpop.permute.xlu0 %2969
        %2971 = vrot.lane.b32.xlu0 %v2530, 64
        %v2972 = vpop.permute.xlu0 %2971
        %2973 = vrot.lane.b32.xlu0 %v2531, 64
        %v2974 = vpop.permute.xlu0 %2973
        %2975 = vrot.lane.b32.xlu0 %v2532, 64
        %v2976 = vpop.permute.xlu0 %2975
        %2977 = vrot.lane.b32.xlu0 %v2533, 64
        %v2978 = vpop.permute.xlu0 %2977
        %2979 = vrot.lane.b32.xlu0 %v2534, 64
        %v2980 = vpop.permute.xlu0 %2979
        %2981 = vrot.lane.b32.xlu0 %v2535, 64
        %v2982 = vpop.permute.xlu0 %2981
        %2983 = vrot.lane.b32.xlu0 %v2536, 64
        %v2984 = vpop.permute.xlu0 %2983
        %2985 = vrot.lane.b32.xlu0 %v2537, 64
        %v2986 = vpop.permute.xlu0 %2985
        %3051 = vrot.lane.b32.xlu0 %v2571, 64
        %v3052 = vpop.permute.xlu0 %3051
        %3053 = vrot.lane.b32.xlu0 %v2572, 64
        %v3054 = vpop.permute.xlu0 %3053
        %3055 = vrot.lane.b32.xlu0 %v2573, 64
        %v3056 = vpop.permute.xlu0 %3055
        %3057 = vrot.lane.b32.xlu0 %v2574, 64
        %v3058 = vpop.permute.xlu0 %3057
        %3059 = vrot.lane.b32.xlu0 %v2575, 64
        %v3060 = vpop.permute.xlu0 %3059
        %3061 = vrot.lane.b32.xlu0 %v2576, 64
        %v3062 = vpop.permute.xlu0 %3061
        %3063 = vrot.lane.b32.xlu0 %v2577, 64
        %v3064 = vpop.permute.xlu0 %3063
        %3065 = vrot.lane.b32.xlu0 %v2578, 64
        %v3066 = vpop.permute.xlu0 %3065
        %3067 = vrot.lane.b32.xlu0 %v2579, 64
        %v3068 = vpop.permute.xlu0 %3067
        %3069 = vrot.lane.b32.xlu0 %v2580, 64
        %v3070 = vpop.permute.xlu0 %3069
        %3071 = vrot.lane.b32.xlu0 %v2581, 64
        %v3072 = vpop.permute.xlu0 %3071
        %3073 = vrot.lane.b32.xlu0 %v2582, 64
        %v3074 = vpop.permute.xlu0 %3073
        %3075 = vrot.lane.b32.xlu0 %v2583, 64
        %v3076 = vpop.permute.xlu0 %3075
        %3077 = vrot.lane.b32.xlu0 %v2584, 64
        %v3078 = vpop.permute.xlu0 %3077
        %3079 = vrot.lane.b32.xlu0 %v2585, 64
        %v3080 = vpop.permute.xlu0 %3079
        %3081 = vrot.lane.b32.xlu0 %v2586, 64
        %v3082 = vpop.permute.xlu0 %3081
        %3083 = vrot.lane.b32.xlu0 %v2587, 64
        %v3084 = vpop.permute.xlu0 %3083
        %3085 = vrot.lane.b32.xlu0 %v2588, 64
        %v3086 = vpop.permute.xlu0 %3085
        %3087 = vrot.lane.b32.xlu0 %v2589, 64
        %v3088 = vpop.permute.xlu0 %3087
        %3089 = vrot.lane.b32.xlu0 %v2590, 64
        %v3090 = vpop.permute.xlu0 %3089
        %3091 = vrot.lane.b32.xlu0 %v2591, 64
        %v3092 = vpop.permute.xlu0 %3091
        %3093 = vrot.lane.b32.xlu0 %v2592, 64
        %v3094 = vpop.permute.xlu0 %3093
        %3095 = vrot.lane.b32.xlu0 %v2593, 64
        %v3096 = vpop.permute.xlu0 %3095
        %3097 = vrot.lane.b32.xlu0 %v2594, 64
        %v3098 = vpop.permute.xlu0 %3097
        %3099 = vrot.lane.b32.xlu0 %v2595, 64
        %v3100 = vpop.permute.xlu0 %3099
        %3101 = vrot.lane.b32.xlu0 %v2596, 64
        %v3102 = vpop.permute.xlu0 %3101
        %3103 = vrot.lane.b32.xlu0 %v2597, 64
        %v3104 = vpop.permute.xlu0 %3103
        %3105 = vrot.lane.b32.xlu0 %v2598, 64
        %v3106 = vpop.permute.xlu0 %3105
        %3107 = vrot.lane.b32.xlu0 %v2599, 64
        %v3108 = vpop.permute.xlu0 %3107
        %3109 = vrot.lane.b32.xlu0 %v2600, 64
        %v3110 = vpop.permute.xlu0 %3109
        %3111 = vrot.lane.b32.xlu0 %v2601, 64
        %v3112 = vpop.permute.xlu0 %3111
        %3113 = vrot.lane.b32.xlu0 %v2602, 64
        %v3114 = vpop.permute.xlu0 %3113
        %v3147 = vsel %vm372, %v2346, %v2668
        %v3148 = vsel %vm372, %v2347, %v2670
        %v3149 = vsel %vm372, %v2348, %v2672
        %v3150 = vsel %vm372, %v2349, %v2674
        %v3151 = vsel %vm372, %v2350, %v2676
        %v3152 = vsel %vm372, %v2351, %v2678
        %v3153 = vsel %vm372, %v2352, %v2680
        %v3154 = vsel %vm372, %v2353, %v2682
        %v3155 = vsel %vm372, %v2354, %v2684
        %v3156 = vsel %vm372, %v2355, %v2686
        %v3157 = vsel %vm372, %v2356, %v2688
        %v3158 = vsel %vm372, %v2357, %v2690
        %v3159 = vsel %vm372, %v2358, %v2692
        %v3160 = vsel %vm372, %v2359, %v2694
        %v3161 = vsel %vm372, %v2360, %v2696
        %v3162 = vsel %vm372, %v2361, %v2698
        %v3163 = vsel %vm372, %v2362, %v2700
        %v3164 = vsel %vm372, %v2363, %v2702
        %v3165 = vsel %vm372, %v2364, %v2704
        %v3166 = vsel %vm372, %v2365, %v2706
        %v3167 = vsel %vm372, %v2366, %v2708
        %v3168 = vsel %vm372, %v2367, %v2710
        %v3169 = vsel %vm372, %v2368, %v2712
        %v3170 = vsel %vm372, %v2369, %v2714
        %v3171 = vsel %vm372, %v2370, %v2716
        %v3172 = vsel %vm372, %v2371, %v2718
        %v3173 = vsel %vm372, %v2372, %v2720
        %v3174 = vsel %vm372, %v2373, %v2722
        %v3175 = vsel %vm372, %v2374, %v2724
        %v3176 = vsel %vm372, %v2375, %v2726
        %v3177 = vsel %vm372, %v2376, %v2728
        %v3178 = vsel %vm372, %v2377, %v2730
        %v3179 = vsel %vm372, %v2410, %v2796
        %v3180 = vsel %vm372, %v2411, %v2798
        %v3181 = vsel %vm372, %v2412, %v2800
        %v3182 = vsel %vm372, %v2413, %v2802
        %v3183 = vsel %vm372, %v2414, %v2804
        %v3184 = vsel %vm372, %v2415, %v2806
        %v3185 = vsel %vm372, %v2416, %v2808
        %v3186 = vsel %vm372, %v2417, %v2810
        %v3187 = vsel %vm372, %v2418, %v2812
        %v3188 = vsel %vm372, %v2419, %v2814
        %v3189 = vsel %vm372, %v2420, %v2816
        %v3190 = vsel %vm372, %v2421, %v2818
        %v3191 = vsel %vm372, %v2422, %v2820
        %v3192 = vsel %vm372, %v2423, %v2822
        %v3193 = vsel %vm372, %v2424, %v2824
        %v3194 = vsel %vm372, %v2425, %v2826
        %v3195 = vsel %vm372, %v2426, %v2828
        %v3196 = vsel %vm372, %v2427, %v2830
        %v3197 = vsel %vm372, %v2428, %v2832
        %v3198 = vsel %vm372, %v2429, %v2834
        %v3199 = vsel %vm372, %v2430, %v2836
        %v3200 = vsel %vm372, %v2431, %v2838
        %v3201 = vsel %vm372, %v2432, %v2840
        %v3202 = vsel %vm372, %v2433, %v2842
        %v3203 = vsel %vm372, %v2434, %v2844
        %v3204 = vsel %vm372, %v2435, %v2846
        %v3205 = vsel %vm372, %v2436, %v2848
        %v3206 = vsel %vm372, %v2437, %v2850
        %v3207 = vsel %vm372, %v2438, %v2852
        %v3208 = vsel %vm372, %v2439, %v2854
        %v3209 = vsel %vm372, %v2440, %v2856
        %v3210 = vsel %vm372, %v2441, %v2858
        %v3211 = vsel %vm372, %v2474, %v2924
        %v3212 = vsel %vm372, %v2475, %v2926
        %v3213 = vsel %vm372, %v2476, %v2928
        %v3214 = vsel %vm372, %v2477, %v2930
        %v3215 = vsel %vm372, %v2478, %v2932
        %v3216 = vsel %vm372, %v2479, %v2934
        %v3217 = vsel %vm372, %v2480, %v2936
        %v3218 = vsel %vm372, %v2481, %v2938
        %v3219 = vsel %vm372, %v2482, %v2940
        %v3220 = vsel %vm372, %v2483, %v2942
        %v3221 = vsel %vm372, %v2484, %v2944
        %v3222 = vsel %vm372, %v2485, %v2946
        %v3223 = vsel %vm372, %v2486, %v2948
        %v3224 = vsel %vm372, %v2487, %v2950
        %v3225 = vsel %vm372, %v2488, %v2952
        %v3226 = vsel %vm372, %v2489, %v2954
        %v3227 = vsel %vm372, %v2490, %v2956
        %v3228 = vsel %vm372, %v2491, %v2958
        %v3229 = vsel %vm372, %v2492, %v2960
        %v3230 = vsel %vm372, %v2493, %v2962
        %v3231 = vsel %vm372, %v2494, %v2964
        %v3232 = vsel %vm372, %v2495, %v2966
        %v3233 = vsel %vm372, %v2496, %v2968
        %v3234 = vsel %vm372, %v2497, %v2970
        %v3235 = vsel %vm372, %v2498, %v2972
        %v3236 = vsel %vm372, %v2499, %v2974
        %v3237 = vsel %vm372, %v2500, %v2976
        %v3238 = vsel %vm372, %v2501, %v2978
        %v3239 = vsel %vm372, %v2502, %v2980
        %v3240 = vsel %vm372, %v2503, %v2982
        %v3241 = vsel %vm372, %v2504, %v2984
        %v3242 = vsel %vm372, %v2505, %v2986
        %v3243 = vsel %vm372, %v2539, %v3052
        %v3244 = vsel %vm372, %v2540, %v3054
        %v3245 = vsel %vm372, %v2541, %v3056
        %v3246 = vsel %vm372, %v2542, %v3058
        %v3247 = vsel %vm372, %v2543, %v3060
        %v3248 = vsel %vm372, %v2544, %v3062
        %v3249 = vsel %vm372, %v2545, %v3064
        %v3250 = vsel %vm372, %v2546, %v3066
        %v3251 = vsel %vm372, %v2547, %v3068
        %v3252 = vsel %vm372, %v2548, %v3070
        %v3253 = vsel %vm372, %v2549, %v3072
        %v3254 = vsel %vm372, %v2550, %v3074
        %v3255 = vsel %vm372, %v2551, %v3076
        %v3256 = vsel %vm372, %v2552, %v3078
        %v3257 = vsel %vm372, %v2553, %v3080
        %v3258 = vsel %vm372, %v2554, %v3082
        %v3259 = vsel %vm372, %v2555, %v3084
        %v3260 = vsel %vm372, %v2556, %v3086
        %v3261 = vsel %vm372, %v2557, %v3088
        %v3262 = vsel %vm372, %v2558, %v3090
        %v3263 = vsel %vm372, %v2559, %v3092
        %v3264 = vsel %vm372, %v2560, %v3094
        %v3265 = vsel %vm372, %v2561, %v3096
        %v3266 = vsel %vm372, %v2562, %v3098
        %v3267 = vsel %vm372, %v2563, %v3100
        %v3268 = vsel %vm372, %v2564, %v3102
        %v3269 = vsel %vm372, %v2565, %v3104
        %v3270 = vsel %vm372, %v2566, %v3106
        %v3271 = vsel %vm372, %v2567, %v3108
        %v3272 = vsel %vm372, %v2568, %v3110
        %v3273 = vsel %vm372, %v2569, %v3112
        %v3274 = vsel %vm372, %v2570, %v3114
        %v3275 = vpack.c.bf16 %v3148, %v3147
        %v3276 = vpack.c.bf16 %v3180, %v3179
        %v3277 = vpack.c.bf16 %v3212, %v3211
        %v3278 = vpack.c.bf16 %v3244, %v3243
        %v3279 = vpack.c.bf16 %v2604, %v2603
        %v3280 = vpack.c.bf16 %v3150, %v3149
        %v3281 = vpack.c.bf16 %v3182, %v3181
        %v3282 = vpack.c.bf16 %v3214, %v3213
        %v3283 = vpack.c.bf16 %v3246, %v3245
        %v3284 = vpack.c.bf16 %v2606, %v2605
        %v3285 = vpack.c.bf16 %v3152, %v3151
        %v3286 = vpack.c.bf16 %v3184, %v3183
        %v3287 = vpack.c.bf16 %v3216, %v3215
        %v3288 = vpack.c.bf16 %v3248, %v3247
        %v3289 = vpack.c.bf16 %v2608, %v2607
        %v3290 = vpack.c.bf16 %v3154, %v3153
        %v3291 = vpack.c.bf16 %v3186, %v3185
        %v3292 = vpack.c.bf16 %v3218, %v3217
        %v3293 = vpack.c.bf16 %v3250, %v3249
        %v3294 = vpack.c.bf16 %v2610, %v2609
        %v3295 = vpack.c.bf16 %v3156, %v3155
        %v3296 = vpack.c.bf16 %v3188, %v3187
        %v3297 = vpack.c.bf16 %v3220, %v3219
        %v3298 = vpack.c.bf16 %v3252, %v3251
        %v3299 = vpack.c.bf16 %v2612, %v2611
        %v3300 = vpack.c.bf16 %v3158, %v3157
        %v3301 = vpack.c.bf16 %v3190, %v3189
        %v3302 = vpack.c.bf16 %v3222, %v3221
        %v3303 = vpack.c.bf16 %v3254, %v3253
        %v3304 = vpack.c.bf16 %v2614, %v2613
        %v3305 = vpack.c.bf16 %v3160, %v3159
        %v3306 = vpack.c.bf16 %v3192, %v3191
        %v3307 = vpack.c.bf16 %v3224, %v3223
        %v3308 = vpack.c.bf16 %v3256, %v3255
        %v3309 = vpack.c.bf16 %v2616, %v2615
        %v3310 = vpack.c.bf16 %v3162, %v3161
        %v3311 = vpack.c.bf16 %v3194, %v3193
        %v3312 = vpack.c.bf16 %v3226, %v3225
        %v3313 = vpack.c.bf16 %v3258, %v3257
        %v3314 = vpack.c.bf16 %v2618, %v2617
        %v3315 = vpack.c.bf16 %v3164, %v3163
        %v3316 = vpack.c.bf16 %v3196, %v3195
        %v3317 = vpack.c.bf16 %v3228, %v3227
        %v3318 = vpack.c.bf16 %v3260, %v3259
        %v3319 = vpack.c.bf16 %v2620, %v2619
        %v3320 = vpack.c.bf16 %v3166, %v3165
        %v3321 = vpack.c.bf16 %v3198, %v3197
        %v3322 = vpack.c.bf16 %v3230, %v3229
        %v3323 = vpack.c.bf16 %v3262, %v3261
        %v3324 = vpack.c.bf16 %v2622, %v2621
        %v3325 = vpack.c.bf16 %v3168, %v3167
        %v3326 = vpack.c.bf16 %v3200, %v3199
        %v3327 = vpack.c.bf16 %v3232, %v3231
        %v3328 = vpack.c.bf16 %v3264, %v3263
        %v3329 = vpack.c.bf16 %v2624, %v2623
        %v3330 = vpack.c.bf16 %v3170, %v3169
        %v3331 = vpack.c.bf16 %v3202, %v3201
        %v3332 = vpack.c.bf16 %v3234, %v3233
        %v3333 = vpack.c.bf16 %v3266, %v3265
        %v3334 = vpack.c.bf16 %v2626, %v2625
        %v3335 = vpack.c.bf16 %v3172, %v3171
        %v3336 = vpack.c.bf16 %v3204, %v3203
        %v3337 = vpack.c.bf16 %v3236, %v3235
        %v3338 = vpack.c.bf16 %v3268, %v3267
        %v3339 = vpack.c.bf16 %v2628, %v2627
        %v3340 = vpack.c.bf16 %v3174, %v3173
        %v3341 = vpack.c.bf16 %v3206, %v3205
        %v3342 = vpack.c.bf16 %v3238, %v3237
        %v3343 = vpack.c.bf16 %v3270, %v3269
        %v3344 = vpack.c.bf16 %v2630, %v2629
        %v3345 = vpack.c.bf16 %v3176, %v3175
        %v3346 = vpack.c.bf16 %v3208, %v3207
        %v3347 = vpack.c.bf16 %v3240, %v3239
        %v3348 = vpack.c.bf16 %v3272, %v3271
        %v3349 = vpack.c.bf16 %v2632, %v2631
        %v3350 = vpack.c.bf16 %v3178, %v3177
        %v3351 = vpack.c.bf16 %v3210, %v3209
        %v3352 = vpack.c.bf16 %v3242, %v3241
        %v3353 = vpack.c.bf16 %v3274, %v3273
        %v3354 = vpack.c.bf16 %v2634, %v2633
        %v3355 = vld [vmem:[%s3] sm:$0xf]
        %v3356 = vld [vmem:[%s3 + $0x4] sm:$0xf]
        %v3357 = vld [vmem:[%s3 + $0x8] sm:$0xf]
        %v3358 = vld [vmem:[%s3 + $0xc] sm:$0xf]
        %v3359 = vld [vmem:[%s3 + $0x10] sm:$0xf]
        %v3360 = vld [vmem:[%s3 + $0x14] sm:$0xf]
        %v3361 = vld [vmem:[%s3 + $0x18] sm:$0xf]
        %v3362 = vld [vmem:[%s3 + $0x1c] sm:$0xf]
        %v3363 = vld [vmem:[%s3 + $0x20] sm:$0xf]
        %v3364 = vld [vmem:[%s3 + $0x24] sm:$0xf]
        %v3365 = vld [vmem:[%s3 + $0x28] sm:$0xf]
        %v3366 = vld [vmem:[%s3 + $0x2c] sm:$0xf]
        %v3367 = vld [vmem:[%s3 + $0x30] sm:$0xf]
        %v3368 = vld [vmem:[%s3 + $0x34] sm:$0xf]
        %v3369 = vld [vmem:[%s3 + $0x38] sm:$0xf]
        %v3370 = vld [vmem:[%s3 + $0x3c] sm:$0xf]
        %v3371 = vld [vmem:[%s3 + $0x40] sm:$0xf]
        %v3372 = vld [vmem:[%s3 + $0x44] sm:$0xf]
        %v3373 = vld [vmem:[%s3 + $0x48] sm:$0xf]
        %v3374 = vld [vmem:[%s3 + $0x4c] sm:$0xf]
        %v3375 = vld [vmem:[%s3 + $0x50] sm:$0xf]
        %v3376 = vld [vmem:[%s3 + $0x54] sm:$0xf]
        %v3377 = vld [vmem:[%s3 + $0x58] sm:$0xf]
        %v3378 = vld [vmem:[%s3 + $0x5c] sm:$0xf]
        %v3379 = vld [vmem:[%s3 + $0x60] sm:$0xf]
        %v3380 = vld [vmem:[%s3 + $0x64] sm:$0xf]
        %v3381 = vld [vmem:[%s3 + $0x68] sm:$0xf]
        %v3382 = vld [vmem:[%s3 + $0x6c] sm:$0xf]
        %v3383 = vld [vmem:[%s3 + $0x70] sm:$0xf]
        %v3384 = vld [vmem:[%s3 + $0x74] sm:$0xf]
        %v3385 = vld [vmem:[%s3 + $0x78] sm:$0xf]
        %v3386 = vld [vmem:[%s3 + $0x7c] sm:$0xf]
        %v3387 = vld [vmem:[%s3 + $0x80] sm:$0xf]
        %v3388 = vld [vmem:[%s3 + $0x84] sm:$0xf]
        %v3389 = vld [vmem:[%s3 + $0x88] sm:$0xf]
        %v3390 = vld [vmem:[%s3 + $0x8c] sm:$0xf]
        %v3391 = vld [vmem:[%s3 + $0x90] sm:$0xf]
        %v3392 = vld [vmem:[%s3 + $0x94] sm:$0xf]
        %v3393 = vld [vmem:[%s3 + $0x98] sm:$0xf]
        %v3394 = vld [vmem:[%s3 + $0x9c] sm:$0xf]
        %v3395 = vld [vmem:[%s3 + $0xa0] sm:$0xf]
        %v3396 = vld [vmem:[%s3 + $0xa4] sm:$0xf]
        %v3397 = vld [vmem:[%s3 + $0xa8] sm:$0xf]
        %v3398 = vld [vmem:[%s3 + $0xac] sm:$0xf]
        %v3399 = vld [vmem:[%s3 + $0xb0] sm:$0xf]
        %v3400 = vld [vmem:[%s3 + $0xb4] sm:$0xf]
        %v3401 = vld [vmem:[%s3 + $0xb8] sm:$0xf]
        %v3402 = vld [vmem:[%s3 + $0xbc] sm:$0xf]
        %v3403 = vld [vmem:[%s3 + $0xc0] sm:$0xf]
        %v3404 = vld [vmem:[%s3 + $0xc4] sm:$0xf]
        %v3405 = vld [vmem:[%s3 + $0xc8] sm:$0xf]
        %v3406 = vld [vmem:[%s3 + $0xcc] sm:$0xf]
        %v3407 = vld [vmem:[%s3 + $0xd0] sm:$0xf]
        %v3408 = vld [vmem:[%s3 + $0xd4] sm:$0xf]
        %v3409 = vld [vmem:[%s3 + $0xd8] sm:$0xf]
        %v3410 = vld [vmem:[%s3 + $0xdc] sm:$0xf]
        %v3411 = vld [vmem:[%s3 + $0xe0] sm:$0xf]
        %v3412 = vld [vmem:[%s3 + $0xe4] sm:$0xf]
        %v3413 = vld [vmem:[%s3 + $0xe8] sm:$0xf]
        %v3414 = vld [vmem:[%s3 + $0xec] sm:$0xf]
        %v3415 = vld [vmem:[%s3 + $0xf0] sm:$0xf]
        %v3416 = vld [vmem:[%s3 + $0xf4] sm:$0xf]
        %v3417 = vld [vmem:[%s3 + $0xf8] sm:$0xf]
        %v3418 = vld [vmem:[%s3 + $0xfc] sm:$0xf]
        %v3419 = vld [vmem:[%s3 + $0x100] sm:$0xf]
        %v3420 = vld [vmem:[%s3 + $0x104] sm:$0xf]
        %v3421 = vld [vmem:[%s3 + $0x108] sm:$0xf]
        %v3422 = vld [vmem:[%s3 + $0x10c] sm:$0xf]
        %v3423 = vld [vmem:[%s3 + $0x110] sm:$0xf]
        %v3424 = vld [vmem:[%s3 + $0x114] sm:$0xf]
        %v3425 = vld [vmem:[%s3 + $0x118] sm:$0xf]
        %v3426 = vld [vmem:[%s3 + $0x11c] sm:$0xf]
        %v3427 = vld [vmem:[%s4] sm:$0x1]
        %v3429 = vperm.slane %v3427, 0
        %v3503 = vunpack.c.l.b16 %v3355
        %v3504 = vunpack.c.l.b16 %v3356
        %v3505 = vunpack.c.l.b16 %v3357
        %v3506 = vunpack.c.l.b16 %v3358
        %v3507 = vunpack.c.l.b16 %v3359
        %v3508 = vunpack.c.l.b16 %v3360
        %v3509 = vunpack.c.l.b16 %v3361
        %v3510 = vunpack.c.l.b16 %v3362
        %v3511 = vunpack.c.l.b16 %v3363
        %v3512 = vunpack.c.l.b16 %v3364
        %v3513 = vunpack.c.l.b16 %v3365
        %v3514 = vunpack.c.l.b16 %v3366
        %v3515 = vunpack.c.l.b16 %v3367
        %v3516 = vunpack.c.l.b16 %v3368
        %v3517 = vunpack.c.l.b16 %v3369
        %v3518 = vunpack.c.l.b16 %v3370
        %v3519 = vunpack.c.l.b16 %v3371
        %v3520 = vunpack.c.l.b16 %v3372
        %v3521 = vunpack.c.l.b16 %v3373
        %v3522 = vunpack.c.l.b16 %v3374
        %v3523 = vunpack.c.l.b16 %v3375
        %v3524 = vunpack.c.l.b16 %v3376
        %v3525 = vunpack.c.l.b16 %v3377
        %v3526 = vunpack.c.l.b16 %v3378
        %v3527 = vunpack.c.l.b16 %v3379
        %v3528 = vunpack.c.l.b16 %v3380
        %v3529 = vunpack.c.l.b16 %v3381
        %v3530 = vunpack.c.l.b16 %v3382
        %v3531 = vunpack.c.l.b16 %v3383
        %v3532 = vunpack.c.l.b16 %v3384
        %v3533 = vunpack.c.l.b16 %v3385
        %v3534 = vunpack.c.l.b16 %v3386
        %v3535 = vunpack.c.l.b16 %v3387
        %v3536 = vunpack.c.l.b16 %v3388
        %v3537 = vunpack.c.l.b16 %v3389
        %v3538 = vunpack.c.l.b16 %v3390
        %v3539 = vunpack.c.l.b16 %v3391
        %v3540 = vunpack.c.l.b16 %v3392
        %v3541 = vunpack.c.l.b16 %v3393
        %v3542 = vunpack.c.l.b16 %v3394
        %v3543 = vunpack.c.l.b16 %v3395
        %v3544 = vunpack.c.l.b16 %v3396
        %v3545 = vunpack.c.l.b16 %v3397
        %v3546 = vunpack.c.l.b16 %v3398
        %v3547 = vunpack.c.l.b16 %v3399
        %v3548 = vunpack.c.l.b16 %v3400
        %v3549 = vunpack.c.l.b16 %v3401
        %v3550 = vunpack.c.l.b16 %v3402
        %v3551 = vunpack.c.l.b16 %v3403
        %v3552 = vunpack.c.l.b16 %v3404
        %v3553 = vunpack.c.l.b16 %v3405
        %v3554 = vunpack.c.l.b16 %v3406
        %v3555 = vunpack.c.l.b16 %v3407
        %v3556 = vunpack.c.l.b16 %v3408
        %v3557 = vunpack.c.l.b16 %v3409
        %v3558 = vunpack.c.l.b16 %v3410
        %v3559 = vunpack.c.l.b16 %v3411
        %v3560 = vunpack.c.l.b16 %v3412
        %v3561 = vunpack.c.l.b16 %v3413
        %v3562 = vunpack.c.l.b16 %v3414
        %v3563 = vunpack.c.l.b16 %v3415
        %v3564 = vunpack.c.l.b16 %v3416
        %v3565 = vunpack.c.l.b16 %v3417
        %v3566 = vunpack.c.l.b16 %v3418
        %v3567 = vunpack.c.l.b16 %v3419
        %v3568 = vunpack.c.l.b16 %v3420
        %v3569 = vunpack.c.l.b16 %v3421
        %v3570 = vunpack.c.l.b16 %v3422
        %v3571 = vunpack.c.l.b16 %v3423
        %v3572 = vunpack.c.l.b16 %v3424
        %v3573 = vunpack.c.l.b16 %v3425
        %v3574 = vunpack.c.l.b16 %v3426
        %v3575 = vpack.c.b16 %v3504, %v3503
        %v3576 = vpack.c.b16 %v3506, %v3505
        %v3577 = vpack.c.b16 %v3508, %v3507
        %v3578 = vpack.c.b16 %v3510, %v3509
        %v3579 = vpack.c.b16 %v3512, %v3511
        %v3580 = vpack.c.b16 %v3514, %v3513
        %v3581 = vpack.c.b16 %v3516, %v3515
        %v3582 = vpack.c.b16 %v3518, %v3517
        %v3583 = vpack.c.b16 %v3520, %v3519
        %v3584 = vpack.c.b16 %v3522, %v3521
        %v3585 = vpack.c.b16 %v3524, %v3523
        %v3586 = vpack.c.b16 %v3526, %v3525
        %v3587 = vpack.c.b16 %v3528, %v3527
        %v3588 = vpack.c.b16 %v3530, %v3529
        %v3589 = vpack.c.b16 %v3532, %v3531
        %v3590 = vpack.c.b16 %v3534, %v3533
        %v3591 = vpack.c.b16 %v3536, %v3535
        %v3592 = vpack.c.b16 %v3538, %v3537
        %v3593 = vpack.c.b16 %v3540, %v3539
        %v3594 = vpack.c.b16 %v3542, %v3541
        %v3595 = vpack.c.b16 %v3544, %v3543
        %v3596 = vpack.c.b16 %v3546, %v3545
        %v3597 = vpack.c.b16 %v3548, %v3547
        %v3598 = vpack.c.b16 %v3550, %v3549
        %v3599 = vpack.c.b16 %v3552, %v3551
        %v3600 = vpack.c.b16 %v3554, %v3553
        %v3601 = vpack.c.b16 %v3556, %v3555
        %v3602 = vpack.c.b16 %v3558, %v3557
        %v3603 = vpack.c.b16 %v3560, %v3559
        %v3604 = vpack.c.b16 %v3562, %v3561
        %v3605 = vpack.c.b16 %v3564, %v3563
        %v3606 = vpack.c.b16 %v3566, %v3565
        %v3607 = vpack.c.b16 %v3568, %v3567
        %v3608 = vpack.c.b16 %v3570, %v3569
        %v3609 = vpack.c.b16 %v3572, %v3571
        %v3610 = vpack.c.b16 %v3574, %v3573
        %v3648 = vsel %vm372, %v3279, 0
        %v3651 = vsel %vm372, %v3284, 0
        %v3654 = vsel %vm372, %v3289, 0
        %v3657 = vsel %vm372, %v3294, 0
        %v3660 = vsel %vm372, %v3299, 0
        %v3663 = vsel %vm372, %v3304, 0
        %v3666 = vsel %vm372, %v3309, 0
        %v3669 = vsel %vm372, %v3314, 0
        %v3672 = vsel %vm372, %v3319, 0
        %v3675 = vsel %vm372, %v3324, 0
        %v3678 = vsel %vm372, %v3329, 0
        %v3681 = vsel %vm372, %v3334, 0
        %v3684 = vsel %vm372, %v3339, 0
        %v3687 = vsel %vm372, %v3344, 0
        %v3690 = vsel %vm372, %v3349, 0
        %v3693 = vsel %vm372, %v3354, 0
        %3695 = vmatpush.bf16.msra.mxu0 %v3582
        %3696 = vmatpush.bf16.msra.mxu0 %v3581
        %3697 = vmatpush.bf16.msra.mxu0 %v3580
        %3698 = vmatpush.bf16.msra.mxu0 %v3579
        %3699 = vmatpush.bf16.msra.mxu0 %v3578
        %3700 = vmatpush.bf16.msra.mxu0 %v3577
        %3701 = vmatpush.bf16.msra.mxu0 %v3576
        %3702 = vmatpush.bf16.msra.mxu0 %v3575
        %3703 = vmatmul.bf16.gmra.mxu0 %v3275
        %v3704 = vpop.f32.mrf.mxu0
        %v3705 = vadd.f32 %v3429, %v3704
        %v3706 = vpop.f32.mrf.mxu0
        %v3707 = vadd.f32 %v3429, %v3706
        %3708 = vmatmul.bf16.gmra.mxu0 %v3280
        %v3709 = vpop.f32.mrf.mxu0
        %v3710 = vadd.f32 %v3429, %v3709
        %v3711 = vpop.f32.mrf.mxu0
        %v3712 = vadd.f32 %v3429, %v3711
        %3713 = vmatmul.bf16.gmra.mxu0 %v3285
        %v3714 = vpop.f32.mrf.mxu0
        %v3715 = vadd.f32 %v3429, %v3714
        %v3716 = vpop.f32.mrf.mxu0
        %v3717 = vadd.f32 %v3429, %v3716
        %3718 = vmatmul.bf16.gmra.mxu0 %v3290
        %v3719 = vpop.f32.mrf.mxu0
        %v3720 = vadd.f32 %v3429, %v3719
        %v3721 = vpop.f32.mrf.mxu0
        %v3722 = vadd.f32 %v3429, %v3721
        %3723 = vmatmul.bf16.gmra.mxu0 %v3295
        %v3724 = vpop.f32.mrf.mxu0
        %v3725 = vadd.f32 %v3429, %v3724
        %v3726 = vpop.f32.mrf.mxu0
        %v3727 = vadd.f32 %v3429, %v3726
        %3728 = vmatmul.bf16.gmra.mxu0 %v3300
        %v3729 = vpop.f32.mrf.mxu0
        %v3730 = vadd.f32 %v3429, %v3729
        %v3731 = vpop.f32.mrf.mxu0
        %v3732 = vadd.f32 %v3429, %v3731
        %3733 = vmatmul.bf16.gmra.mxu0 %v3305
        %v3734 = vpop.f32.mrf.mxu0
        %v3735 = vadd.f32 %v3429, %v3734
        %v3736 = vpop.f32.mrf.mxu0
        %v3737 = vadd.f32 %v3429, %v3736
        %3738 = vmatmul.bf16.gmra.mxu0 %v3310
        %v3739 = vpop.f32.mrf.mxu0
        %v3740 = vadd.f32 %v3429, %v3739
        %v3741 = vpop.f32.mrf.mxu0
        %v3742 = vadd.f32 %v3429, %v3741
        %3743 = vmatmul.bf16.gmra.mxu0 %v3315
        %v3744 = vpop.f32.mrf.mxu0
        %v3745 = vadd.f32 %v3429, %v3744
        %v3746 = vpop.f32.mrf.mxu0
        %v3747 = vadd.f32 %v3429, %v3746
        %3748 = vmatmul.bf16.gmra.mxu0 %v3320
        %v3749 = vpop.f32.mrf.mxu0
        %v3750 = vadd.f32 %v3429, %v3749
        %v3751 = vpop.f32.mrf.mxu0
        %v3752 = vadd.f32 %v3429, %v3751
        %3753 = vmatmul.bf16.gmra.mxu0 %v3325
        %v3754 = vpop.f32.mrf.mxu0
        %v3755 = vadd.f32 %v3429, %v3754
        %v3756 = vpop.f32.mrf.mxu0
        %v3757 = vadd.f32 %v3429, %v3756
        %3758 = vmatmul.bf16.gmra.mxu0 %v3330
        %v3759 = vpop.f32.mrf.mxu0
        %v3760 = vadd.f32 %v3429, %v3759
        %v3761 = vpop.f32.mrf.mxu0
        %v3762 = vadd.f32 %v3429, %v3761
        %3763 = vmatmul.bf16.gmra.mxu0 %v3335
        %v3764 = vpop.f32.mrf.mxu0
        %v3765 = vadd.f32 %v3429, %v3764
        %v3766 = vpop.f32.mrf.mxu0
        %v3767 = vadd.f32 %v3429, %v3766
        %3768 = vmatmul.bf16.gmra.mxu0 %v3340
        %v3769 = vpop.f32.mrf.mxu0
        %v3770 = vadd.f32 %v3429, %v3769
        %v3771 = vpop.f32.mrf.mxu0
        %v3772 = vadd.f32 %v3429, %v3771
        %3773 = vmatmul.bf16.gmra.mxu0 %v3345
        %v3774 = vpop.f32.mrf.mxu0
        %v3775 = vadd.f32 %v3429, %v3774
        %v3776 = vpop.f32.mrf.mxu0
        %v3777 = vadd.f32 %v3429, %v3776
        %3778 = vmatmul.bf16.gmra.mxu0 %v3350
        %v3779 = vpop.f32.mrf.mxu0
        %v3780 = vadd.f32 %v3429, %v3779
        %v3781 = vpop.f32.mrf.mxu0
        %v3782 = vadd.f32 %v3429, %v3781
        %3783 = vdwg.mxu0
        %3784 = vmatpush.bf16.msra.mxu0 %v3590
        %3785 = vmatpush.bf16.msra.mxu0 %v3589
        %3786 = vmatpush.bf16.msra.mxu0 %v3588
        %3787 = vmatpush.bf16.msra.mxu0 %v3587
        %3788 = vmatpush.bf16.msra.mxu0 %v3586
        %3789 = vmatpush.bf16.msra.mxu0 %v3585
        %3790 = vmatpush.bf16.msra.mxu0 %v3584
        %3791 = vmatpush.bf16.msra.mxu0 %v3583
        %3792 = vmatmul.bf16.gmra.mxu0 %v3276
        %v3793 = vpop.f32.mrf.mxu0
        %v3794 = vadd.f32 %v3705, %v3793
        %v3795 = vpop.f32.mrf.mxu0
        %v3796 = vadd.f32 %v3707, %v3795
        %3797 = vmatmul.bf16.gmra.mxu0 %v3281
        %v3798 = vpop.f32.mrf.mxu0
        %v3799 = vadd.f32 %v3710, %v3798
        %v3800 = vpop.f32.mrf.mxu0
        %v3801 = vadd.f32 %v3712, %v3800
        %3802 = vmatmul.bf16.gmra.mxu0 %v3286
        %v3803 = vpop.f32.mrf.mxu0
        %v3804 = vadd.f32 %v3715, %v3803
        %v3805 = vpop.f32.mrf.mxu0
        %v3806 = vadd.f32 %v3717, %v3805
        %3807 = vmatmul.bf16.gmra.mxu0 %v3291
        %v3808 = vpop.f32.mrf.mxu0
        %v3809 = vadd.f32 %v3720, %v3808
        %v3810 = vpop.f32.mrf.mxu0
        %v3811 = vadd.f32 %v3722, %v3810
        %3812 = vmatmul.bf16.gmra.mxu0 %v3296
        %v3813 = vpop.f32.mrf.mxu0
        %v3814 = vadd.f32 %v3725, %v3813
        %v3815 = vpop.f32.mrf.mxu0
        %v3816 = vadd.f32 %v3727, %v3815
        %3817 = vmatmul.bf16.gmra.mxu0 %v3301
        %v3818 = vpop.f32.mrf.mxu0
        %v3819 = vadd.f32 %v3730, %v3818
        %v3820 = vpop.f32.mrf.mxu0
        %v3821 = vadd.f32 %v3732, %v3820
        %3822 = vmatmul.bf16.gmra.mxu0 %v3306
        %v3823 = vpop.f32.mrf.mxu0
        %v3824 = vadd.f32 %v3735, %v3823
        %v3825 = vpop.f32.mrf.mxu0
        %v3826 = vadd.f32 %v3737, %v3825
        %3827 = vmatmul.bf16.gmra.mxu0 %v3311
        %v3828 = vpop.f32.mrf.mxu0
        %v3829 = vadd.f32 %v3740, %v3828
        %v3830 = vpop.f32.mrf.mxu0
        %v3831 = vadd.f32 %v3742, %v3830
        %3832 = vmatmul.bf16.gmra.mxu0 %v3316
        %v3833 = vpop.f32.mrf.mxu0
        %v3834 = vadd.f32 %v3745, %v3833
        %v3835 = vpop.f32.mrf.mxu0
        %v3836 = vadd.f32 %v3747, %v3835
        %3837 = vmatmul.bf16.gmra.mxu0 %v3321
        %v3838 = vpop.f32.mrf.mxu0
        %v3839 = vadd.f32 %v3750, %v3838
        %v3840 = vpop.f32.mrf.mxu0
        %v3841 = vadd.f32 %v3752, %v3840
        %3842 = vmatmul.bf16.gmra.mxu0 %v3326
        %v3843 = vpop.f32.mrf.mxu0
        %v3844 = vadd.f32 %v3755, %v3843
        %v3845 = vpop.f32.mrf.mxu0
        %v3846 = vadd.f32 %v3757, %v3845
        %3847 = vmatmul.bf16.gmra.mxu0 %v3331
        %v3848 = vpop.f32.mrf.mxu0
        %v3849 = vadd.f32 %v3760, %v3848
        %v3850 = vpop.f32.mrf.mxu0
        %v3851 = vadd.f32 %v3762, %v3850
        %3852 = vmatmul.bf16.gmra.mxu0 %v3336
        %v3853 = vpop.f32.mrf.mxu0
        %v3854 = vadd.f32 %v3765, %v3853
        %v3855 = vpop.f32.mrf.mxu0
        %v3856 = vadd.f32 %v3767, %v3855
        %3857 = vmatmul.bf16.gmra.mxu0 %v3341
        %v3858 = vpop.f32.mrf.mxu0
        %v3859 = vadd.f32 %v3770, %v3858
        %v3860 = vpop.f32.mrf.mxu0
        %v3861 = vadd.f32 %v3772, %v3860
        %3862 = vmatmul.bf16.gmra.mxu0 %v3346
        %v3863 = vpop.f32.mrf.mxu0
        %v3864 = vadd.f32 %v3775, %v3863
        %v3865 = vpop.f32.mrf.mxu0
        %v3866 = vadd.f32 %v3777, %v3865
        %3867 = vmatmul.bf16.gmra.mxu0 %v3351
        %v3868 = vpop.f32.mrf.mxu0
        %v3869 = vadd.f32 %v3780, %v3868
        %v3870 = vpop.f32.mrf.mxu0
        %v3871 = vadd.f32 %v3782, %v3870
        %3872 = vdwg.mxu0
        %3873 = vmatpush.bf16.msra.mxu0 %v3598
        %3874 = vmatpush.bf16.msra.mxu0 %v3597
        %3875 = vmatpush.bf16.msra.mxu0 %v3596
        %3876 = vmatpush.bf16.msra.mxu0 %v3595
        %3877 = vmatpush.bf16.msra.mxu0 %v3594
        %3878 = vmatpush.bf16.msra.mxu0 %v3593
        %3879 = vmatpush.bf16.msra.mxu0 %v3592
        %3880 = vmatpush.bf16.msra.mxu0 %v3591
        %3881 = vmatmul.bf16.gmra.mxu0 %v3277
        %v3882 = vpop.f32.mrf.mxu0
        %v3883 = vadd.f32 %v3794, %v3882
        %v3884 = vpop.f32.mrf.mxu0
        %v3885 = vadd.f32 %v3796, %v3884
        %3886 = vmatmul.bf16.gmra.mxu0 %v3282
        %v3887 = vpop.f32.mrf.mxu0
        %v3888 = vadd.f32 %v3799, %v3887
        %v3889 = vpop.f32.mrf.mxu0
        %v3890 = vadd.f32 %v3801, %v3889
        %3891 = vmatmul.bf16.gmra.mxu0 %v3287
        %v3892 = vpop.f32.mrf.mxu0
        %v3893 = vadd.f32 %v3804, %v3892
        %v3894 = vpop.f32.mrf.mxu0
        %v3895 = vadd.f32 %v3806, %v3894
        %3896 = vmatmul.bf16.gmra.mxu0 %v3292
        %v3897 = vpop.f32.mrf.mxu0
        %v3898 = vadd.f32 %v3809, %v3897
        %v3899 = vpop.f32.mrf.mxu0
        %v3900 = vadd.f32 %v3811, %v3899
        %3901 = vmatmul.bf16.gmra.mxu0 %v3297
        %v3902 = vpop.f32.mrf.mxu0
        %v3903 = vadd.f32 %v3814, %v3902
        %v3904 = vpop.f32.mrf.mxu0
        %v3905 = vadd.f32 %v3816, %v3904
        %3906 = vmatmul.bf16.gmra.mxu0 %v3302
        %v3907 = vpop.f32.mrf.mxu0
        %v3908 = vadd.f32 %v3819, %v3907
        %v3909 = vpop.f32.mrf.mxu0
        %v3910 = vadd.f32 %v3821, %v3909
        %3911 = vmatmul.bf16.gmra.mxu0 %v3307
        %v3912 = vpop.f32.mrf.mxu0
        %v3913 = vadd.f32 %v3824, %v3912
        %v3914 = vpop.f32.mrf.mxu0
        %v3915 = vadd.f32 %v3826, %v3914
        %3916 = vmatmul.bf16.gmra.mxu0 %v3312
        %v3917 = vpop.f32.mrf.mxu0
        %v3918 = vadd.f32 %v3829, %v3917
        %v3919 = vpop.f32.mrf.mxu0
        %v3920 = vadd.f32 %v3831, %v3919
        %3921 = vmatmul.bf16.gmra.mxu0 %v3317
        %v3922 = vpop.f32.mrf.mxu0
        %v3923 = vadd.f32 %v3834, %v3922
        %v3924 = vpop.f32.mrf.mxu0
        %v3925 = vadd.f32 %v3836, %v3924
        %3926 = vmatmul.bf16.gmra.mxu0 %v3322
        %v3927 = vpop.f32.mrf.mxu0
        %v3928 = vadd.f32 %v3839, %v3927
        %v3929 = vpop.f32.mrf.mxu0
        %v3930 = vadd.f32 %v3841, %v3929
        %3931 = vmatmul.bf16.gmra.mxu0 %v3327
        %v3932 = vpop.f32.mrf.mxu0
        %v3933 = vadd.f32 %v3844, %v3932
        %v3934 = vpop.f32.mrf.mxu0
        %v3935 = vadd.f32 %v3846, %v3934
        %3936 = vmatmul.bf16.gmra.mxu0 %v3332
        %v3937 = vpop.f32.mrf.mxu0
        %v3938 = vadd.f32 %v3849, %v3937
        %v3939 = vpop.f32.mrf.mxu0
        %v3940 = vadd.f32 %v3851, %v3939
        %3941 = vmatmul.bf16.gmra.mxu0 %v3337
        %v3942 = vpop.f32.mrf.mxu0
        %v3943 = vadd.f32 %v3854, %v3942
        %v3944 = vpop.f32.mrf.mxu0
        %v3945 = vadd.f32 %v3856, %v3944
        %3946 = vmatmul.bf16.gmra.mxu0 %v3342
        %v3947 = vpop.f32.mrf.mxu0
        %v3948 = vadd.f32 %v3859, %v3947
        %v3949 = vpop.f32.mrf.mxu0
        %v3950 = vadd.f32 %v3861, %v3949
        %3951 = vmatmul.bf16.gmra.mxu0 %v3347
        %v3952 = vpop.f32.mrf.mxu0
        %v3953 = vadd.f32 %v3864, %v3952
        %v3954 = vpop.f32.mrf.mxu0
        %v3955 = vadd.f32 %v3866, %v3954
        %3956 = vmatmul.bf16.gmra.mxu0 %v3352
        %v3957 = vpop.f32.mrf.mxu0
        %v3958 = vadd.f32 %v3869, %v3957
        %v3959 = vpop.f32.mrf.mxu0
        %v3960 = vadd.f32 %v3871, %v3959
        %3961 = vdwg.mxu0
        %3962 = vmatpush.bf16.msra.mxu0 %v3606
        %3963 = vmatpush.bf16.msra.mxu0 %v3605
        %3964 = vmatpush.bf16.msra.mxu0 %v3604
        %3965 = vmatpush.bf16.msra.mxu0 %v3603
        %3966 = vmatpush.bf16.msra.mxu0 %v3602
        %3967 = vmatpush.bf16.msra.mxu0 %v3601
        %3968 = vmatpush.bf16.msra.mxu0 %v3600
        %3969 = vmatpush.bf16.msra.mxu0 %v3599
        %3970 = vmatmul.bf16.gmra.mxu0 %v3278
        %v3971 = vpop.f32.mrf.mxu0
        %v3972 = vadd.f32 %v3883, %v3971
        %v3973 = vpop.f32.mrf.mxu0
        %v3974 = vadd.f32 %v3885, %v3973
        %3975 = vmatmul.bf16.gmra.mxu0 %v3283
        %v3976 = vpop.f32.mrf.mxu0
        %v3977 = vadd.f32 %v3888, %v3976
        %v3978 = vpop.f32.mrf.mxu0
        %v3979 = vadd.f32 %v3890, %v3978
        %3980 = vmatmul.bf16.gmra.mxu0 %v3288
        %v3981 = vpop.f32.mrf.mxu0
        %v3982 = vadd.f32 %v3893, %v3981
        %v3983 = vpop.f32.mrf.mxu0
        %v3984 = vadd.f32 %v3895, %v3983
        %3985 = vmatmul.bf16.gmra.mxu0 %v3293
        %v3986 = vpop.f32.mrf.mxu0
        %v3987 = vadd.f32 %v3898, %v3986
        %v3988 = vpop.f32.mrf.mxu0
        %v3989 = vadd.f32 %v3900, %v3988
        %3990 = vmatmul.bf16.gmra.mxu0 %v3298
        %v3991 = vpop.f32.mrf.mxu0
        %v3992 = vadd.f32 %v3903, %v3991
        %v3993 = vpop.f32.mrf.mxu0
        %v3994 = vadd.f32 %v3905, %v3993
        %3995 = vmatmul.bf16.gmra.mxu0 %v3303
        %v3996 = vpop.f32.mrf.mxu0
        %v3997 = vadd.f32 %v3908, %v3996
        %v3998 = vpop.f32.mrf.mxu0
        %v3999 = vadd.f32 %v3910, %v3998
        %4000 = vmatmul.bf16.gmra.mxu0 %v3308
        %v4001 = vpop.f32.mrf.mxu0
        %v4002 = vadd.f32 %v3913, %v4001
        %v4003 = vpop.f32.mrf.mxu0
        %v4004 = vadd.f32 %v3915, %v4003
        %4005 = vmatmul.bf16.gmra.mxu0 %v3313
        %v4006 = vpop.f32.mrf.mxu0
        %v4007 = vadd.f32 %v3918, %v4006
        %v4008 = vpop.f32.mrf.mxu0
        %v4009 = vadd.f32 %v3920, %v4008
        %4010 = vmatmul.bf16.gmra.mxu0 %v3318
        %v4011 = vpop.f32.mrf.mxu0
        %v4012 = vadd.f32 %v3923, %v4011
        %v4013 = vpop.f32.mrf.mxu0
        %v4014 = vadd.f32 %v3925, %v4013
        %4015 = vmatmul.bf16.gmra.mxu0 %v3323
        %v4016 = vpop.f32.mrf.mxu0
        %v4017 = vadd.f32 %v3928, %v4016
        %v4018 = vpop.f32.mrf.mxu0
        %v4019 = vadd.f32 %v3930, %v4018
        %4020 = vmatmul.bf16.gmra.mxu0 %v3328
        %v4021 = vpop.f32.mrf.mxu0
        %v4022 = vadd.f32 %v3933, %v4021
        %v4023 = vpop.f32.mrf.mxu0
        %v4024 = vadd.f32 %v3935, %v4023
        %4025 = vmatmul.bf16.gmra.mxu0 %v3333
        %v4026 = vpop.f32.mrf.mxu0
        %v4027 = vadd.f32 %v3938, %v4026
        %v4028 = vpop.f32.mrf.mxu0
        %v4029 = vadd.f32 %v3940, %v4028
        %4030 = vmatmul.bf16.gmra.mxu0 %v3338
        %v4031 = vpop.f32.mrf.mxu0
        %v4032 = vadd.f32 %v3943, %v4031
        %v4033 = vpop.f32.mrf.mxu0
        %v4034 = vadd.f32 %v3945, %v4033
        %4035 = vmatmul.bf16.gmra.mxu0 %v3343
        %v4036 = vpop.f32.mrf.mxu0
        %v4037 = vadd.f32 %v3948, %v4036
        %v4038 = vpop.f32.mrf.mxu0
        %v4039 = vadd.f32 %v3950, %v4038
        %4040 = vmatmul.bf16.gmra.mxu0 %v3348
        %v4041 = vpop.f32.mrf.mxu0
        %v4042 = vadd.f32 %v3953, %v4041
        %v4043 = vpop.f32.mrf.mxu0
        %v4044 = vadd.f32 %v3955, %v4043
        %4045 = vmatmul.bf16.gmra.mxu0 %v3353
        %v4046 = vpop.f32.mrf.mxu0
        %v4047 = vadd.f32 %v3958, %v4046
        %v4048 = vpop.f32.mrf.mxu0
        %v4049 = vadd.f32 %v3960, %v4048
        %4050 = vdwg.mxu0
        %4051 = vmatpush.bf16.msra.mxu0 0
        %4052 = vmatpush.bf16.msra.mxu0 0
        %4053 = vmatpush.bf16.msra.mxu0 0
        %4054 = vmatpush.bf16.msra.mxu0 0
        %4055 = vmatpush.bf16.msra.mxu0 %v3610
        %4056 = vmatpush.bf16.msra.mxu0 %v3609
        %4057 = vmatpush.bf16.msra.mxu0 %v3608
        %4058 = vmatpush.bf16.msra.mxu0 %v3607
        %4059 = vmatmul.bf16.gmra.mxu0 %v3648
        %v4060 = vpop.f32.mrf.mxu0
        %v4061 = vadd.f32 %v3972, %v4060
        %v4062 = vpop.f32.mrf.mxu0
        %v4063 = vadd.f32 %v3974, %v4062
        %4064 = vmatmul.bf16.gmra.mxu0 %v3651
        %v4065 = vpop.f32.mrf.mxu0
        %v4066 = vadd.f32 %v3977, %v4065
        %v4067 = vpop.f32.mrf.mxu0
        %v4068 = vadd.f32 %v3979, %v4067
        %4069 = vmatmul.bf16.gmra.mxu0 %v3654
        %v4070 = vpop.f32.mrf.mxu0
        %v4071 = vadd.f32 %v3982, %v4070
        %v4072 = vpop.f32.mrf.mxu0
        %v4073 = vadd.f32 %v3984, %v4072
        %4074 = vmatmul.bf16.gmra.mxu0 %v3657
        %v4075 = vpop.f32.mrf.mxu0
        %v4076 = vadd.f32 %v3987, %v4075
        %v4077 = vpop.f32.mrf.mxu0
        %v4078 = vadd.f32 %v3989, %v4077
        %4079 = vmatmul.bf16.gmra.mxu0 %v3660
        %v4080 = vpop.f32.mrf.mxu0
        %v4081 = vadd.f32 %v3992, %v4080
        %v4082 = vpop.f32.mrf.mxu0
        %v4083 = vadd.f32 %v3994, %v4082
        %4084 = vmatmul.bf16.gmra.mxu0 %v3663
        %v4085 = vpop.f32.mrf.mxu0
        %v4086 = vadd.f32 %v3997, %v4085
        %v4087 = vpop.f32.mrf.mxu0
        %v4088 = vadd.f32 %v3999, %v4087
        %4089 = vmatmul.bf16.gmra.mxu0 %v3666
        %v4090 = vpop.f32.mrf.mxu0
        %v4091 = vadd.f32 %v4002, %v4090
        %v4092 = vpop.f32.mrf.mxu0
        %v4093 = vadd.f32 %v4004, %v4092
        %4094 = vmatmul.bf16.gmra.mxu0 %v3669
        %v4095 = vpop.f32.mrf.mxu0
        %v4096 = vadd.f32 %v4007, %v4095
        %v4097 = vpop.f32.mrf.mxu0
        %v4098 = vadd.f32 %v4009, %v4097
        %4099 = vmatmul.bf16.gmra.mxu0 %v3672
        %v4100 = vpop.f32.mrf.mxu0
        %v4101 = vadd.f32 %v4012, %v4100
        %v4102 = vpop.f32.mrf.mxu0
        %v4103 = vadd.f32 %v4014, %v4102
        %4104 = vmatmul.bf16.gmra.mxu0 %v3675
        %v4105 = vpop.f32.mrf.mxu0
        %v4106 = vadd.f32 %v4017, %v4105
        %v4107 = vpop.f32.mrf.mxu0
        %v4108 = vadd.f32 %v4019, %v4107
        %4109 = vmatmul.bf16.gmra.mxu0 %v3678
        %v4110 = vpop.f32.mrf.mxu0
        %v4111 = vadd.f32 %v4022, %v4110
        %v4112 = vpop.f32.mrf.mxu0
        %v4113 = vadd.f32 %v4024, %v4112
        %4114 = vmatmul.bf16.gmra.mxu0 %v3681
        %v4115 = vpop.f32.mrf.mxu0
        %v4116 = vadd.f32 %v4027, %v4115
        %v4117 = vpop.f32.mrf.mxu0
        %v4118 = vadd.f32 %v4029, %v4117
        %4119 = vmatmul.bf16.gmra.mxu0 %v3684
        %v4120 = vpop.f32.mrf.mxu0
        %v4121 = vadd.f32 %v4032, %v4120
        %v4122 = vpop.f32.mrf.mxu0
        %v4123 = vadd.f32 %v4034, %v4122
        %4124 = vmatmul.bf16.gmra.mxu0 %v3687
        %v4125 = vpop.f32.mrf.mxu0
        %v4126 = vadd.f32 %v4037, %v4125
        %v4127 = vpop.f32.mrf.mxu0
        %v4128 = vadd.f32 %v4039, %v4127
        %4129 = vmatmul.bf16.gmra.mxu0 %v3690
        %v4130 = vpop.f32.mrf.mxu0
        %v4131 = vadd.f32 %v4042, %v4130
        %v4132 = vpop.f32.mrf.mxu0
        %v4133 = vadd.f32 %v4044, %v4132
        %4134 = vmatmul.bf16.gmra.mxu0 %v3693
        %v4135 = vpop.f32.mrf.mxu0
        %v4136 = vadd.f32 %v4047, %v4135
        %v4137 = vpop.f32.mrf.mxu0
        %v4138 = vadd.f32 %v4049, %v4137
        %4139 = vdwg.mxu0
        %v4140 = vmax.f32 %v4061, 0.0
        %v4141 = vmax.f32 %v4063, 0.0
        %v4142 = vmax.f32 %v4066, 0.0
        %v4143 = vmax.f32 %v4068, 0.0
        %v4144 = vmax.f32 %v4071, 0.0
        %v4145 = vmax.f32 %v4073, 0.0
        %v4146 = vmax.f32 %v4076, 0.0
        %v4147 = vmax.f32 %v4078, 0.0
        %v4148 = vmax.f32 %v4081, 0.0
        %v4149 = vmax.f32 %v4083, 0.0
        %v4150 = vmax.f32 %v4086, 0.0
        %v4151 = vmax.f32 %v4088, 0.0
        %v4152 = vmax.f32 %v4091, 0.0
        %v4153 = vmax.f32 %v4093, 0.0
        %v4154 = vmax.f32 %v4096, 0.0
        %v4155 = vmax.f32 %v4098, 0.0
        %v4156 = vmax.f32 %v4101, 0.0
        %v4157 = vmax.f32 %v4103, 0.0
        %v4158 = vmax.f32 %v4106, 0.0
        %v4159 = vmax.f32 %v4108, 0.0
        %v4160 = vmax.f32 %v4111, 0.0
        %v4161 = vmax.f32 %v4113, 0.0
        %v4162 = vmax.f32 %v4116, 0.0
        %v4163 = vmax.f32 %v4118, 0.0
        %v4164 = vmax.f32 %v4121, 0.0
        %v4165 = vmax.f32 %v4123, 0.0
        %v4166 = vmax.f32 %v4126, 0.0
        %v4167 = vmax.f32 %v4128, 0.0
        %v4168 = vmax.f32 %v4131, 0.0
        %v4169 = vmax.f32 %v4133, 0.0
        %v4170 = vmax.f32 %v4136, 0.0
        %v4171 = vmax.f32 %v4138, 0.0
        %4172 = vst.msk [vmem:[%s2313 + $0x1] sm:$0xff] %vm372, %v4140
        %4173 = vst.msk [vmem:[%s2313 + $0x9] sm:$0xff] %vm372, %v4141
        %4174 = vst.msk [vmem:[%s2313 + $0x19] sm:$0xff] %vm372, %v4142
        %4175 = vst.msk [vmem:[%s2313 + $0x21] sm:$0xff] %vm372, %v4143
        %4176 = vst.msk [vmem:[%s2313 + $0x31] sm:$0xff] %vm372, %v4144
        %4177 = vst.msk [vmem:[%s2313 + $0x39] sm:$0xff] %vm372, %v4145
        %4178 = vst.msk [vmem:[%s2313 + $0x49] sm:$0xff] %vm372, %v4146
        %4179 = vst.msk [vmem:[%s2313 + $0x51] sm:$0xff] %vm372, %v4147
        %4180 = vst.msk [vmem:[%s2313 + $0x61] sm:$0xff] %vm372, %v4148
        %4181 = vst.msk [vmem:[%s2313 + $0x69] sm:$0xff] %vm372, %v4149
        %4182 = vst.msk [vmem:[%s2313 + $0x79] sm:$0xff] %vm372, %v4150
        %4183 = vst.msk [vmem:[%s2313 + $0x81] sm:$0xff] %vm372, %v4151
        %4184 = vst.msk [vmem:[%s2313 + $0x91] sm:$0xff] %vm372, %v4152
        %4185 = vst.msk [vmem:[%s2313 + $0x99] sm:$0xff] %vm372, %v4153
        %4186 = vst.msk [vmem:[%s2313 + $0xa9] sm:$0xff] %vm372, %v4154
        %4187 = vst.msk [vmem:[%s2313 + $0xb1] sm:$0xff] %vm372, %v4155
        %4188 = vst.msk [vmem:[%s2313 + $0xc1] sm:$0xff] %vm372, %v4156
        %4189 = vst.msk [vmem:[%s2313 + $0xc9] sm:$0xff] %vm372, %v4157
        %4190 = vst.msk [vmem:[%s2313 + $0xd9] sm:$0xff] %vm372, %v4158
        %4191 = vst.msk [vmem:[%s2313 + $0xe1] sm:$0xff] %vm372, %v4159
        %4192 = vst.msk [vmem:[%s2313 + $0xf1] sm:$0xff] %vm372, %v4160
        %4193 = vst.msk [vmem:[%s2313 + $0xf9] sm:$0xff] %vm372, %v4161
        %4194 = vst.msk [vmem:[%s2313 + $0x109] sm:$0xff] %vm372, %v4162
        %4195 = vst.msk [vmem:[%s2313 + $0x111] sm:$0xff] %vm372, %v4163
        %4196 = vst.msk [vmem:[%s2313 + $0x121] sm:$0xff] %vm372, %v4164
        %4197 = vst.msk [vmem:[%s2313 + $0x129] sm:$0xff] %vm372, %v4165
        %4198 = vst.msk [vmem:[%s2313 + $0x139] sm:$0xff] %vm372, %v4166
        %4199 = vst.msk [vmem:[%s2313 + $0x141] sm:$0xff] %vm372, %v4167
        %4200 = vst.msk [vmem:[%s2313 + $0x151] sm:$0xff] %vm372, %v4168
        %4201 = vst.msk [vmem:[%s2313 + $0x159] sm:$0xff] %vm372, %v4169
        %4202 = vst.msk [vmem:[%s2313 + $0x169] sm:$0xff] %vm372, %v4170
        %4203 = vst.msk [vmem:[%s2313 + $0x171] sm:$0xff] %vm372, %v4171
        %v4204 = vld [vmem:[#allocation3] sm:$0xff]
        %v4205 = vld [vmem:[#allocation3 + $0x8] sm:$0xff]
        %v4206 = vld [vmem:[#allocation3 + $0x18] sm:$0xff]
        %v4207 = vld [vmem:[#allocation3 + $0x20] sm:$0xff]
        %v4208 = vld [vmem:[#allocation3 + $0x30] sm:$0xff]
        %v4209 = vld [vmem:[#allocation3 + $0x38] sm:$0xff]
        %v4210 = vld [vmem:[#allocation3 + $0x48] sm:$0xff]
        %v4211 = vld [vmem:[#allocation3 + $0x50] sm:$0xff]
        %v4212 = vld [vmem:[#allocation3 + $0x60] sm:$0xff]
        %v4213 = vld [vmem:[#allocation3 + $0x68] sm:$0xff]
        %v4214 = vld [vmem:[#allocation3 + $0x78] sm:$0xff]
        %v4215 = vld [vmem:[#allocation3 + $0x80] sm:$0xff]
        %v4216 = vld [vmem:[#allocation3 + $0x90] sm:$0xff]
        %v4217 = vld [vmem:[#allocation3 + $0x98] sm:$0xff]
        %v4218 = vld [vmem:[#allocation3 + $0xa8] sm:$0xff]
        %v4219 = vld [vmem:[#allocation3 + $0xb0] sm:$0xff]
        %v4220 = vld [vmem:[#allocation3 + $0xc0] sm:$0xff]
        %v4221 = vld [vmem:[#allocation3 + $0xc8] sm:$0xff]
        %v4222 = vld [vmem:[#allocation3 + $0xd8] sm:$0xff]
        %v4223 = vld [vmem:[#allocation3 + $0xe0] sm:$0xff]
        %v4224 = vld [vmem:[#allocation3 + $0xf0] sm:$0xff]
        %v4225 = vld [vmem:[#allocation3 + $0xf8] sm:$0xff]
        %v4226 = vld [vmem:[#allocation3 + $0x108] sm:$0xff]
        %v4227 = vld [vmem:[#allocation3 + $0x110] sm:$0xff]
        %v4228 = vld [vmem:[#allocation3 + $0x120] sm:$0xff]
        %v4229 = vld [vmem:[#allocation3 + $0x128] sm:$0xff]
        %v4230 = vld [vmem:[#allocation3 + $0x138] sm:$0xff]
        %v4231 = vld [vmem:[#allocation3 + $0x140] sm:$0xff]
        %v4232 = vld [vmem:[#allocation3 + $0x150] sm:$0xff]
        %v4233 = vld [vmem:[#allocation3 + $0x158] sm:$0xff]
        %v4234 = vld [vmem:[#allocation3 + $0x168] sm:$0xff]
        %v4235 = vld [vmem:[#allocation3 + $0x170] sm:$0xff]
        %v4236 = vld [vmem:[#allocation3 + $0x1] sm:$0xff]
        %v4237 = vld [vmem:[#allocation3 + $0x9] sm:$0xff]
        %v4238 = vld [vmem:[#allocation3 + $0x19] sm:$0xff]
        %v4239 = vld [vmem:[#allocation3 + $0x21] sm:$0xff]
        %v4240 = vld [vmem:[#allocation3 + $0x31] sm:$0xff]
        %v4241 = vld [vmem:[#allocation3 + $0x39] sm:$0xff]
        %v4242 = vld [vmem:[#allocation3 + $0x49] sm:$0xff]
        %v4243 = vld [vmem:[#allocation3 + $0x51] sm:$0xff]
        %v4244 = vld [vmem:[#allocation3 + $0x61] sm:$0xff]
        %v4245 = vld [vmem:[#allocation3 + $0x69] sm:$0xff]
        %v4246 = vld [vmem:[#allocation3 + $0x79] sm:$0xff]
        %v4247 = vld [vmem:[#allocation3 + $0x81] sm:$0xff]
        %v4248 = vld [vmem:[#allocation3 + $0x91] sm:$0xff]
        %v4249 = vld [vmem:[#allocation3 + $0x99] sm:$0xff]
        %v4250 = vld [vmem:[#allocation3 + $0xa9] sm:$0xff]
        %v4251 = vld [vmem:[#allocation3 + $0xb1] sm:$0xff]
        %v4252 = vld [vmem:[#allocation3 + $0xc1] sm:$0xff]
        %v4253 = vld [vmem:[#allocation3 + $0xc9] sm:$0xff]
        %v4254 = vld [vmem:[#allocation3 + $0xd9] sm:$0xff]
        %v4255 = vld [vmem:[#allocation3 + $0xe1] sm:$0xff]
        %v4256 = vld [vmem:[#allocation3 + $0xf1] sm:$0xff]
        %v4257 = vld [vmem:[#allocation3 + $0xf9] sm:$0xff]
        %v4258 = vld [vmem:[#allocation3 + $0x109] sm:$0xff]
        %v4259 = vld [vmem:[#allocation3 + $0x111] sm:$0xff]
        %v4260 = vld [vmem:[#allocation3 + $0x121] sm:$0xff]
        %v4261 = vld [vmem:[#allocation3 + $0x129] sm:$0xff]
        %v4262 = vld [vmem:[#allocation3 + $0x139] sm:$0xff]
        %v4263 = vld [vmem:[#allocation3 + $0x141] sm:$0xff]
        %v4264 = vld [vmem:[#allocation3 + $0x151] sm:$0xff]
        %v4265 = vld [vmem:[#allocation3 + $0x159] sm:$0xff]
        %v4266 = vld [vmem:[#allocation3 + $0x169] sm:$0xff]
        %v4267 = vld [vmem:[#allocation3 + $0x171] sm:$0xff]
        %v4268 = vld [vmem:[#allocation3 + $0x2] sm:$0xff]
        %v4269 = vld [vmem:[#allocation3 + $0xa] sm:$0xff]
        %v4270 = vld [vmem:[#allocation3 + $0x1a] sm:$0xff]
        %v4271 = vld [vmem:[#allocation3 + $0x22] sm:$0xff]
        %v4272 = vld [vmem:[#allocation3 + $0x32] sm:$0xff]
        %v4273 = vld [vmem:[#allocation3 + $0x3a] sm:$0xff]
        %v4274 = vld [vmem:[#allocation3 + $0x4a] sm:$0xff]
        %v4275 = vld [vmem:[#allocation3 + $0x52] sm:$0xff]
        %v4276 = vld [vmem:[#allocation3 + $0x62] sm:$0xff]
        %v4277 = vld [vmem:[#allocation3 + $0x6a] sm:$0xff]
        %v4278 = vld [vmem:[#allocation3 + $0x7a] sm:$0xff]
        %v4279 = vld [vmem:[#allocation3 + $0x82] sm:$0xff]
        %v4280 = vld [vmem:[#allocation3 + $0x92] sm:$0xff]
        %v4281 = vld [vmem:[#allocation3 + $0x9a] sm:$0xff]
        %v4282 = vld [vmem:[#allocation3 + $0xaa] sm:$0xff]
        %v4283 = vld [vmem:[#allocation3 + $0xb2] sm:$0xff]
        %v4284 = vld [vmem:[#allocation3 + $0xc2] sm:$0xff]
        %v4285 = vld [vmem:[#allocation3 + $0xca] sm:$0xff]
        %v4286 = vld [vmem:[#allocation3 + $0xda] sm:$0xff]
        %v4287 = vld [vmem:[#allocation3 + $0xe2] sm:$0xff]
        %v4288 = vld [vmem:[#allocation3 + $0xf2] sm:$0xff]
        %v4289 = vld [vmem:[#allocation3 + $0xfa] sm:$0xff]
        %v4290 = vld [vmem:[#allocation3 + $0x10a] sm:$0xff]
        %v4291 = vld [vmem:[#allocation3 + $0x112] sm:$0xff]
        %v4292 = vld [vmem:[#allocation3 + $0x122] sm:$0xff]
        %v4293 = vld [vmem:[#allocation3 + $0x12a] sm:$0xff]
        %v4294 = vld [vmem:[#allocation3 + $0x13a] sm:$0xff]
        %v4295 = vld [vmem:[#allocation3 + $0x142] sm:$0xff]
        %v4296 = vld [vmem:[#allocation3 + $0x152] sm:$0xff]
        %v4297 = vld [vmem:[#allocation3 + $0x15a] sm:$0xff]
        %v4298 = vld [vmem:[#allocation3 + $0x16a] sm:$0xff]
        %v4299 = vld [vmem:[#allocation3 + $0x172] sm:$0xff]
        %v4300 = vld [vmem:[%s2313] sm:$0xff]
        %v4301 = vld [vmem:[%s2313 + $0x8] sm:$0xff]
        %v4302 = vld [vmem:[%s2313 + $0x18] sm:$0xff]
        %v4303 = vld [vmem:[%s2313 + $0x20] sm:$0xff]
        %v4304 = vld [vmem:[%s2313 + $0x30] sm:$0xff]
        %v4305 = vld [vmem:[%s2313 + $0x38] sm:$0xff]
        %v4306 = vld [vmem:[%s2313 + $0x48] sm:$0xff]
        %v4307 = vld [vmem:[%s2313 + $0x50] sm:$0xff]
        %v4308 = vld [vmem:[%s2313 + $0x60] sm:$0xff]
        %v4309 = vld [vmem:[%s2313 + $0x68] sm:$0xff]
        %v4310 = vld [vmem:[%s2313 + $0x78] sm:$0xff]
        %v4311 = vld [vmem:[%s2313 + $0x80] sm:$0xff]
        %v4312 = vld [vmem:[%s2313 + $0x90] sm:$0xff]
        %v4313 = vld [vmem:[%s2313 + $0x98] sm:$0xff]
        %v4314 = vld [vmem:[%s2313 + $0xa8] sm:$0xff]
        %v4315 = vld [vmem:[%s2313 + $0xb0] sm:$0xff]
        %v4316 = vld [vmem:[%s2313 + $0xc0] sm:$0xff]
        %v4317 = vld [vmem:[%s2313 + $0xc8] sm:$0xff]
        %v4318 = vld [vmem:[%s2313 + $0xd8] sm:$0xff]
        %v4319 = vld [vmem:[%s2313 + $0xe0] sm:$0xff]
        %v4320 = vld [vmem:[%s2313 + $0xf0] sm:$0xff]
        %v4321 = vld [vmem:[%s2313 + $0xf8] sm:$0xff]
        %v4322 = vld [vmem:[%s2313 + $0x108] sm:$0xff]
        %v4323 = vld [vmem:[%s2313 + $0x110] sm:$0xff]
        %v4324 = vld [vmem:[%s2313 + $0x120] sm:$0xff]
        %v4325 = vld [vmem:[%s2313 + $0x128] sm:$0xff]
        %v4326 = vld [vmem:[%s2313 + $0x138] sm:$0xff]
        %v4327 = vld [vmem:[%s2313 + $0x140] sm:$0xff]
        %v4328 = vld [vmem:[%s2313 + $0x150] sm:$0xff]
        %v4329 = vld [vmem:[%s2313 + $0x158] sm:$0xff]
        %v4330 = vld [vmem:[%s2313 + $0x168] sm:$0xff]
        %v4331 = vld [vmem:[%s2313 + $0x170] sm:$0xff]
        %v4332 = vld [vmem:[%s2313 + $0x1] sm:$0xff]
        %v4333 = vld [vmem:[%s2313 + $0x9] sm:$0xff]
        %v4334 = vld [vmem:[%s2313 + $0x19] sm:$0xff]
        %v4335 = vld [vmem:[%s2313 + $0x21] sm:$0xff]
        %v4336 = vld [vmem:[%s2313 + $0x31] sm:$0xff]
        %v4337 = vld [vmem:[%s2313 + $0x39] sm:$0xff]
        %v4338 = vld [vmem:[%s2313 + $0x49] sm:$0xff]
        %v4339 = vld [vmem:[%s2313 + $0x51] sm:$0xff]
        %v4340 = vld [vmem:[%s2313 + $0x61] sm:$0xff]
        %v4341 = vld [vmem:[%s2313 + $0x69] sm:$0xff]
        %v4342 = vld [vmem:[%s2313 + $0x79] sm:$0xff]
        %v4343 = vld [vmem:[%s2313 + $0x81] sm:$0xff]
        %v4344 = vld [vmem:[%s2313 + $0x91] sm:$0xff]
        %v4345 = vld [vmem:[%s2313 + $0x99] sm:$0xff]
        %v4346 = vld [vmem:[%s2313 + $0xa9] sm:$0xff]
        %v4347 = vld [vmem:[%s2313 + $0xb1] sm:$0xff]
        %v4348 = vld [vmem:[%s2313 + $0xc1] sm:$0xff]
        %v4349 = vld [vmem:[%s2313 + $0xc9] sm:$0xff]
        %v4350 = vld [vmem:[%s2313 + $0xd9] sm:$0xff]
        %v4351 = vld [vmem:[%s2313 + $0xe1] sm:$0xff]
        %v4352 = vld [vmem:[%s2313 + $0xf1] sm:$0xff]
        %v4353 = vld [vmem:[%s2313 + $0xf9] sm:$0xff]
        %v4354 = vld [vmem:[%s2313 + $0x109] sm:$0xff]
        %v4355 = vld [vmem:[%s2313 + $0x111] sm:$0xff]
        %v4356 = vld [vmem:[%s2313 + $0x121] sm:$0xff]
        %v4357 = vld [vmem:[%s2313 + $0x129] sm:$0xff]
        %v4358 = vld [vmem:[%s2313 + $0x139] sm:$0xff]
        %v4359 = vld [vmem:[%s2313 + $0x141] sm:$0xff]
        %v4360 = vld [vmem:[%s2313 + $0x151] sm:$0xff]
        %v4361 = vld [vmem:[%s2313 + $0x159] sm:$0xff]
        %v4362 = vld [vmem:[%s2313 + $0x169] sm:$0xff]
        %v4363 = vld [vmem:[%s2313 + $0x171] sm:$0xff]
        %v4364 = vld [vmem:[%s2313 + $0x2] sm:$0xff]
        %v4365 = vld [vmem:[%s2313 + $0xa] sm:$0xff]
        %v4366 = vld [vmem:[%s2313 + $0x1a] sm:$0xff]
        %v4367 = vld [vmem:[%s2313 + $0x22] sm:$0xff]
        %v4368 = vld [vmem:[%s2313 + $0x32] sm:$0xff]
        %v4369 = vld [vmem:[%s2313 + $0x3a] sm:$0xff]
        %v4370 = vld [vmem:[%s2313 + $0x4a] sm:$0xff]
        %v4371 = vld [vmem:[%s2313 + $0x52] sm:$0xff]
        %v4372 = vld [vmem:[%s2313 + $0x62] sm:$0xff]
        %v4373 = vld [vmem:[%s2313 + $0x6a] sm:$0xff]
        %v4374 = vld [vmem:[%s2313 + $0x7a] sm:$0xff]
        %v4375 = vld [vmem:[%s2313 + $0x82] sm:$0xff]
        %v4376 = vld [vmem:[%s2313 + $0x92] sm:$0xff]
        %v4377 = vld [vmem:[%s2313 + $0x9a] sm:$0xff]
        %v4378 = vld [vmem:[%s2313 + $0xaa] sm:$0xff]
        %v4379 = vld [vmem:[%s2313 + $0xb2] sm:$0xff]
        %v4380 = vld [vmem:[%s2313 + $0xc2] sm:$0xff]
        %v4381 = vld [vmem:[%s2313 + $0xca] sm:$0xff]
        %v4382 = vld [vmem:[%s2313 + $0xda] sm:$0xff]
        %v4383 = vld [vmem:[%s2313 + $0xe2] sm:$0xff]
        %v4384 = vld [vmem:[%s2313 + $0xf2] sm:$0xff]
        %v4385 = vld [vmem:[%s2313 + $0xfa] sm:$0xff]
        %v4386 = vld [vmem:[%s2313 + $0x10a] sm:$0xff]
        %v4387 = vld [vmem:[%s2313 + $0x112] sm:$0xff]
        %v4388 = vld [vmem:[%s2313 + $0x122] sm:$0xff]
        %v4389 = vld [vmem:[%s2313 + $0x12a] sm:$0xff]
        %v4390 = vld [vmem:[%s2313 + $0x13a] sm:$0xff]
        %v4391 = vld [vmem:[%s2313 + $0x142] sm:$0xff]
        %v4392 = vld [vmem:[%s2313 + $0x152] sm:$0xff]
        %v4393 = vld [vmem:[%s2313 + $0x15a] sm:$0xff]
        %v4394 = vld [vmem:[%s2313 + $0x16a] sm:$0xff]
        %v4395 = vld [vmem:[%s2313 + $0x172] sm:$0xff]
        %v4396 = vld [vmem:[%s2538] sm:$0xff]
        %v4397 = vld [vmem:[%s2538 + $0x8] sm:$0xff]
        %v4398 = vld [vmem:[%s2538 + $0x18] sm:$0xff]
        %v4399 = vld [vmem:[%s2538 + $0x20] sm:$0xff]
        %v4400 = vld [vmem:[%s2538 + $0x30] sm:$0xff]
        %v4401 = vld [vmem:[%s2538 + $0x38] sm:$0xff]
        %v4402 = vld [vmem:[%s2538 + $0x48] sm:$0xff]
        %v4403 = vld [vmem:[%s2538 + $0x50] sm:$0xff]
        %v4404 = vld [vmem:[%s2538 + $0x60] sm:$0xff]
        %v4405 = vld [vmem:[%s2538 + $0x68] sm:$0xff]
        %v4406 = vld [vmem:[%s2538 + $0x78] sm:$0xff]
        %v4407 = vld [vmem:[%s2538 + $0x80] sm:$0xff]
        %v4408 = vld [vmem:[%s2538 + $0x90] sm:$0xff]
        %v4409 = vld [vmem:[%s2538 + $0x98] sm:$0xff]
        %v4410 = vld [vmem:[%s2538 + $0xa8] sm:$0xff]
        %v4411 = vld [vmem:[%s2538 + $0xb0] sm:$0xff]
        %v4412 = vld [vmem:[%s2538 + $0xc0] sm:$0xff]
        %v4413 = vld [vmem:[%s2538 + $0xc8] sm:$0xff]
        %v4414 = vld [vmem:[%s2538 + $0xd8] sm:$0xff]
        %v4415 = vld [vmem:[%s2538 + $0xe0] sm:$0xff]
        %v4416 = vld [vmem:[%s2538 + $0xf0] sm:$0xff]
        %v4417 = vld [vmem:[%s2538 + $0xf8] sm:$0xff]
        %v4418 = vld [vmem:[%s2538 + $0x108] sm:$0xff]
        %v4419 = vld [vmem:[%s2538 + $0x110] sm:$0xff]
        %v4420 = vld [vmem:[%s2538 + $0x120] sm:$0xff]
        %v4421 = vld [vmem:[%s2538 + $0x128] sm:$0xff]
        %v4422 = vld [vmem:[%s2538 + $0x138] sm:$0xff]
        %v4423 = vld [vmem:[%s2538 + $0x140] sm:$0xff]
        %v4424 = vld [vmem:[%s2538 + $0x150] sm:$0xff]
        %v4425 = vld [vmem:[%s2538 + $0x158] sm:$0xff]
        %v4426 = vld [vmem:[%s2538 + $0x168] sm:$0xff]
        %v4427 = vld [vmem:[%s2538 + $0x170] sm:$0xff]
        %v4428 = vld [vmem:[%s2538 + $0x1] sm:$0xff]
        %v4429 = vld [vmem:[%s2538 + $0x9] sm:$0xff]
        %v4430 = vld [vmem:[%s2538 + $0x19] sm:$0xff]
        %v4431 = vld [vmem:[%s2538 + $0x21] sm:$0xff]
        %v4432 = vld [vmem:[%s2538 + $0x31] sm:$0xff]
        %v4433 = vld [vmem:[%s2538 + $0x39] sm:$0xff]
        %v4434 = vld [vmem:[%s2538 + $0x49] sm:$0xff]
        %v4435 = vld [vmem:[%s2538 + $0x51] sm:$0xff]
        %v4436 = vld [vmem:[%s2538 + $0x61] sm:$0xff]
        %v4437 = vld [vmem:[%s2538 + $0x69] sm:$0xff]
        %v4438 = vld [vmem:[%s2538 + $0x79] sm:$0xff]
        %v4439 = vld [vmem:[%s2538 + $0x81] sm:$0xff]
        %v4440 = vld [vmem:[%s2538 + $0x91] sm:$0xff]
        %v4441 = vld [vmem:[%s2538 + $0x99] sm:$0xff]
        %v4442 = vld [vmem:[%s2538 + $0xa9] sm:$0xff]
        %v4443 = vld [vmem:[%s2538 + $0xb1] sm:$0xff]
        %v4444 = vld [vmem:[%s2538 + $0xc1] sm:$0xff]
        %v4445 = vld [vmem:[%s2538 + $0xc9] sm:$0xff]
        %v4446 = vld [vmem:[%s2538 + $0xd9] sm:$0xff]
        %v4447 = vld [vmem:[%s2538 + $0xe1] sm:$0xff]
        %v4448 = vld [vmem:[%s2538 + $0xf1] sm:$0xff]
        %v4449 = vld [vmem:[%s2538 + $0xf9] sm:$0xff]
        %v4450 = vld [vmem:[%s2538 + $0x109] sm:$0xff]
        %v4451 = vld [vmem:[%s2538 + $0x111] sm:$0xff]
        %v4452 = vld [vmem:[%s2538 + $0x121] sm:$0xff]
        %v4453 = vld [vmem:[%s2538 + $0x129] sm:$0xff]
        %v4454 = vld [vmem:[%s2538 + $0x139] sm:$0xff]
        %v4455 = vld [vmem:[%s2538 + $0x141] sm:$0xff]
        %v4456 = vld [vmem:[%s2538 + $0x151] sm:$0xff]
        %v4457 = vld [vmem:[%s2538 + $0x159] sm:$0xff]
        %v4458 = vld [vmem:[%s2538 + $0x169] sm:$0xff]
        %v4459 = vld [vmem:[%s2538 + $0x171] sm:$0xff]
        %v4460 = vld [vmem:[%s2538 + $0x2] sm:$0xff]
        %v4461 = vld [vmem:[%s2538 + $0xa] sm:$0xff]
        %v4462 = vld [vmem:[%s2538 + $0x1a] sm:$0xff]
        %v4463 = vld [vmem:[%s2538 + $0x22] sm:$0xff]
        %v4464 = vld [vmem:[%s2538 + $0x32] sm:$0xff]
        %v4465 = vld [vmem:[%s2538 + $0x3a] sm:$0xff]
        %v4466 = vld [vmem:[%s2538 + $0x4a] sm:$0xff]
        %v4467 = vld [vmem:[%s2538 + $0x52] sm:$0xff]
        %v4468 = vld [vmem:[%s2538 + $0x62] sm:$0xff]
        %v4469 = vld [vmem:[%s2538 + $0x6a] sm:$0xff]
        %v4470 = vld [vmem:[%s2538 + $0x7a] sm:$0xff]
        %v4471 = vld [vmem:[%s2538 + $0x82] sm:$0xff]
        %v4472 = vld [vmem:[%s2538 + $0x92] sm:$0xff]
        %v4473 = vld [vmem:[%s2538 + $0x9a] sm:$0xff]
        %v4474 = vld [vmem:[%s2538 + $0xaa] sm:$0xff]
        %v4475 = vld [vmem:[%s2538 + $0xb2] sm:$0xff]
        %v4476 = vld [vmem:[%s2538 + $0xc2] sm:$0xff]
        %v4477 = vld [vmem:[%s2538 + $0xca] sm:$0xff]
        %v4478 = vld [vmem:[%s2538 + $0xda] sm:$0xff]
        %v4479 = vld [vmem:[%s2538 + $0xe2] sm:$0xff]
        %v4480 = vld [vmem:[%s2538 + $0xf2] sm:$0xff]
        %v4481 = vld [vmem:[%s2538 + $0xfa] sm:$0xff]
        %v4482 = vld [vmem:[%s2538 + $0x10a] sm:$0xff]
        %v4483 = vld [vmem:[%s2538 + $0x112] sm:$0xff]
        %v4484 = vld [vmem:[%s2538 + $0x122] sm:$0xff]
        %v4485 = vld [vmem:[%s2538 + $0x12a] sm:$0xff]
        %v4486 = vld [vmem:[%s2538 + $0x13a] sm:$0xff]
        %v4487 = vld [vmem:[%s2538 + $0x142] sm:$0xff]
        %v4488 = vld [vmem:[%s2538 + $0x152] sm:$0xff]
        %v4489 = vld [vmem:[%s2538 + $0x15a] sm:$0xff]
        %v4490 = vld [vmem:[%s2538 + $0x16a] sm:$0xff]
        %v4491 = vld [vmem:[%s2538 + $0x172] sm:$0xff]
        %4524 = vrot.lane.b32.xlu0 %v4236, 64
        %v4525 = vpop.permute.xlu0 %4524
        %4526 = vrot.lane.b32.xlu0 %v4237, 64
        %v4527 = vpop.permute.xlu0 %4526
        %4528 = vrot.lane.b32.xlu0 %v4238, 64
        %v4529 = vpop.permute.xlu0 %4528
        %4530 = vrot.lane.b32.xlu0 %v4239, 64
        %v4531 = vpop.permute.xlu0 %4530
        %4532 = vrot.lane.b32.xlu0 %v4240, 64
        %v4533 = vpop.permute.xlu0 %4532
        %4534 = vrot.lane.b32.xlu0 %v4241, 64
        %v4535 = vpop.permute.xlu0 %4534
        %4536 = vrot.lane.b32.xlu0 %v4242, 64
        %v4537 = vpop.permute.xlu0 %4536
        %4538 = vrot.lane.b32.xlu0 %v4243, 64
        %v4539 = vpop.permute.xlu0 %4538
        %4540 = vrot.lane.b32.xlu0 %v4244, 64
        %v4541 = vpop.permute.xlu0 %4540
        %4542 = vrot.lane.b32.xlu0 %v4245, 64
        %v4543 = vpop.permute.xlu0 %4542
        %4544 = vrot.lane.b32.xlu0 %v4246, 64
        %v4545 = vpop.permute.xlu0 %4544
        %4546 = vrot.lane.b32.xlu0 %v4247, 64
        %v4547 = vpop.permute.xlu0 %4546
        %4548 = vrot.lane.b32.xlu0 %v4248, 64
        %v4549 = vpop.permute.xlu0 %4548
        %4550 = vrot.lane.b32.xlu0 %v4249, 64
        %v4551 = vpop.permute.xlu0 %4550
        %4552 = vrot.lane.b32.xlu0 %v4250, 64
        %v4553 = vpop.permute.xlu0 %4552
        %4554 = vrot.lane.b32.xlu0 %v4251, 64
        %v4555 = vpop.permute.xlu0 %4554
        %4556 = vrot.lane.b32.xlu0 %v4252, 64
        %v4557 = vpop.permute.xlu0 %4556
        %4558 = vrot.lane.b32.xlu0 %v4253, 64
        %v4559 = vpop.permute.xlu0 %4558
        %4560 = vrot.lane.b32.xlu0 %v4254, 64
        %v4561 = vpop.permute.xlu0 %4560
        %4562 = vrot.lane.b32.xlu0 %v4255, 64
        %v4563 = vpop.permute.xlu0 %4562
        %4564 = vrot.lane.b32.xlu0 %v4256, 64
        %v4565 = vpop.permute.xlu0 %4564
        %4566 = vrot.lane.b32.xlu0 %v4257, 64
        %v4567 = vpop.permute.xlu0 %4566
        %4568 = vrot.lane.b32.xlu0 %v4258, 64
        %v4569 = vpop.permute.xlu0 %4568
        %4570 = vrot.lane.b32.xlu0 %v4259, 64
        %v4571 = vpop.permute.xlu0 %4570
        %4572 = vrot.lane.b32.xlu0 %v4260, 64
        %v4573 = vpop.permute.xlu0 %4572
        %4574 = vrot.lane.b32.xlu0 %v4261, 64
        %v4575 = vpop.permute.xlu0 %4574
        %4576 = vrot.lane.b32.xlu0 %v4262, 64
        %v4577 = vpop.permute.xlu0 %4576
        %4578 = vrot.lane.b32.xlu0 %v4263, 64
        %v4579 = vpop.permute.xlu0 %4578
        %4580 = vrot.lane.b32.xlu0 %v4264, 64
        %v4581 = vpop.permute.xlu0 %4580
        %4582 = vrot.lane.b32.xlu0 %v4265, 64
        %v4583 = vpop.permute.xlu0 %4582
        %4584 = vrot.lane.b32.xlu0 %v4266, 64
        %v4585 = vpop.permute.xlu0 %4584
        %4586 = vrot.lane.b32.xlu0 %v4267, 64
        %v4587 = vpop.permute.xlu0 %4586
        %4652 = vrot.lane.b32.xlu0 %v4300, 64
        %v4653 = vpop.permute.xlu0 %4652
        %4654 = vrot.lane.b32.xlu0 %v4301, 64
        %v4655 = vpop.permute.xlu0 %4654
        %4656 = vrot.lane.b32.xlu0 %v4302, 64
        %v4657 = vpop.permute.xlu0 %4656
        %4658 = vrot.lane.b32.xlu0 %v4303, 64
        %v4659 = vpop.permute.xlu0 %4658
        %4660 = vrot.lane.b32.xlu0 %v4304, 64
        %v4661 = vpop.permute.xlu0 %4660
        %4662 = vrot.lane.b32.xlu0 %v4305, 64
        %v4663 = vpop.permute.xlu0 %4662
        %4664 = vrot.lane.b32.xlu0 %v4306, 64
        %v4665 = vpop.permute.xlu0 %4664
        %4666 = vrot.lane.b32.xlu0 %v4307, 64
        %v4667 = vpop.permute.xlu0 %4666
        %4668 = vrot.lane.b32.xlu0 %v4308, 64
        %v4669 = vpop.permute.xlu0 %4668
        %4670 = vrot.lane.b32.xlu0 %v4309, 64
        %v4671 = vpop.permute.xlu0 %4670
        %4672 = vrot.lane.b32.xlu0 %v4310, 64
        %v4673 = vpop.permute.xlu0 %4672
        %4674 = vrot.lane.b32.xlu0 %v4311, 64
        %v4675 = vpop.permute.xlu0 %4674
        %4676 = vrot.lane.b32.xlu0 %v4312, 64
        %v4677 = vpop.permute.xlu0 %4676
        %4678 = vrot.lane.b32.xlu0 %v4313, 64
        %v4679 = vpop.permute.xlu0 %4678
        %4680 = vrot.lane.b32.xlu0 %v4314, 64
        %v4681 = vpop.permute.xlu0 %4680
        %4682 = vrot.lane.b32.xlu0 %v4315, 64
        %v4683 = vpop.permute.xlu0 %4682
        %4684 = vrot.lane.b32.xlu0 %v4316, 64
        %v4685 = vpop.permute.xlu0 %4684
        %4686 = vrot.lane.b32.xlu0 %v4317, 64
        %v4687 = vpop.permute.xlu0 %4686
        %4688 = vrot.lane.b32.xlu0 %v4318, 64
        %v4689 = vpop.permute.xlu0 %4688
        %4690 = vrot.lane.b32.xlu0 %v4319, 64
        %v4691 = vpop.permute.xlu0 %4690
        %4692 = vrot.lane.b32.xlu0 %v4320, 64
        %v4693 = vpop.permute.xlu0 %4692
        %4694 = vrot.lane.b32.xlu0 %v4321, 64
        %v4695 = vpop.permute.xlu0 %4694
        %4696 = vrot.lane.b32.xlu0 %v4322, 64
        %v4697 = vpop.permute.xlu0 %4696
        %4698 = vrot.lane.b32.xlu0 %v4323, 64
        %v4699 = vpop.permute.xlu0 %4698
        %4700 = vrot.lane.b32.xlu0 %v4324, 64
        %v4701 = vpop.permute.xlu0 %4700
        %4702 = vrot.lane.b32.xlu0 %v4325, 64
        %v4703 = vpop.permute.xlu0 %4702
        %4704 = vrot.lane.b32.xlu0 %v4326, 64
        %v4705 = vpop.permute.xlu0 %4704
        %4706 = vrot.lane.b32.xlu0 %v4327, 64
        %v4707 = vpop.permute.xlu0 %4706
        %4708 = vrot.lane.b32.xlu0 %v4328, 64
        %v4709 = vpop.permute.xlu0 %4708
        %4710 = vrot.lane.b32.xlu0 %v4329, 64
        %v4711 = vpop.permute.xlu0 %4710
        %4712 = vrot.lane.b32.xlu0 %v4330, 64
        %v4713 = vpop.permute.xlu0 %4712
        %4714 = vrot.lane.b32.xlu0 %v4331, 64
        %v4715 = vpop.permute.xlu0 %4714
        %4780 = vrot.lane.b32.xlu0 %v4364, 64
        %v4781 = vpop.permute.xlu0 %4780
        %4782 = vrot.lane.b32.xlu0 %v4365, 64
        %v4783 = vpop.permute.xlu0 %4782
        %4784 = vrot.lane.b32.xlu0 %v4366, 64
        %v4785 = vpop.permute.xlu0 %4784
        %4786 = vrot.lane.b32.xlu0 %v4367, 64
        %v4787 = vpop.permute.xlu0 %4786
        %4788 = vrot.lane.b32.xlu0 %v4368, 64
        %v4789 = vpop.permute.xlu0 %4788
        %4790 = vrot.lane.b32.xlu0 %v4369, 64
        %v4791 = vpop.permute.xlu0 %4790
        %4792 = vrot.lane.b32.xlu0 %v4370, 64
        %v4793 = vpop.permute.xlu0 %4792
        %4794 = vrot.lane.b32.xlu0 %v4371, 64
        %v4795 = vpop.permute.xlu0 %4794
        %4796 = vrot.lane.b32.xlu0 %v4372, 64
        %v4797 = vpop.permute.xlu0 %4796
        %4798 = vrot.lane.b32.xlu0 %v4373, 64
        %v4799 = vpop.permute.xlu0 %4798
        %4800 = vrot.lane.b32.xlu0 %v4374, 64
        %v4801 = vpop.permute.xlu0 %4800
        %4802 = vrot.lane.b32.xlu0 %v4375, 64
        %v4803 = vpop.permute.xlu0 %4802
        %4804 = vrot.lane.b32.xlu0 %v4376, 64
        %v4805 = vpop.permute.xlu0 %4804
        %4806 = vrot.lane.b32.xlu0 %v4377, 64
        %v4807 = vpop.permute.xlu0 %4806
        %4808 = vrot.lane.b32.xlu0 %v4378, 64
        %v4809 = vpop.permute.xlu0 %4808
        %4810 = vrot.lane.b32.xlu0 %v4379, 64
        %v4811 = vpop.permute.xlu0 %4810
        %4812 = vrot.lane.b32.xlu0 %v4380, 64
        %v4813 = vpop.permute.xlu0 %4812
        %4814 = vrot.lane.b32.xlu0 %v4381, 64
        %v4815 = vpop.permute.xlu0 %4814
        %4816 = vrot.lane.b32.xlu0 %v4382, 64
        %v4817 = vpop.permute.xlu0 %4816
        %4818 = vrot.lane.b32.xlu0 %v4383, 64
        %v4819 = vpop.permute.xlu0 %4818
        %4820 = vrot.lane.b32.xlu0 %v4384, 64
        %v4821 = vpop.permute.xlu0 %4820
        %4822 = vrot.lane.b32.xlu0 %v4385, 64
        %v4823 = vpop.permute.xlu0 %4822
        %4824 = vrot.lane.b32.xlu0 %v4386, 64
        %v4825 = vpop.permute.xlu0 %4824
        %4826 = vrot.lane.b32.xlu0 %v4387, 64
        %v4827 = vpop.permute.xlu0 %4826
        %4828 = vrot.lane.b32.xlu0 %v4388, 64
        %v4829 = vpop.permute.xlu0 %4828
        %4830 = vrot.lane.b32.xlu0 %v4389, 64
        %v4831 = vpop.permute.xlu0 %4830
        %4832 = vrot.lane.b32.xlu0 %v4390, 64
        %v4833 = vpop.permute.xlu0 %4832
        %4834 = vrot.lane.b32.xlu0 %v4391, 64
        %v4835 = vpop.permute.xlu0 %4834
        %4836 = vrot.lane.b32.xlu0 %v4392, 64
        %v4837 = vpop.permute.xlu0 %4836
        %4838 = vrot.lane.b32.xlu0 %v4393, 64
        %v4839 = vpop.permute.xlu0 %4838
        %4840 = vrot.lane.b32.xlu0 %v4394, 64
        %v4841 = vpop.permute.xlu0 %4840
        %4842 = vrot.lane.b32.xlu0 %v4395, 64
        %v4843 = vpop.permute.xlu0 %4842
        %4908 = vrot.lane.b32.xlu0 %v4428, 64
        %v4909 = vpop.permute.xlu0 %4908
        %4910 = vrot.lane.b32.xlu0 %v4429, 64
        %v4911 = vpop.permute.xlu0 %4910
        %4912 = vrot.lane.b32.xlu0 %v4430, 64
        %v4913 = vpop.permute.xlu0 %4912
        %4914 = vrot.lane.b32.xlu0 %v4431, 64
        %v4915 = vpop.permute.xlu0 %4914
        %4916 = vrot.lane.b32.xlu0 %v4432, 64
        %v4917 = vpop.permute.xlu0 %4916
        %4918 = vrot.lane.b32.xlu0 %v4433, 64
        %v4919 = vpop.permute.xlu0 %4918
        %4920 = vrot.lane.b32.xlu0 %v4434, 64
        %v4921 = vpop.permute.xlu0 %4920
        %4922 = vrot.lane.b32.xlu0 %v4435, 64
        %v4923 = vpop.permute.xlu0 %4922
        %4924 = vrot.lane.b32.xlu0 %v4436, 64
        %v4925 = vpop.permute.xlu0 %4924
        %4926 = vrot.lane.b32.xlu0 %v4437, 64
        %v4927 = vpop.permute.xlu0 %4926
        %4928 = vrot.lane.b32.xlu0 %v4438, 64
        %v4929 = vpop.permute.xlu0 %4928
        %4930 = vrot.lane.b32.xlu0 %v4439, 64
        %v4931 = vpop.permute.xlu0 %4930
        %4932 = vrot.lane.b32.xlu0 %v4440, 64
        %v4933 = vpop.permute.xlu0 %4932
        %4934 = vrot.lane.b32.xlu0 %v4441, 64
        %v4935 = vpop.permute.xlu0 %4934
        %4936 = vrot.lane.b32.xlu0 %v4442, 64
        %v4937 = vpop.permute.xlu0 %4936
        %4938 = vrot.lane.b32.xlu0 %v4443, 64
        %v4939 = vpop.permute.xlu0 %4938
        %4940 = vrot.lane.b32.xlu0 %v4444, 64
        %v4941 = vpop.permute.xlu0 %4940
        %4942 = vrot.lane.b32.xlu0 %v4445, 64
        %v4943 = vpop.permute.xlu0 %4942
        %4944 = vrot.lane.b32.xlu0 %v4446, 64
        %v4945 = vpop.permute.xlu0 %4944
        %4946 = vrot.lane.b32.xlu0 %v4447, 64
        %v4947 = vpop.permute.xlu0 %4946
        %4948 = vrot.lane.b32.xlu0 %v4448, 64
        %v4949 = vpop.permute.xlu0 %4948
        %4950 = vrot.lane.b32.xlu0 %v4449, 64
        %v4951 = vpop.permute.xlu0 %4950
        %4952 = vrot.lane.b32.xlu0 %v4450, 64
        %v4953 = vpop.permute.xlu0 %4952
        %4954 = vrot.lane.b32.xlu0 %v4451, 64
        %v4955 = vpop.permute.xlu0 %4954
        %4956 = vrot.lane.b32.xlu0 %v4452, 64
        %v4957 = vpop.permute.xlu0 %4956
        %4958 = vrot.lane.b32.xlu0 %v4453, 64
        %v4959 = vpop.permute.xlu0 %4958
        %4960 = vrot.lane.b32.xlu0 %v4454, 64
        %v4961 = vpop.permute.xlu0 %4960
        %4962 = vrot.lane.b32.xlu0 %v4455, 64
        %v4963 = vpop.permute.xlu0 %4962
        %4964 = vrot.lane.b32.xlu0 %v4456, 64
        %v4965 = vpop.permute.xlu0 %4964
        %4966 = vrot.lane.b32.xlu0 %v4457, 64
        %v4967 = vpop.permute.xlu0 %4966
        %4968 = vrot.lane.b32.xlu0 %v4458, 64
        %v4969 = vpop.permute.xlu0 %4968
        %4970 = vrot.lane.b32.xlu0 %v4459, 64
        %v4971 = vpop.permute.xlu0 %4970
        %v5004 = vsel %vm372, %v4204, %v4525
        %v5005 = vsel %vm372, %v4205, %v4527
        %v5006 = vsel %vm372, %v4206, %v4529
        %v5007 = vsel %vm372, %v4207, %v4531
        %v5008 = vsel %vm372, %v4208, %v4533
        %v5009 = vsel %vm372, %v4209, %v4535
        %v5010 = vsel %vm372, %v4210, %v4537
        %v5011 = vsel %vm372, %v4211, %v4539
        %v5012 = vsel %vm372, %v4212, %v4541
        %v5013 = vsel %vm372, %v4213, %v4543
        %v5014 = vsel %vm372, %v4214, %v4545
        %v5015 = vsel %vm372, %v4215, %v4547
        %v5016 = vsel %vm372, %v4216, %v4549
        %v5017 = vsel %vm372, %v4217, %v4551
        %v5018 = vsel %vm372, %v4218, %v4553
        %v5019 = vsel %vm372, %v4219, %v4555
        %v5020 = vsel %vm372, %v4220, %v4557
        %v5021 = vsel %vm372, %v4221, %v4559
        %v5022 = vsel %vm372, %v4222, %v4561
        %v5023 = vsel %vm372, %v4223, %v4563
        %v5024 = vsel %vm372, %v4224, %v4565
        %v5025 = vsel %vm372, %v4225, %v4567
        %v5026 = vsel %vm372, %v4226, %v4569
        %v5027 = vsel %vm372, %v4227, %v4571
        %v5028 = vsel %vm372, %v4228, %v4573
        %v5029 = vsel %vm372, %v4229, %v4575
        %v5030 = vsel %vm372, %v4230, %v4577
        %v5031 = vsel %vm372, %v4231, %v4579
        %v5032 = vsel %vm372, %v4232, %v4581
        %v5033 = vsel %vm372, %v4233, %v4583
        %v5034 = vsel %vm372, %v4234, %v4585
        %v5035 = vsel %vm372, %v4235, %v4587
        %v5036 = vsel %vm372, %v4268, %v4653
        %v5037 = vsel %vm372, %v4269, %v4655
        %v5038 = vsel %vm372, %v4270, %v4657
        %v5039 = vsel %vm372, %v4271, %v4659
        %v5040 = vsel %vm372, %v4272, %v4661
        %v5041 = vsel %vm372, %v4273, %v4663
        %v5042 = vsel %vm372, %v4274, %v4665
        %v5043 = vsel %vm372, %v4275, %v4667
        %v5044 = vsel %vm372, %v4276, %v4669
        %v5045 = vsel %vm372, %v4277, %v4671
        %v5046 = vsel %vm372, %v4278, %v4673
        %v5047 = vsel %vm372, %v4279, %v4675
        %v5048 = vsel %vm372, %v4280, %v4677
        %v5049 = vsel %vm372, %v4281, %v4679
        %v5050 = vsel %vm372, %v4282, %v4681
        %v5051 = vsel %vm372, %v4283, %v4683
        %v5052 = vsel %vm372, %v4284, %v4685
        %v5053 = vsel %vm372, %v4285, %v4687
        %v5054 = vsel %vm372, %v4286, %v4689
        %v5055 = vsel %vm372, %v4287, %v4691
        %v5056 = vsel %vm372, %v4288, %v4693
        %v5057 = vsel %vm372, %v4289, %v4695
        %v5058 = vsel %vm372, %v4290, %v4697
        %v5059 = vsel %vm372, %v4291, %v4699
        %v5060 = vsel %vm372, %v4292, %v4701
        %v5061 = vsel %vm372, %v4293, %v4703
        %v5062 = vsel %vm372, %v4294, %v4705
        %v5063 = vsel %vm372, %v4295, %v4707
        %v5064 = vsel %vm372, %v4296, %v4709
        %v5065 = vsel %vm372, %v4297, %v4711
        %v5066 = vsel %vm372, %v4298, %v4713
        %v5067 = vsel %vm372, %v4299, %v4715
        %v5068 = vsel %vm372, %v4332, %v4781
        %v5069 = vsel %vm372, %v4333, %v4783
        %v5070 = vsel %vm372, %v4334, %v4785
        %v5071 = vsel %vm372, %v4335, %v4787
        %v5072 = vsel %vm372, %v4336, %v4789
        %v5073 = vsel %vm372, %v4337, %v4791
        %v5074 = vsel %vm372, %v4338, %v4793
        %v5075 = vsel %vm372, %v4339, %v4795
        %v5076 = vsel %vm372, %v4340, %v4797
        %v5077 = vsel %vm372, %v4341, %v4799
        %v5078 = vsel %vm372, %v4342, %v4801
        %v5079 = vsel %vm372, %v4343, %v4803
        %v5080 = vsel %vm372, %v4344, %v4805
        %v5081 = vsel %vm372, %v4345, %v4807
        %v5082 = vsel %vm372, %v4346, %v4809
        %v5083 = vsel %vm372, %v4347, %v4811
        %v5084 = vsel %vm372, %v4348, %v4813
        %v5085 = vsel %vm372, %v4349, %v4815
        %v5086 = vsel %vm372, %v4350, %v4817
        %v5087 = vsel %vm372, %v4351, %v4819
        %v5088 = vsel %vm372, %v4352, %v4821
        %v5089 = vsel %vm372, %v4353, %v4823
        %v5090 = vsel %vm372, %v4354, %v4825
        %v5091 = vsel %vm372, %v4355, %v4827
        %v5092 = vsel %vm372, %v4356, %v4829
        %v5093 = vsel %vm372, %v4357, %v4831
        %v5094 = vsel %vm372, %v4358, %v4833
        %v5095 = vsel %vm372, %v4359, %v4835
        %v5096 = vsel %vm372, %v4360, %v4837
        %v5097 = vsel %vm372, %v4361, %v4839
        %v5098 = vsel %vm372, %v4362, %v4841
        %v5099 = vsel %vm372, %v4363, %v4843
        %v5100 = vsel %vm372, %v4396, %v4909
        %v5101 = vsel %vm372, %v4397, %v4911
        %v5102 = vsel %vm372, %v4398, %v4913
        %v5103 = vsel %vm372, %v4399, %v4915
        %v5104 = vsel %vm372, %v4400, %v4917
        %v5105 = vsel %vm372, %v4401, %v4919
        %v5106 = vsel %vm372, %v4402, %v4921
        %v5107 = vsel %vm372, %v4403, %v4923
        %v5108 = vsel %vm372, %v4404, %v4925
        %v5109 = vsel %vm372, %v4405, %v4927
        %v5110 = vsel %vm372, %v4406, %v4929
        %v5111 = vsel %vm372, %v4407, %v4931
        %v5112 = vsel %vm372, %v4408, %v4933
        %v5113 = vsel %vm372, %v4409, %v4935
        %v5114 = vsel %vm372, %v4410, %v4937
        %v5115 = vsel %vm372, %v4411, %v4939
        %v5116 = vsel %vm372, %v4412, %v4941
        %v5117 = vsel %vm372, %v4413, %v4943
        %v5118 = vsel %vm372, %v4414, %v4945
        %v5119 = vsel %vm372, %v4415, %v4947
        %v5120 = vsel %vm372, %v4416, %v4949
        %v5121 = vsel %vm372, %v4417, %v4951
        %v5122 = vsel %vm372, %v4418, %v4953
        %v5123 = vsel %vm372, %v4419, %v4955
        %v5124 = vsel %vm372, %v4420, %v4957
        %v5125 = vsel %vm372, %v4421, %v4959
        %v5126 = vsel %vm372, %v4422, %v4961
        %v5127 = vsel %vm372, %v4423, %v4963
        %v5128 = vsel %vm372, %v4424, %v4965
        %v5129 = vsel %vm372, %v4425, %v4967
        %v5130 = vsel %vm372, %v4426, %v4969
        %v5131 = vsel %vm372, %v4427, %v4971
        %v5132 = vpack.c.bf16 %v5005, %v5004
        %v5133 = vpack.c.bf16 %v5037, %v5036
        %v5134 = vpack.c.bf16 %v5069, %v5068
        %v5135 = vpack.c.bf16 %v5101, %v5100
        %v5136 = vpack.c.bf16 %v4461, %v4460
        %v5137 = vpack.c.bf16 %v5007, %v5006
        %v5138 = vpack.c.bf16 %v5039, %v5038
        %v5139 = vpack.c.bf16 %v5071, %v5070
        %v5140 = vpack.c.bf16 %v5103, %v5102
        %v5141 = vpack.c.bf16 %v4463, %v4462
        %v5142 = vpack.c.bf16 %v5009, %v5008
        %v5143 = vpack.c.bf16 %v5041, %v5040
        %v5144 = vpack.c.bf16 %v5073, %v5072
        %v5145 = vpack.c.bf16 %v5105, %v5104
        %v5146 = vpack.c.bf16 %v4465, %v4464
        %v5147 = vpack.c.bf16 %v5011, %v5010
        %v5148 = vpack.c.bf16 %v5043, %v5042
        %v5149 = vpack.c.bf16 %v5075, %v5074
        %v5150 = vpack.c.bf16 %v5107, %v5106
        %v5151 = vpack.c.bf16 %v4467, %v4466
        %v5152 = vpack.c.bf16 %v5013, %v5012
        %v5153 = vpack.c.bf16 %v5045, %v5044
        %v5154 = vpack.c.bf16 %v5077, %v5076
        %v5155 = vpack.c.bf16 %v5109, %v5108
        %v5156 = vpack.c.bf16 %v4469, %v4468
        %v5157 = vpack.c.bf16 %v5015, %v5014
        %v5158 = vpack.c.bf16 %v5047, %v5046
        %v5159 = vpack.c.bf16 %v5079, %v5078
        %v5160 = vpack.c.bf16 %v5111, %v5110
        %v5161 = vpack.c.bf16 %v4471, %v4470
        %v5162 = vpack.c.bf16 %v5017, %v5016
        %v5163 = vpack.c.bf16 %v5049, %v5048
        %v5164 = vpack.c.bf16 %v5081, %v5080
        %v5165 = vpack.c.bf16 %v5113, %v5112
        %v5166 = vpack.c.bf16 %v4473, %v4472
        %v5167 = vpack.c.bf16 %v5019, %v5018
        %v5168 = vpack.c.bf16 %v5051, %v5050
        %v5169 = vpack.c.bf16 %v5083, %v5082
        %v5170 = vpack.c.bf16 %v5115, %v5114
        %v5171 = vpack.c.bf16 %v4475, %v4474
        %v5172 = vpack.c.bf16 %v5021, %v5020
        %v5173 = vpack.c.bf16 %v5053, %v5052
        %v5174 = vpack.c.bf16 %v5085, %v5084
        %v5175 = vpack.c.bf16 %v5117, %v5116
        %v5176 = vpack.c.bf16 %v4477, %v4476
        %v5177 = vpack.c.bf16 %v5023, %v5022
        %v5178 = vpack.c.bf16 %v5055, %v5054
        %v5179 = vpack.c.bf16 %v5087, %v5086
        %v5180 = vpack.c.bf16 %v5119, %v5118
        %v5181 = vpack.c.bf16 %v4479, %v4478
        %v5182 = vpack.c.bf16 %v5025, %v5024
        %v5183 = vpack.c.bf16 %v5057, %v5056
        %v5184 = vpack.c.bf16 %v5089, %v5088
        %v5185 = vpack.c.bf16 %v5121, %v5120
        %v5186 = vpack.c.bf16 %v4481, %v4480
        %v5187 = vpack.c.bf16 %v5027, %v5026
        %v5188 = vpack.c.bf16 %v5059, %v5058
        %v5189 = vpack.c.bf16 %v5091, %v5090
        %v5190 = vpack.c.bf16 %v5123, %v5122
        %v5191 = vpack.c.bf16 %v4483, %v4482
        %v5192 = vpack.c.bf16 %v5029, %v5028
        %v5193 = vpack.c.bf16 %v5061, %v5060
        %v5194 = vpack.c.bf16 %v5093, %v5092
        %v5195 = vpack.c.bf16 %v5125, %v5124
        %v5196 = vpack.c.bf16 %v4485, %v4484
        %v5197 = vpack.c.bf16 %v5031, %v5030
        %v5198 = vpack.c.bf16 %v5063, %v5062
        %v5199 = vpack.c.bf16 %v5095, %v5094
        %v5200 = vpack.c.bf16 %v5127, %v5126
        %v5201 = vpack.c.bf16 %v4487, %v4486
        %v5202 = vpack.c.bf16 %v5033, %v5032
        %v5203 = vpack.c.bf16 %v5065, %v5064
        %v5204 = vpack.c.bf16 %v5097, %v5096
        %v5205 = vpack.c.bf16 %v5129, %v5128
        %v5206 = vpack.c.bf16 %v4489, %v4488
        %v5207 = vpack.c.bf16 %v5035, %v5034
        %v5208 = vpack.c.bf16 %v5067, %v5066
        %v5209 = vpack.c.bf16 %v5099, %v5098
        %v5210 = vpack.c.bf16 %v5131, %v5130
        %v5211 = vpack.c.bf16 %v4491, %v4490
        %v5212 = vld [vmem:[%s5] sm:$0xf]
        %v5213 = vld [vmem:[%s5 + $0x4] sm:$0xf]
        %v5214 = vld [vmem:[%s5 + $0x8] sm:$0xf]
        %v5215 = vld [vmem:[%s5 + $0xc] sm:$0xf]
        %v5216 = vld [vmem:[%s5 + $0x10] sm:$0xf]
        %v5217 = vld [vmem:[%s5 + $0x14] sm:$0xf]
        %v5218 = vld [vmem:[%s5 + $0x18] sm:$0xf]
        %v5219 = vld [vmem:[%s5 + $0x1c] sm:$0xf]
        %v5220 = vld [vmem:[%s5 + $0x20] sm:$0xf]
        %v5221 = vld [vmem:[%s5 + $0x24] sm:$0xf]
        %v5222 = vld [vmem:[%s5 + $0x28] sm:$0xf]
        %v5223 = vld [vmem:[%s5 + $0x2c] sm:$0xf]
        %v5224 = vld [vmem:[%s5 + $0x30] sm:$0xf]
        %v5225 = vld [vmem:[%s5 + $0x34] sm:$0xf]
        %v5226 = vld [vmem:[%s5 + $0x38] sm:$0xf]
        %v5227 = vld [vmem:[%s5 + $0x3c] sm:$0xf]
        %v5228 = vld [vmem:[%s5 + $0x40] sm:$0xf]
        %v5229 = vld [vmem:[%s5 + $0x44] sm:$0xf]
        %v5230 = vld [vmem:[%s5 + $0x48] sm:$0xf]
        %v5231 = vld [vmem:[%s5 + $0x4c] sm:$0xf]
        %v5232 = vld [vmem:[%s5 + $0x50] sm:$0xf]
        %v5233 = vld [vmem:[%s5 + $0x54] sm:$0xf]
        %v5234 = vld [vmem:[%s5 + $0x58] sm:$0xf]
        %v5235 = vld [vmem:[%s5 + $0x5c] sm:$0xf]
        %v5236 = vld [vmem:[%s5 + $0x60] sm:$0xf]
        %v5237 = vld [vmem:[%s5 + $0x64] sm:$0xf]
        %v5238 = vld [vmem:[%s5 + $0x68] sm:$0xf]
        %v5239 = vld [vmem:[%s5 + $0x6c] sm:$0xf]
        %v5240 = vld [vmem:[%s5 + $0x70] sm:$0xf]
        %v5241 = vld [vmem:[%s5 + $0x74] sm:$0xf]
        %v5242 = vld [vmem:[%s5 + $0x78] sm:$0xf]
        %v5243 = vld [vmem:[%s5 + $0x7c] sm:$0xf]
        %v5244 = vld [vmem:[%s5 + $0x80] sm:$0xf]
        %v5245 = vld [vmem:[%s5 + $0x84] sm:$0xf]
        %v5246 = vld [vmem:[%s5 + $0x88] sm:$0xf]
        %v5247 = vld [vmem:[%s5 + $0x8c] sm:$0xf]
        %v5248 = vld [vmem:[%s5 + $0x90] sm:$0xf]
        %v5249 = vld [vmem:[%s5 + $0x94] sm:$0xf]
        %v5250 = vld [vmem:[%s5 + $0x98] sm:$0xf]
        %v5251 = vld [vmem:[%s5 + $0x9c] sm:$0xf]
        %v5252 = vld [vmem:[%s5 + $0xa0] sm:$0xf]
        %v5253 = vld [vmem:[%s5 + $0xa4] sm:$0xf]
        %v5254 = vld [vmem:[%s5 + $0xa8] sm:$0xf]
        %v5255 = vld [vmem:[%s5 + $0xac] sm:$0xf]
        %v5256 = vld [vmem:[%s5 + $0xb0] sm:$0xf]
        %v5257 = vld [vmem:[%s5 + $0xb4] sm:$0xf]
        %v5258 = vld [vmem:[%s5 + $0xb8] sm:$0xf]
        %v5259 = vld [vmem:[%s5 + $0xbc] sm:$0xf]
        %v5260 = vld [vmem:[%s5 + $0xc0] sm:$0xf]
        %v5261 = vld [vmem:[%s5 + $0xc4] sm:$0xf]
        %v5262 = vld [vmem:[%s5 + $0xc8] sm:$0xf]
        %v5263 = vld [vmem:[%s5 + $0xcc] sm:$0xf]
        %v5264 = vld [vmem:[%s5 + $0xd0] sm:$0xf]
        %v5265 = vld [vmem:[%s5 + $0xd4] sm:$0xf]
        %v5266 = vld [vmem:[%s5 + $0xd8] sm:$0xf]
        %v5267 = vld [vmem:[%s5 + $0xdc] sm:$0xf]
        %v5268 = vld [vmem:[%s5 + $0xe0] sm:$0xf]
        %v5269 = vld [vmem:[%s5 + $0xe4] sm:$0xf]
        %v5270 = vld [vmem:[%s5 + $0xe8] sm:$0xf]
        %v5271 = vld [vmem:[%s5 + $0xec] sm:$0xf]
        %v5272 = vld [vmem:[%s5 + $0xf0] sm:$0xf]
        %v5273 = vld [vmem:[%s5 + $0xf4] sm:$0xf]
        %v5274 = vld [vmem:[%s5 + $0xf8] sm:$0xf]
        %v5275 = vld [vmem:[%s5 + $0xfc] sm:$0xf]
        %v5276 = vld [vmem:[%s5 + $0x100] sm:$0xf]
        %v5277 = vld [vmem:[%s5 + $0x104] sm:$0xf]
        %v5278 = vld [vmem:[%s5 + $0x108] sm:$0xf]
        %v5279 = vld [vmem:[%s5 + $0x10c] sm:$0xf]
        %v5280 = vld [vmem:[%s5 + $0x110] sm:$0xf]
        %v5281 = vld [vmem:[%s5 + $0x114] sm:$0xf]
        %v5282 = vld [vmem:[%s5 + $0x118] sm:$0xf]
        %v5283 = vld [vmem:[%s5 + $0x11c] sm:$0xf]
        %v5284 = vld [vmem:[%s6] sm:$0x1]
        %v5286 = vperm.slane %v5284, 0
        %v5360 = vunpack.c.l.b16 %v5212
        %v5361 = vunpack.c.l.b16 %v5213
        %v5362 = vunpack.c.l.b16 %v5214
        %v5363 = vunpack.c.l.b16 %v5215
        %v5364 = vunpack.c.l.b16 %v5216
        %v5365 = vunpack.c.l.b16 %v5217
        %v5366 = vunpack.c.l.b16 %v5218
        %v5367 = vunpack.c.l.b16 %v5219
        %v5368 = vunpack.c.l.b16 %v5220
        %v5369 = vunpack.c.l.b16 %v5221
        %v5370 = vunpack.c.l.b16 %v5222
        %v5371 = vunpack.c.l.b16 %v5223
        %v5372 = vunpack.c.l.b16 %v5224
        %v5373 = vunpack.c.l.b16 %v5225
        %v5374 = vunpack.c.l.b16 %v5226
        %v5375 = vunpack.c.l.b16 %v5227
        %v5376 = vunpack.c.l.b16 %v5228
        %v5377 = vunpack.c.l.b16 %v5229
        %v5378 = vunpack.c.l.b16 %v5230
        %v5379 = vunpack.c.l.b16 %v5231
        %v5380 = vunpack.c.l.b16 %v5232
        %v5381 = vunpack.c.l.b16 %v5233
        %v5382 = vunpack.c.l.b16 %v5234
        %v5383 = vunpack.c.l.b16 %v5235
        %v5384 = vunpack.c.l.b16 %v5236
        %v5385 = vunpack.c.l.b16 %v5237
        %v5386 = vunpack.c.l.b16 %v5238
        %v5387 = vunpack.c.l.b16 %v5239
        %v5388 = vunpack.c.l.b16 %v5240
        %v5389 = vunpack.c.l.b16 %v5241
        %v5390 = vunpack.c.l.b16 %v5242
        %v5391 = vunpack.c.l.b16 %v5243
        %v5392 = vunpack.c.l.b16 %v5244
        %v5393 = vunpack.c.l.b16 %v5245
        %v5394 = vunpack.c.l.b16 %v5246
        %v5395 = vunpack.c.l.b16 %v5247
        %v5396 = vunpack.c.l.b16 %v5248
        %v5397 = vunpack.c.l.b16 %v5249
        %v5398 = vunpack.c.l.b16 %v5250
        %v5399 = vunpack.c.l.b16 %v5251
        %v5400 = vunpack.c.l.b16 %v5252
        %v5401 = vunpack.c.l.b16 %v5253
        %v5402 = vunpack.c.l.b16 %v5254
        %v5403 = vunpack.c.l.b16 %v5255
        %v5404 = vunpack.c.l.b16 %v5256
        %v5405 = vunpack.c.l.b16 %v5257
        %v5406 = vunpack.c.l.b16 %v5258
        %v5407 = vunpack.c.l.b16 %v5259
        %v5408 = vunpack.c.l.b16 %v5260
        %v5409 = vunpack.c.l.b16 %v5261
        %v5410 = vunpack.c.l.b16 %v5262
        %v5411 = vunpack.c.l.b16 %v5263
        %v5412 = vunpack.c.l.b16 %v5264
        %v5413 = vunpack.c.l.b16 %v5265
        %v5414 = vunpack.c.l.b16 %v5266
        %v5415 = vunpack.c.l.b16 %v5267
        %v5416 = vunpack.c.l.b16 %v5268
        %v5417 = vunpack.c.l.b16 %v5269
        %v5418 = vunpack.c.l.b16 %v5270
        %v5419 = vunpack.c.l.b16 %v5271
        %v5420 = vunpack.c.l.b16 %v5272
        %v5421 = vunpack.c.l.b16 %v5273
        %v5422 = vunpack.c.l.b16 %v5274
        %v5423 = vunpack.c.l.b16 %v5275
        %v5424 = vunpack.c.l.b16 %v5276
        %v5425 = vunpack.c.l.b16 %v5277
        %v5426 = vunpack.c.l.b16 %v5278
        %v5427 = vunpack.c.l.b16 %v5279
        %v5428 = vunpack.c.l.b16 %v5280
        %v5429 = vunpack.c.l.b16 %v5281
        %v5430 = vunpack.c.l.b16 %v5282
        %v5431 = vunpack.c.l.b16 %v5283
        %v5432 = vpack.c.b16 %v5361, %v5360
        %v5433 = vpack.c.b16 %v5363, %v5362
        %v5434 = vpack.c.b16 %v5365, %v5364
        %v5435 = vpack.c.b16 %v5367, %v5366
        %v5436 = vpack.c.b16 %v5369, %v5368
        %v5437 = vpack.c.b16 %v5371, %v5370
        %v5438 = vpack.c.b16 %v5373, %v5372
        %v5439 = vpack.c.b16 %v5375, %v5374
        %v5440 = vpack.c.b16 %v5377, %v5376
        %v5441 = vpack.c.b16 %v5379, %v5378
        %v5442 = vpack.c.b16 %v5381, %v5380
        %v5443 = vpack.c.b16 %v5383, %v5382
        %v5444 = vpack.c.b16 %v5385, %v5384
        %v5445 = vpack.c.b16 %v5387, %v5386
        %v5446 = vpack.c.b16 %v5389, %v5388
        %v5447 = vpack.c.b16 %v5391, %v5390
        %v5448 = vpack.c.b16 %v5393, %v5392
        %v5449 = vpack.c.b16 %v5395, %v5394
        %v5450 = vpack.c.b16 %v5397, %v5396
        %v5451 = vpack.c.b16 %v5399, %v5398
        %v5452 = vpack.c.b16 %v5401, %v5400
        %v5453 = vpack.c.b16 %v5403, %v5402
        %v5454 = vpack.c.b16 %v5405, %v5404
        %v5455 = vpack.c.b16 %v5407, %v5406
        %v5456 = vpack.c.b16 %v5409, %v5408
        %v5457 = vpack.c.b16 %v5411, %v5410
        %v5458 = vpack.c.b16 %v5413, %v5412
        %v5459 = vpack.c.b16 %v5415, %v5414
        %v5460 = vpack.c.b16 %v5417, %v5416
        %v5461 = vpack.c.b16 %v5419, %v5418
        %v5462 = vpack.c.b16 %v5421, %v5420
        %v5463 = vpack.c.b16 %v5423, %v5422
        %v5464 = vpack.c.b16 %v5425, %v5424
        %v5465 = vpack.c.b16 %v5427, %v5426
        %v5466 = vpack.c.b16 %v5429, %v5428
        %v5467 = vpack.c.b16 %v5431, %v5430
        %v5505 = vsel %vm372, %v5136, 0
        %v5508 = vsel %vm372, %v5141, 0
        %v5511 = vsel %vm372, %v5146, 0
        %v5514 = vsel %vm372, %v5151, 0
        %v5517 = vsel %vm372, %v5156, 0
        %v5520 = vsel %vm372, %v5161, 0
        %v5523 = vsel %vm372, %v5166, 0
        %v5526 = vsel %vm372, %v5171, 0
        %v5529 = vsel %vm372, %v5176, 0
        %v5532 = vsel %vm372, %v5181, 0
        %v5535 = vsel %vm372, %v5186, 0
        %v5538 = vsel %vm372, %v5191, 0
        %v5541 = vsel %vm372, %v5196, 0
        %v5544 = vsel %vm372, %v5201, 0
        %v5547 = vsel %vm372, %v5206, 0
        %v5550 = vsel %vm372, %v5211, 0
        %5552 = vmatpush.bf16.msra.mxu0 %v5439
        %5553 = vmatpush.bf16.msra.mxu0 %v5438
        %5554 = vmatpush.bf16.msra.mxu0 %v5437
        %5555 = vmatpush.bf16.msra.mxu0 %v5436
        %5556 = vmatpush.bf16.msra.mxu0 %v5435
        %5557 = vmatpush.bf16.msra.mxu0 %v5434
        %5558 = vmatpush.bf16.msra.mxu0 %v5433
        %5559 = vmatpush.bf16.msra.mxu0 %v5432
        %5560 = vmatmul.bf16.gmra.mxu0 %v5132
        %v5561 = vpop.f32.mrf.mxu0
        %v5562 = vadd.f32 %v5286, %v5561
        %v5563 = vpop.f32.mrf.mxu0
        %v5564 = vadd.f32 %v5286, %v5563
        %5565 = vmatmul.bf16.gmra.mxu0 %v5137
        %v5566 = vpop.f32.mrf.mxu0
        %v5567 = vadd.f32 %v5286, %v5566
        %v5568 = vpop.f32.mrf.mxu0
        %v5569 = vadd.f32 %v5286, %v5568
        %5570 = vmatmul.bf16.gmra.mxu0 %v5142
        %v5571 = vpop.f32.mrf.mxu0
        %v5572 = vadd.f32 %v5286, %v5571
        %v5573 = vpop.f32.mrf.mxu0
        %v5574 = vadd.f32 %v5286, %v5573
        %5575 = vmatmul.bf16.gmra.mxu0 %v5147
        %v5576 = vpop.f32.mrf.mxu0
        %v5577 = vadd.f32 %v5286, %v5576
        %v5578 = vpop.f32.mrf.mxu0
        %v5579 = vadd.f32 %v5286, %v5578
        %5580 = vmatmul.bf16.gmra.mxu0 %v5152
        %v5581 = vpop.f32.mrf.mxu0
        %v5582 = vadd.f32 %v5286, %v5581
        %v5583 = vpop.f32.mrf.mxu0
        %v5584 = vadd.f32 %v5286, %v5583
        %5585 = vmatmul.bf16.gmra.mxu0 %v5157
        %v5586 = vpop.f32.mrf.mxu0
        %v5587 = vadd.f32 %v5286, %v5586
        %v5588 = vpop.f32.mrf.mxu0
        %v5589 = vadd.f32 %v5286, %v5588
        %5590 = vmatmul.bf16.gmra.mxu0 %v5162
        %v5591 = vpop.f32.mrf.mxu0
        %v5592 = vadd.f32 %v5286, %v5591
        %v5593 = vpop.f32.mrf.mxu0
        %v5594 = vadd.f32 %v5286, %v5593
        %5595 = vmatmul.bf16.gmra.mxu0 %v5167
        %v5596 = vpop.f32.mrf.mxu0
        %v5597 = vadd.f32 %v5286, %v5596
        %v5598 = vpop.f32.mrf.mxu0
        %v5599 = vadd.f32 %v5286, %v5598
        %5600 = vmatmul.bf16.gmra.mxu0 %v5172
        %v5601 = vpop.f32.mrf.mxu0
        %v5602 = vadd.f32 %v5286, %v5601
        %v5603 = vpop.f32.mrf.mxu0
        %v5604 = vadd.f32 %v5286, %v5603
        %5605 = vmatmul.bf16.gmra.mxu0 %v5177
        %v5606 = vpop.f32.mrf.mxu0
        %v5607 = vadd.f32 %v5286, %v5606
        %v5608 = vpop.f32.mrf.mxu0
        %v5609 = vadd.f32 %v5286, %v5608
        %5610 = vmatmul.bf16.gmra.mxu0 %v5182
        %v5611 = vpop.f32.mrf.mxu0
        %v5612 = vadd.f32 %v5286, %v5611
        %v5613 = vpop.f32.mrf.mxu0
        %v5614 = vadd.f32 %v5286, %v5613
        %5615 = vmatmul.bf16.gmra.mxu0 %v5187
        %v5616 = vpop.f32.mrf.mxu0
        %v5617 = vadd.f32 %v5286, %v5616
        %v5618 = vpop.f32.mrf.mxu0
        %v5619 = vadd.f32 %v5286, %v5618
        %5620 = vmatmul.bf16.gmra.mxu0 %v5192
        %v5621 = vpop.f32.mrf.mxu0
        %v5622 = vadd.f32 %v5286, %v5621
        %v5623 = vpop.f32.mrf.mxu0
        %v5624 = vadd.f32 %v5286, %v5623
        %5625 = vmatmul.bf16.gmra.mxu0 %v5197
        %v5626 = vpop.f32.mrf.mxu0
        %v5627 = vadd.f32 %v5286, %v5626
        %v5628 = vpop.f32.mrf.mxu0
        %v5629 = vadd.f32 %v5286, %v5628
        %5630 = vmatmul.bf16.gmra.mxu0 %v5202
        %v5631 = vpop.f32.mrf.mxu0
        %v5632 = vadd.f32 %v5286, %v5631
        %v5633 = vpop.f32.mrf.mxu0
        %v5634 = vadd.f32 %v5286, %v5633
        %5635 = vmatmul.bf16.gmra.mxu0 %v5207
        %v5636 = vpop.f32.mrf.mxu0
        %v5637 = vadd.f32 %v5286, %v5636
        %v5638 = vpop.f32.mrf.mxu0
        %v5639 = vadd.f32 %v5286, %v5638
        %5640 = vdwg.mxu0
        %5641 = vmatpush.bf16.msra.mxu0 %v5447
        %5642 = vmatpush.bf16.msra.mxu0 %v5446
        %5643 = vmatpush.bf16.msra.mxu0 %v5445
        %5644 = vmatpush.bf16.msra.mxu0 %v5444
        %5645 = vmatpush.bf16.msra.mxu0 %v5443
        %5646 = vmatpush.bf16.msra.mxu0 %v5442
        %5647 = vmatpush.bf16.msra.mxu0 %v5441
        %5648 = vmatpush.bf16.msra.mxu0 %v5440
        %5649 = vmatmul.bf16.gmra.mxu0 %v5133
        %v5650 = vpop.f32.mrf.mxu0
        %v5651 = vadd.f32 %v5562, %v5650
        %v5652 = vpop.f32.mrf.mxu0
        %v5653 = vadd.f32 %v5564, %v5652
        %5654 = vmatmul.bf16.gmra.mxu0 %v5138
        %v5655 = vpop.f32.mrf.mxu0
        %v5656 = vadd.f32 %v5567, %v5655
        %v5657 = vpop.f32.mrf.mxu0
        %v5658 = vadd.f32 %v5569, %v5657
        %5659 = vmatmul.bf16.gmra.mxu0 %v5143
        %v5660 = vpop.f32.mrf.mxu0
        %v5661 = vadd.f32 %v5572, %v5660
        %v5662 = vpop.f32.mrf.mxu0
        %v5663 = vadd.f32 %v5574, %v5662
        %5664 = vmatmul.bf16.gmra.mxu0 %v5148
        %v5665 = vpop.f32.mrf.mxu0
        %v5666 = vadd.f32 %v5577, %v5665
        %v5667 = vpop.f32.mrf.mxu0
        %v5668 = vadd.f32 %v5579, %v5667
        %5669 = vmatmul.bf16.gmra.mxu0 %v5153
        %v5670 = vpop.f32.mrf.mxu0
        %v5671 = vadd.f32 %v5582, %v5670
        %v5672 = vpop.f32.mrf.mxu0
        %v5673 = vadd.f32 %v5584, %v5672
        %5674 = vmatmul.bf16.gmra.mxu0 %v5158
        %v5675 = vpop.f32.mrf.mxu0
        %v5676 = vadd.f32 %v5587, %v5675
        %v5677 = vpop.f32.mrf.mxu0
        %v5678 = vadd.f32 %v5589, %v5677
        %5679 = vmatmul.bf16.gmra.mxu0 %v5163
        %v5680 = vpop.f32.mrf.mxu0
        %v5681 = vadd.f32 %v5592, %v5680
        %v5682 = vpop.f32.mrf.mxu0
        %v5683 = vadd.f32 %v5594, %v5682
        %5684 = vmatmul.bf16.gmra.mxu0 %v5168
        %v5685 = vpop.f32.mrf.mxu0
        %v5686 = vadd.f32 %v5597, %v5685
        %v5687 = vpop.f32.mrf.mxu0
        %v5688 = vadd.f32 %v5599, %v5687
        %5689 = vmatmul.bf16.gmra.mxu0 %v5173
        %v5690 = vpop.f32.mrf.mxu0
        %v5691 = vadd.f32 %v5602, %v5690
        %v5692 = vpop.f32.mrf.mxu0
        %v5693 = vadd.f32 %v5604, %v5692
        %5694 = vmatmul.bf16.gmra.mxu0 %v5178
        %v5695 = vpop.f32.mrf.mxu0
        %v5696 = vadd.f32 %v5607, %v5695
        %v5697 = vpop.f32.mrf.mxu0
        %v5698 = vadd.f32 %v5609, %v5697
        %5699 = vmatmul.bf16.gmra.mxu0 %v5183
        %v5700 = vpop.f32.mrf.mxu0
        %v5701 = vadd.f32 %v5612, %v5700
        %v5702 = vpop.f32.mrf.mxu0
        %v5703 = vadd.f32 %v5614, %v5702
        %5704 = vmatmul.bf16.gmra.mxu0 %v5188
        %v5705 = vpop.f32.mrf.mxu0
        %v5706 = vadd.f32 %v5617, %v5705
        %v5707 = vpop.f32.mrf.mxu0
        %v5708 = vadd.f32 %v5619, %v5707
        %5709 = vmatmul.bf16.gmra.mxu0 %v5193
        %v5710 = vpop.f32.mrf.mxu0
        %v5711 = vadd.f32 %v5622, %v5710
        %v5712 = vpop.f32.mrf.mxu0
        %v5713 = vadd.f32 %v5624, %v5712
        %5714 = vmatmul.bf16.gmra.mxu0 %v5198
        %v5715 = vpop.f32.mrf.mxu0
        %v5716 = vadd.f32 %v5627, %v5715
        %v5717 = vpop.f32.mrf.mxu0
        %v5718 = vadd.f32 %v5629, %v5717
        %5719 = vmatmul.bf16.gmra.mxu0 %v5203
        %v5720 = vpop.f32.mrf.mxu0
        %v5721 = vadd.f32 %v5632, %v5720
        %v5722 = vpop.f32.mrf.mxu0
        %v5723 = vadd.f32 %v5634, %v5722
        %5724 = vmatmul.bf16.gmra.mxu0 %v5208
        %v5725 = vpop.f32.mrf.mxu0
        %v5726 = vadd.f32 %v5637, %v5725
        %v5727 = vpop.f32.mrf.mxu0
        %v5728 = vadd.f32 %v5639, %v5727
        %5729 = vdwg.mxu0
        %5730 = vmatpush.bf16.msra.mxu0 %v5455
        %5731 = vmatpush.bf16.msra.mxu0 %v5454
        %5732 = vmatpush.bf16.msra.mxu0 %v5453
        %5733 = vmatpush.bf16.msra.mxu0 %v5452
        %5734 = vmatpush.bf16.msra.mxu0 %v5451
        %5735 = vmatpush.bf16.msra.mxu0 %v5450
        %5736 = vmatpush.bf16.msra.mxu0 %v5449
        %5737 = vmatpush.bf16.msra.mxu0 %v5448
        %5738 = vmatmul.bf16.gmra.mxu0 %v5134
        %v5739 = vpop.f32.mrf.mxu0
        %v5740 = vadd.f32 %v5651, %v5739
        %v5741 = vpop.f32.mrf.mxu0
        %v5742 = vadd.f32 %v5653, %v5741
        %5743 = vmatmul.bf16.gmra.mxu0 %v5139
        %v5744 = vpop.f32.mrf.mxu0
        %v5745 = vadd.f32 %v5656, %v5744
        %v5746 = vpop.f32.mrf.mxu0
        %v5747 = vadd.f32 %v5658, %v5746
        %5748 = vmatmul.bf16.gmra.mxu0 %v5144
        %v5749 = vpop.f32.mrf.mxu0
        %v5750 = vadd.f32 %v5661, %v5749
        %v5751 = vpop.f32.mrf.mxu0
        %v5752 = vadd.f32 %v5663, %v5751
        %5753 = vmatmul.bf16.gmra.mxu0 %v5149
        %v5754 = vpop.f32.mrf.mxu0
        %v5755 = vadd.f32 %v5666, %v5754
        %v5756 = vpop.f32.mrf.mxu0
        %v5757 = vadd.f32 %v5668, %v5756
        %5758 = vmatmul.bf16.gmra.mxu0 %v5154
        %v5759 = vpop.f32.mrf.mxu0
        %v5760 = vadd.f32 %v5671, %v5759
        %v5761 = vpop.f32.mrf.mxu0
        %v5762 = vadd.f32 %v5673, %v5761
        %5763 = vmatmul.bf16.gmra.mxu0 %v5159
        %v5764 = vpop.f32.mrf.mxu0
        %v5765 = vadd.f32 %v5676, %v5764
        %v5766 = vpop.f32.mrf.mxu0
        %v5767 = vadd.f32 %v5678, %v5766
        %5768 = vmatmul.bf16.gmra.mxu0 %v5164
        %v5769 = vpop.f32.mrf.mxu0
        %v5770 = vadd.f32 %v5681, %v5769
        %v5771 = vpop.f32.mrf.mxu0
        %v5772 = vadd.f32 %v5683, %v5771
        %5773 = vmatmul.bf16.gmra.mxu0 %v5169
        %v5774 = vpop.f32.mrf.mxu0
        %v5775 = vadd.f32 %v5686, %v5774
        %v5776 = vpop.f32.mrf.mxu0
        %v5777 = vadd.f32 %v5688, %v5776
        %5778 = vmatmul.bf16.gmra.mxu0 %v5174
        %v5779 = vpop.f32.mrf.mxu0
        %v5780 = vadd.f32 %v5691, %v5779
        %v5781 = vpop.f32.mrf.mxu0
        %v5782 = vadd.f32 %v5693, %v5781
        %5783 = vmatmul.bf16.gmra.mxu0 %v5179
        %v5784 = vpop.f32.mrf.mxu0
        %v5785 = vadd.f32 %v5696, %v5784
        %v5786 = vpop.f32.mrf.mxu0
        %v5787 = vadd.f32 %v5698, %v5786
        %5788 = vmatmul.bf16.gmra.mxu0 %v5184
        %v5789 = vpop.f32.mrf.mxu0
        %v5790 = vadd.f32 %v5701, %v5789
        %v5791 = vpop.f32.mrf.mxu0
        %v5792 = vadd.f32 %v5703, %v5791
        %5793 = vmatmul.bf16.gmra.mxu0 %v5189
        %v5794 = vpop.f32.mrf.mxu0
        %v5795 = vadd.f32 %v5706, %v5794
        %v5796 = vpop.f32.mrf.mxu0
        %v5797 = vadd.f32 %v5708, %v5796
        %5798 = vmatmul.bf16.gmra.mxu0 %v5194
        %v5799 = vpop.f32.mrf.mxu0
        %v5800 = vadd.f32 %v5711, %v5799
        %v5801 = vpop.f32.mrf.mxu0
        %v5802 = vadd.f32 %v5713, %v5801
        %5803 = vmatmul.bf16.gmra.mxu0 %v5199
        %v5804 = vpop.f32.mrf.mxu0
        %v5805 = vadd.f32 %v5716, %v5804
        %v5806 = vpop.f32.mrf.mxu0
        %v5807 = vadd.f32 %v5718, %v5806
        %5808 = vmatmul.bf16.gmra.mxu0 %v5204
        %v5809 = vpop.f32.mrf.mxu0
        %v5810 = vadd.f32 %v5721, %v5809
        %v5811 = vpop.f32.mrf.mxu0
        %v5812 = vadd.f32 %v5723, %v5811
        %5813 = vmatmul.bf16.gmra.mxu0 %v5209
        %v5814 = vpop.f32.mrf.mxu0
        %v5815 = vadd.f32 %v5726, %v5814
        %v5816 = vpop.f32.mrf.mxu0
        %v5817 = vadd.f32 %v5728, %v5816
        %5818 = vdwg.mxu0
        %5819 = vmatpush.bf16.msra.mxu0 %v5463
        %5820 = vmatpush.bf16.msra.mxu0 %v5462
        %5821 = vmatpush.bf16.msra.mxu0 %v5461
        %5822 = vmatpush.bf16.msra.mxu0 %v5460
        %5823 = vmatpush.bf16.msra.mxu0 %v5459
        %5824 = vmatpush.bf16.msra.mxu0 %v5458
        %5825 = vmatpush.bf16.msra.mxu0 %v5457
        %5826 = vmatpush.bf16.msra.mxu0 %v5456
        %5827 = vmatmul.bf16.gmra.mxu0 %v5135
        %v5828 = vpop.f32.mrf.mxu0
        %v5829 = vadd.f32 %v5740, %v5828
        %v5830 = vpop.f32.mrf.mxu0
        %v5831 = vadd.f32 %v5742, %v5830
        %5832 = vmatmul.bf16.gmra.mxu0 %v5140
        %v5833 = vpop.f32.mrf.mxu0
        %v5834 = vadd.f32 %v5745, %v5833
        %v5835 = vpop.f32.mrf.mxu0
        %v5836 = vadd.f32 %v5747, %v5835
        %5837 = vmatmul.bf16.gmra.mxu0 %v5145
        %v5838 = vpop.f32.mrf.mxu0
        %v5839 = vadd.f32 %v5750, %v5838
        %v5840 = vpop.f32.mrf.mxu0
        %v5841 = vadd.f32 %v5752, %v5840
        %5842 = vmatmul.bf16.gmra.mxu0 %v5150
        %v5843 = vpop.f32.mrf.mxu0
        %v5844 = vadd.f32 %v5755, %v5843
        %v5845 = vpop.f32.mrf.mxu0
        %v5846 = vadd.f32 %v5757, %v5845
        %5847 = vmatmul.bf16.gmra.mxu0 %v5155
        %v5848 = vpop.f32.mrf.mxu0
        %v5849 = vadd.f32 %v5760, %v5848
        %v5850 = vpop.f32.mrf.mxu0
        %v5851 = vadd.f32 %v5762, %v5850
        %5852 = vmatmul.bf16.gmra.mxu0 %v5160
        %v5853 = vpop.f32.mrf.mxu0
        %v5854 = vadd.f32 %v5765, %v5853
        %v5855 = vpop.f32.mrf.mxu0
        %v5856 = vadd.f32 %v5767, %v5855
        %5857 = vmatmul.bf16.gmra.mxu0 %v5165
        %v5858 = vpop.f32.mrf.mxu0
        %v5859 = vadd.f32 %v5770, %v5858
        %v5860 = vpop.f32.mrf.mxu0
        %v5861 = vadd.f32 %v5772, %v5860
        %5862 = vmatmul.bf16.gmra.mxu0 %v5170
        %v5863 = vpop.f32.mrf.mxu0
        %v5864 = vadd.f32 %v5775, %v5863
        %v5865 = vpop.f32.mrf.mxu0
        %v5866 = vadd.f32 %v5777, %v5865
        %5867 = vmatmul.bf16.gmra.mxu0 %v5175
        %v5868 = vpop.f32.mrf.mxu0
        %v5869 = vadd.f32 %v5780, %v5868
        %v5870 = vpop.f32.mrf.mxu0
        %v5871 = vadd.f32 %v5782, %v5870
        %5872 = vmatmul.bf16.gmra.mxu0 %v5180
        %v5873 = vpop.f32.mrf.mxu0
        %v5874 = vadd.f32 %v5785, %v5873
        %v5875 = vpop.f32.mrf.mxu0
        %v5876 = vadd.f32 %v5787, %v5875
        %5877 = vmatmul.bf16.gmra.mxu0 %v5185
        %v5878 = vpop.f32.mrf.mxu0
        %v5879 = vadd.f32 %v5790, %v5878
        %v5880 = vpop.f32.mrf.mxu0
        %v5881 = vadd.f32 %v5792, %v5880
        %5882 = vmatmul.bf16.gmra.mxu0 %v5190
        %v5883 = vpop.f32.mrf.mxu0
        %v5884 = vadd.f32 %v5795, %v5883
        %v5885 = vpop.f32.mrf.mxu0
        %v5886 = vadd.f32 %v5797, %v5885
        %5887 = vmatmul.bf16.gmra.mxu0 %v5195
        %v5888 = vpop.f32.mrf.mxu0
        %v5889 = vadd.f32 %v5800, %v5888
        %v5890 = vpop.f32.mrf.mxu0
        %v5891 = vadd.f32 %v5802, %v5890
        %5892 = vmatmul.bf16.gmra.mxu0 %v5200
        %v5893 = vpop.f32.mrf.mxu0
        %v5894 = vadd.f32 %v5805, %v5893
        %v5895 = vpop.f32.mrf.mxu0
        %v5896 = vadd.f32 %v5807, %v5895
        %5897 = vmatmul.bf16.gmra.mxu0 %v5205
        %v5898 = vpop.f32.mrf.mxu0
        %v5899 = vadd.f32 %v5810, %v5898
        %v5900 = vpop.f32.mrf.mxu0
        %v5901 = vadd.f32 %v5812, %v5900
        %5902 = vmatmul.bf16.gmra.mxu0 %v5210
        %v5903 = vpop.f32.mrf.mxu0
        %v5904 = vadd.f32 %v5815, %v5903
        %v5905 = vpop.f32.mrf.mxu0
        %v5906 = vadd.f32 %v5817, %v5905
        %5907 = vdwg.mxu0
        %5908 = vmatpush.bf16.msra.mxu0 0
        %5909 = vmatpush.bf16.msra.mxu0 0
        %5910 = vmatpush.bf16.msra.mxu0 0
        %5911 = vmatpush.bf16.msra.mxu0 0
        %5912 = vmatpush.bf16.msra.mxu0 %v5467
        %5913 = vmatpush.bf16.msra.mxu0 %v5466
        %5914 = vmatpush.bf16.msra.mxu0 %v5465
        %5915 = vmatpush.bf16.msra.mxu0 %v5464
        %5916 = vmatmul.bf16.gmra.mxu0 %v5505
        %v5917 = vpop.f32.mrf.mxu0
        %v5918 = vadd.f32 %v5829, %v5917
        %v5919 = vpop.f32.mrf.mxu0
        %v5920 = vadd.f32 %v5831, %v5919
        %5921 = vmatmul.bf16.gmra.mxu0 %v5508
        %v5922 = vpop.f32.mrf.mxu0
        %v5923 = vadd.f32 %v5834, %v5922
        %v5924 = vpop.f32.mrf.mxu0
        %v5925 = vadd.f32 %v5836, %v5924
        %5926 = vmatmul.bf16.gmra.mxu0 %v5511
        %v5927 = vpop.f32.mrf.mxu0
        %v5928 = vadd.f32 %v5839, %v5927
        %v5929 = vpop.f32.mrf.mxu0
        %v5930 = vadd.f32 %v5841, %v5929
        %5931 = vmatmul.bf16.gmra.mxu0 %v5514
        %v5932 = vpop.f32.mrf.mxu0
        %v5933 = vadd.f32 %v5844, %v5932
        %v5934 = vpop.f32.mrf.mxu0
        %v5935 = vadd.f32 %v5846, %v5934
        %5936 = vmatmul.bf16.gmra.mxu0 %v5517
        %v5937 = vpop.f32.mrf.mxu0
        %v5938 = vadd.f32 %v5849, %v5937
        %v5939 = vpop.f32.mrf.mxu0
        %v5940 = vadd.f32 %v5851, %v5939
        %5941 = vmatmul.bf16.gmra.mxu0 %v5520
        %v5942 = vpop.f32.mrf.mxu0
        %v5943 = vadd.f32 %v5854, %v5942
        %v5944 = vpop.f32.mrf.mxu0
        %v5945 = vadd.f32 %v5856, %v5944
        %5946 = vmatmul.bf16.gmra.mxu0 %v5523
        %v5947 = vpop.f32.mrf.mxu0
        %v5948 = vadd.f32 %v5859, %v5947
        %v5949 = vpop.f32.mrf.mxu0
        %v5950 = vadd.f32 %v5861, %v5949
        %5951 = vmatmul.bf16.gmra.mxu0 %v5526
        %v5952 = vpop.f32.mrf.mxu0
        %v5953 = vadd.f32 %v5864, %v5952
        %v5954 = vpop.f32.mrf.mxu0
        %v5955 = vadd.f32 %v5866, %v5954
        %5956 = vmatmul.bf16.gmra.mxu0 %v5529
        %v5957 = vpop.f32.mrf.mxu0
        %v5958 = vadd.f32 %v5869, %v5957
        %v5959 = vpop.f32.mrf.mxu0
        %v5960 = vadd.f32 %v5871, %v5959
        %5961 = vmatmul.bf16.gmra.mxu0 %v5532
        %v5962 = vpop.f32.mrf.mxu0
        %v5963 = vadd.f32 %v5874, %v5962
        %v5964 = vpop.f32.mrf.mxu0
        %v5965 = vadd.f32 %v5876, %v5964
        %5966 = vmatmul.bf16.gmra.mxu0 %v5535
        %v5967 = vpop.f32.mrf.mxu0
        %v5968 = vadd.f32 %v5879, %v5967
        %v5969 = vpop.f32.mrf.mxu0
        %v5970 = vadd.f32 %v5881, %v5969
        %5971 = vmatmul.bf16.gmra.mxu0 %v5538
        %v5972 = vpop.f32.mrf.mxu0
        %v5973 = vadd.f32 %v5884, %v5972
        %v5974 = vpop.f32.mrf.mxu0
        %v5975 = vadd.f32 %v5886, %v5974
        %5976 = vmatmul.bf16.gmra.mxu0 %v5541
        %v5977 = vpop.f32.mrf.mxu0
        %v5978 = vadd.f32 %v5889, %v5977
        %v5979 = vpop.f32.mrf.mxu0
        %v5980 = vadd.f32 %v5891, %v5979
        %5981 = vmatmul.bf16.gmra.mxu0 %v5544
        %v5982 = vpop.f32.mrf.mxu0
        %v5983 = vadd.f32 %v5894, %v5982
        %v5984 = vpop.f32.mrf.mxu0
        %v5985 = vadd.f32 %v5896, %v5984
        %5986 = vmatmul.bf16.gmra.mxu0 %v5547
        %v5987 = vpop.f32.mrf.mxu0
        %v5988 = vadd.f32 %v5899, %v5987
        %v5989 = vpop.f32.mrf.mxu0
        %v5990 = vadd.f32 %v5901, %v5989
        %5991 = vmatmul.bf16.gmra.mxu0 %v5550
        %v5992 = vpop.f32.mrf.mxu0
        %v5993 = vadd.f32 %v5904, %v5992
        %v5994 = vpop.f32.mrf.mxu0
        %v5995 = vadd.f32 %v5906, %v5994
        %5996 = vdwg.mxu0
        %5997 = vst.msk [vmem:[%s302] sm:$0xff] %vm372, %v5918
        %5998 = vst.msk [vmem:[%s302 + $0x8] sm:$0xff] %vm372, %v5920
        %5999 = vst.msk [vmem:[%s302 + $0x10] sm:$0xff] %vm372, %v5923
        %6000 = vst.msk [vmem:[%s302 + $0x18] sm:$0xff] %vm372, %v5925
        %6001 = vst.msk [vmem:[%s302 + $0x20] sm:$0xff] %vm372, %v5928
        %6002 = vst.msk [vmem:[%s302 + $0x28] sm:$0xff] %vm372, %v5930
        %6003 = vst.msk [vmem:[%s302 + $0x30] sm:$0xff] %vm372, %v5933
        %6004 = vst.msk [vmem:[%s302 + $0x38] sm:$0xff] %vm372, %v5935
        %6005 = vst.msk [vmem:[%s302 + $0x40] sm:$0xff] %vm372, %v5938
        %6006 = vst.msk [vmem:[%s302 + $0x48] sm:$0xff] %vm372, %v5940
        %6007 = vst.msk [vmem:[%s302 + $0x50] sm:$0xff] %vm372, %v5943
        %6008 = vst.msk [vmem:[%s302 + $0x58] sm:$0xff] %vm372, %v5945
        %6009 = vst.msk [vmem:[%s302 + $0x60] sm:$0xff] %vm372, %v5948
        %6010 = vst.msk [vmem:[%s302 + $0x68] sm:$0xff] %vm372, %v5950
        %6011 = vst.msk [vmem:[%s302 + $0x70] sm:$0xff] %vm372, %v5953
        %6012 = vst.msk [vmem:[%s302 + $0x78] sm:$0xff] %vm372, %v5955
        %6013 = vst.msk [vmem:[%s302 + $0x80] sm:$0xff] %vm372, %v5958
        %6014 = vst.msk [vmem:[%s302 + $0x88] sm:$0xff] %vm372, %v5960
        %6015 = vst.msk [vmem:[%s302 + $0x90] sm:$0xff] %vm372, %v5963
        %6016 = vst.msk [vmem:[%s302 + $0x98] sm:$0xff] %vm372, %v5965
        %6017 = vst.msk [vmem:[%s302 + $0xa0] sm:$0xff] %vm372, %v5968
        %6018 = vst.msk [vmem:[%s302 + $0xa8] sm:$0xff] %vm372, %v5970
        %6019 = vst.msk [vmem:[%s302 + $0xb0] sm:$0xff] %vm372, %v5973
        %6020 = vst.msk [vmem:[%s302 + $0xb8] sm:$0xff] %vm372, %v5975
        %6021 = vst.msk [vmem:[%s302 + $0xc0] sm:$0xff] %vm372, %v5978
        %6022 = vst.msk [vmem:[%s302 + $0xc8] sm:$0xff] %vm372, %v5980
        %6023 = vst.msk [vmem:[%s302 + $0xd0] sm:$0xff] %vm372, %v5983
        %6024 = vst.msk [vmem:[%s302 + $0xd8] sm:$0xff] %vm372, %v5985
        %6025 = vst.msk [vmem:[%s302 + $0xe0] sm:$0xff] %vm372, %v5988
        %6026 = vst.msk [vmem:[%s302 + $0xe8] sm:$0xff] %vm372, %v5990
        %6027 = vst.msk [vmem:[%s302 + $0xf0] sm:$0xff] %vm372, %v5993
        %6028 = vst.msk [vmem:[%s302 + $0xf8] sm:$0xff] %vm372, %v5995
        %s6029 = sand.u32 %s186, 1
        %s6030 = scalar_lea.sflag [#allocation5], %s6029
        %s6031 = sand.u32 %s186, 1
        %s6032 = smul.addr %s6031, 256
        %s6033 = scalar_lea.vmem [#allocation4], %s6032
        %s6034 = sand.u32 %s212, 1
        %s6035 = scalar_lea.sflag [#allocation7], %s6034
        %s6036 = sand.u32 %s212, 1
        %s6037 = smul.addr %s6036, 256
        %s6038 = scalar_lea.vmem [#allocation6], %s6037
        // Predicated region
        $region49: #{tpu_custom_call.1} parent=47 // pred_check
          %p6039 = pneg %p196
        $region50: #{tpu_custom_call.1} parent=47 // pred_check_branch
          %6041 = sbr.rel (%p6039) target = $region52
        $region51: #{tpu_custom_call.1} parent=47 // pred_region
          %6043 = vsyncadd %s6030, 0
          %s6044 = smul.addr %s26, 32
          %s6045 = smul.addr %s6044, 8
          %s6046 = scalar_lea.hbm %s7, %s6045
          %s6047 = sshll.u32 %s6033, 4
          %s6048 = int_to_ptr.vmem [resolvable:$true] %s6047
          %s6049 = sshll.u32 %s6046, 4
          %s6050 = int_to_ptr.hbm [resolvable:$true] %s6049
          %6055 = dma.vmem_to_hbm [thread:$0]  %s6048, 4096, %s6050, %s6030, 128, 128, 8
        $region52: #{tpu_custom_call.1} parent=47 // pred_fallthru
          _
        // Predicated region
        $region53: #{tpu_custom_call.1} parent=47 // pred_check
          %p6056 = pneg %p222
        $region54: #{tpu_custom_call.1} parent=47 // pred_check_branch
          %6058 = sbr.rel (%p6056) target = $region56
        $region55: #{tpu_custom_call.1} parent=47 // pred_region
          %6060 = vsyncadd %s6035, 0
          %s6061 = smul.addr %s26, 32
          %s6062 = smul.addr %s6061, 8
          %s6063 = scalar_lea.hbm %s8, %s6062
          %s6064 = sshll.u32 %s6038, 4
          %s6065 = int_to_ptr.vmem [resolvable:$true] %s6064
          %s6066 = sshll.u32 %s6063, 4
          %s6067 = int_to_ptr.hbm [resolvable:$true] %s6066
          %6072 = dma.vmem_to_hbm [thread:$0]  %s6065, 4096, %s6067, %s6035, 128, 128, 8
        $region56: #{tpu_custom_call.1} parent=47 // pred_fallthru
          _
      $region48: #{tpu_custom_call.1} parent=5 // pred_fallthru
        _
      %p6073 = scmp.le.s32.totalorder 2, %s21
      // Predicated region
      $region57: #{tpu_custom_call.1} parent=5 // pred_check
        %p6074 = pneg %p6073
      $region58: #{tpu_custom_call.1} parent=5 // pred_check_branch
        %6076 = sbr.rel (%p6074) target = $region60
      $region59: #{tpu_custom_call.1} parent=5 // pred_region
        %s6077 = ssub.s32 %s21, 2
        // Predicated region
        $region61: #{tpu_custom_call.1} parent=59 // pred_check
          %p6078 = pneg %p202
        $region62: #{tpu_custom_call.1} parent=59 // pred_check_branch
          %6080 = sbr.rel (%p6078) target = $region64
        $region63: #{tpu_custom_call.1} parent=59 // pred_region
          %s6081 = sand.u32 %s187, 1
          %s6082 = scalar_lea.sflag [#allocation5], %s6081
          %s6083 = sand.u32 %s187, 1
          %s6084 = smul.addr %s6083, 256
          %s6085 = scalar_lea.vmem [#allocation4], %s6084
          %6087 = dma.done %s6082, 4096
        $region64: #{tpu_custom_call.1} parent=59 // pred_fallthru
          _
        // Predicated region
        $region65: #{tpu_custom_call.1} parent=59 // pred_check
          %p6088 = pneg %p228
        $region66: #{tpu_custom_call.1} parent=59 // pred_check_branch
          %6090 = sbr.rel (%p6088) target = $region68
        $region67: #{tpu_custom_call.1} parent=59 // pred_region
          %s6091 = sand.u32 %s213, 1
          %s6092 = scalar_lea.sflag [#allocation7], %s6091
          %s6093 = sand.u32 %s213, 1
          %s6094 = smul.addr %s6093, 256
          %s6095 = scalar_lea.vmem [#allocation6], %s6094
          %6097 = dma.done %s6092, 4096
        $region68: #{tpu_custom_call.1} parent=59 // pred_fallthru
          _
      $region60: #{tpu_custom_call.1} parent=5 // pred_fallthru
        _
    $region6: #{tpu_custom_call.1} parent=1 // loop_footer
      %s25 = sadd.s32 1, %s21
    $region7: #{tpu_custom_call.1} parent=1 // loop_footer_branch
      %20 = sbr.rel target = $region3
    $region8: #{tpu_custom_call.1} parent=1 // loop_exit
      _
    %6098 = vsyncpa [#allocation5], 1
    %s6099 = scalar_lea.sflag [#allocation5], 1
    %6100 = vsyncpa %s6099, 1
    %6101 = vsyncpa [#allocation7], 1
    %s6102 = scalar_lea.sflag [#allocation7], 1
    %6103 = vsyncpa %s6102, 1

</llo_original>
